<compile_context>
chip_gen: v6e
topology: v6e:2x2x1
jax: 0.10.0
libtpu: 0.0.40
codegen_flags: <defaults>
</compile_context>

<pallas_src>
import functools

import jax
import jax.numpy as jnp
import numpy as np
from jax.experimental import pallas as pl
from jax.experimental.pallas import tpu as pltpu


# ----------------------------------------------------------------------------
# Pallas kernel
# ----------------------------------------------------------------------------
def _bigru_mlp_kernel(
    # inputs
    x_ref,        # (T*B, D)   bf16  time-major embeddings, flattened (row = t*B + b)
    lens_ref,     # (B, 1)     i32   valid sequence lengths
    wih_ref,      # (D, 6H)    bf16  input weights  [fwd r|z|n | bwd r|z|n]
    bih_ref,      # (1, 6H)    f32   input biases + folded bhh_r/bhh_z (both dirs)
    whh_ref,      # (H, 6H)    bf16  merged hidden weights [whh_f r|z|n | whh_b r|z|n]
    bhhn_ref,     # (1, 2H)    f32   [bhh_n fwd | bhh_n bwd]
    w1_ref,       # (2H, M)    bf16  MLP layer-1 (rows 0:H fwd half, H:2H bwd half)
    b1_ref,       # (1, M)     f32
    w2t_ref,      # (1, M)     f32   MLP output weight, transposed to a lane row
    b2_ref,       # (1, 1)     f32
    # outputs
    out_ref,      # (T*B, 1)   f32   logits, time-major flattened
    # scratch
    gi_ref,       # (T*B, 6H)  f32   hoisted input projection (both directions)
    rnn_ref,      # (T*B, 2H)  f32   [fwd | bwd] RNN outputs (zero at padding)
    *, T, B,
):
    H = whh_ref.shape[0]

    # ---- 1) Hoisted input projection: one big MXU matmul, out of the serial path.
    #         bih_ref already contains bih + [bhh_r | bhh_z | 0] for both directions.
    gi_ref[...] = (
        jnp.dot(x_ref[...], wih_ref[...], preferred_element_type=jnp.float32)
        + bih_ref[...]
    )

    # Hoisted broadcasts (JAX does not CSE broadcast_in_dim inside the loop).
    lens_bh = jnp.broadcast_to(lens_ref[...], (B, H))               # (B, H) int32
    bhh_n_f = jnp.broadcast_to(bhhn_ref[:, 0 * H:1 * H], (B, H))    # (B, H) f32
    bhh_n_b = jnp.broadcast_to(bhhn_ref[:, 1 * H:2 * H], (B, H))

    def gru_gates(gi, gh_raw, bhh_n, h):
        # PyTorch GRU cell (r applied to Whn·h + bhn); bhh_r/bhh_z are pre-folded
        # into gi, so gh_raw = h @ Whh only.
        r = jax.nn.sigmoid(gi[:, 0 * H:1 * H] + gh_raw[:, 0 * H:1 * H])
        z = jax.nn.sigmoid(gi[:, 1 * H:2 * H] + gh_raw[:, 1 * H:2 * H])
        n = jnp.tanh(gi[:, 2 * H:3 * H] + r * (gh_raw[:, 2 * H:3 * H] + bhh_n))
        return (1.0 - z) * n + z * h

    # Stacked hidden state: rows 0:B = forward, rows B:2B = backward.
    hfb = jnp.zeros((2 * B, H), jnp.float32)

    # ---- 2) Interleaved fwd/bwd recurrence, fully unrolled (T static & small),
    #         ONE merged (2B, H) @ (H, 6H) MXU matmul per step.
    for t in range(T):
        rf = t * B                 # forward direction processes time index t
        rb = (T - 1 - t) * B       # backward direction processes index T-1-t

        gh = jnp.dot(hfb.astype(jnp.bfloat16), whh_ref[...],
                     preferred_element_type=jnp.float32)            # (2B, 6H)
        gh_f = gh[0:B, 0 * H:3 * H]          # fwd rows x fwd weight block
        gh_b = gh[B:2 * B, 3 * H:6 * H]      # bwd rows x bwd weight block

        gi_f = gi_ref[rf:rf + B, 0 * H:3 * H]
        gi_b = gi_ref[rb:rb + B, 3 * H:6 * H]

        hf = hfb[0:B, :]
        hb = hfb[B:2 * B, :]

        hf_new = gru_gates(gi_f, gh_f, bhh_n_f, hf)
        hb_new = gru_gates(gi_b, gh_b, bhh_n_b, hb)

        mf = lens_bh > t             # (B, H) bool: time index t valid
        mb = lens_bh > (T - 1 - t)   # (B, H) bool: time index T-1-t valid

        # pad_packed_sequence semantics: zero output at padded positions,
        # hidden state frozen past the sequence end (bwd stays 0 until len-1).
        rnn_ref[rf:rf + B, 0:H]     = jnp.where(mf, hf_new, 0.0)
        rnn_ref[rb:rb + B, H:2 * H] = jnp.where(mb, hb_new, 0.0)

        hf = jnp.where(mf, hf_new, hf)
        hb = jnp.where(mb, hb_new, hb)
        hfb = jnp.concatenate([hf, hb], axis=0)

    # ---- 3) Fused MLP head: Linear(2H->M) in ONE matmul + ReLU
    #         (+ Dropout = identity) + Linear(M->1) as VPU mul + lane reduce.
    h1 = jnp.dot(rnn_ref[...].astype(jnp.bfloat16), w1_ref[...],
                 preferred_element_type=jnp.float32) + b1_ref[...]
    h1 = jnp.maximum(h1, 0.0)
    logits = jnp.sum(h1 * w2t_ref[...], axis=-1, keepdims=True) + b2_ref[...]
    out_ref[...] = logits                       # (T*B, 1)


# ----------------------------------------------------------------------------
# One-time weight preparation (NOT on the per-call forward path)
# ----------------------------------------------------------------------------
def prepare_weights(params):
    """Concatenate / cast / transpose / fold biases once, at parameter-load time."""
    bf = jnp.bfloat16
    H = params["whh_f"].shape[0]
    zero_h = jnp.zeros((1, H), jnp.float32)

    wih_cat = jnp.concatenate([params["wih_f"], params["wih_b"]], axis=1).astype(bf)   # (D, 6H)
    whh_cat = jnp.concatenate([params["whh_f"], params["whh_b"]], axis=1).astype(bf)   # (H, 6H)

    # Fold bhh_r, bhh_z into the input-projection bias; keep bhh_n separate
    # (it must be multiplied by r inside the cell).
    bih_fold_f = params["bih_f"] + jnp.concatenate(
        [params["bhh_f"][:, 0:2 * H], zero_h], axis=1)
    bih_fold_b = params["bih_b"] + jnp.concatenate(
        [params["bhh_b"][:, 0:2 * H], zero_h], axis=1)
    bih_fold = jnp.concatenate([bih_fold_f, bih_fold_b], axis=1)                       # (1, 6H)
    bhh_n = jnp.concatenate(
        [params["bhh_f"][:, 2 * H:3 * H], params["bhh_b"][:, 2 * H:3 * H]], axis=1)    # (1, 2H)

    w1_cat = jnp.concatenate([params["w1a"], params["w1b"]], axis=0).astype(bf)        # (2H, M)
    w2t = jnp.transpose(params["w2"])                                                  # (1, M)

    return {
        "wih_cat": wih_cat, "bih_fold": bih_fold,
        "whh_cat": whh_cat, "bhh_n": bhh_n,
        "w1_cat": w1_cat, "b1": params["b1"],
        "w2t": w2t, "b2": params["b2"],
        "H": H,
    }


# ----------------------------------------------------------------------------
# Wrapper (layout transpose, lengths reshape, pallas_call, final reshape)
# ----------------------------------------------------------------------------
def rnn_sentence_extractor_forward(sentence_embeddings, num_sentences, prep):
    B, T, D = sentence_embeddings.shape
    H = prep["whh_cat"].shape[0]
    bf = jnp.bfloat16

    # time-major, flattened: row t*B + b  <->  (t, b)
    x_tm = (jnp.transpose(sentence_embeddings, (1, 0, 2))
            .reshape(T * B, D).astype(bf))
    lens = num_sentences.astype(jnp.int32).reshape(B, 1)

    in_arrays = (
        x_tm, lens,
        prep["wih_cat"], prep["bih_fold"],
        prep["whh_cat"], prep["bhh_n"],
        prep["w1_cat"], prep["b1"], prep["w2t"], prep["b2"],
    )
    vmem = pl.BlockSpec(memory_space=pltpu.MemorySpace.VMEM)

    out_flat = pl.pallas_call(
        functools.partial(_bigru_mlp_kernel, T=T, B=B),
        out_shape=jax.ShapeDtypeStruct((T * B, 1), jnp.float32),
        in_specs=[vmem] * len(in_arrays),
        out_specs=vmem,
        scratch_shapes=[
            pltpu.VMEM((T * B, 6 * H), jnp.float32),   # hoisted input projection
            pltpu.VMEM((T * B, 2 * H), jnp.float32),   # fused [fwd|bwd] RNN outputs
        ],
    )(*in_arrays)

    # mlp(...) -> (T, B, 1);  .permute(1, 0, 2).squeeze(-1) -> (B, T)
    return out_flat.reshape(T, B).T


# ----------------------------------------------------------------------------
# Pure-JAX reference with matching bf16-operand / f32-accumulate matmul precision
# ----------------------------------------------------------------------------
def reference_forward(x, num_sentences, p):
    B, T, D = x.shape
    H = p["whh_f"].shape[0]
    bf = jnp.bfloat16

    def bdot(a, b):
        return jnp.dot(a.astype(bf), b.astype(bf), preferred_element_type=jnp.float32)

    mask = (jnp.arange(T)[None, :] < num_sentences[:, None]).astype(jnp.float32)  # (B, T)

    def run_dir(wih, whh, bih, bhh, reverse):
        h = jnp.zeros((B, H), jnp.float32)
        outs = [None] * T
        order = range(T - 1, -1, -1) if reverse else range(T)
        for t in order:
            gi = bdot(x[:, t, :], wih) + bih
            gh = bdot(h, whh) + bhh
            r = jax.nn.sigmoid(gi[:, :H] + gh[:, :H])
            z = jax.nn.sigmoid(gi[:, H:2 * H] + gh[:, H:2 * H])
            n = jnp.tanh(gi[:, 2 * H:] + r * gh[:, 2 * H:])
            h_new = (1.0 - z) * n + z * h
            m = mask[:, t:t + 1]
            h = m * h_new + (1.0 - m) * h
            outs[t] = m * h_new
        return jnp.stack(outs, axis=0)          # (T, B, H)

    of = run_dir(p["wih_f"], p["whh_f"], p["bih_f"], p["bhh_f"], reverse=False)
    ob = run_dir(p["wih_b"], p["whh_b"], p["bih_b"], p["bhh_b"], reverse=True)
    cat = jnp.concatenate([of.reshape(T * B, H), ob.reshape(T * B, H)], axis=1)
    w1_cat = jnp.concatenate([p["w1a"], p["w1b"]], axis=0)
    h1 = jnp.maximum(bdot(cat, w1_cat) + p["b1"], 0.0)
    logits = jnp.sum(h1 * jnp.transpose(p["w2"]), axis=-1, keepdims=True) + p["b2"]
    return logits.reshape(T, B).T               # (B, T)


# ----------------------------------------------------------------------------
def make_params(key, D, H, M):
    """Deterministic synthetic parameters (xavier-ish weights, small biases)."""
    ks = jax.random.split(key, 16)

    def xavier(k, shape):
        fan_in, fan_out = shape
        std = (2.0 / (fan_in + fan_out)) ** 0.5
        return jax.random.normal(k, shape, jnp.float32) * std

    return {
        # GRU, forward direction (PyTorch weight_ih_l0 is (3H, D); stored transposed)
        "wih_f": xavier(ks[0], (D, 3 * H)),
        "whh_f": xavier(ks[1], (H, 3 * H)),
        "bih_f": 0.1 * jax.random.normal(ks[2], (1, 3 * H), jnp.float32),
        "bhh_f": 0.1 * jax.random.normal(ks[3], (1, 3 * H), jnp.float32),
        # GRU, backward direction
        "wih_b": xavier(ks[4], (D, 3 * H)),
        "whh_b": xavier(ks[5], (H, 3 * H)),
        "bih_b": 0.1 * jax.random.normal(ks[6], (1, 3 * H), jnp.float32),
        "bhh_b": 0.1 * jax.random.normal(ks[7], (1, 3 * H), jnp.float32),
        # MLP layer 1: Linear(2H -> M), split into fwd/bwd halves of the concat
        "w1a": xavier(ks[8], (H, M)),
        "w1b": xavier(ks[9], (H, M)),
        "b1": 0.1 * jax.random.normal(ks[10], (1, M), jnp.float32),
        # MLP output: Linear(M -> 1)
        "w2": xavier(ks[11], (M, 1)),
        "b2": 0.1 * jax.random.normal(ks[12], (1, 1), jnp.float32),
    }


if __name__ == "__main__":
    # input_size=128, hidden_size=128, bidirectional GRU, mlp_layers=[128]
    B, T, D, H, M = 8, 8, 128, 128, 128

    key = jax.random.PRNGKey(0)
    k_x, k_p = jax.random.split(key)

    sentence_embeddings = jax.random.normal(k_x, (B, T, D), jnp.float32)
    # pack_padded_sequence expects lengths sorted in decreasing order
    num_sentences = jnp.array([8, 8, 7, 6, 5, 4, 3, 2], dtype=jnp.int32)

    params = make_params(k_p, D, H, M)
    prep = jax.tree.map(jax.block_until_ready,
                        {k: v for k, v in prepare_weights(params).items() if k != "H"})

    fwd = jax.jit(rnn_sentence_extractor_forward)
    logits = jax.block_until_ready(fwd(sentence_embeddings, num_sentences, prep))
    assert logits.shape == (B, T), logits.shape

    ref = jax.block_until_ready(
        reference_forward(sentence_embeddings, num_sentences, params))
    err = float(np.abs(np.asarray(logits) - np.asarray(ref)).max())
    assert np.allclose(np.asarray(logits), np.asarray(ref), atol=2e-2, rtol=2e-2), err

    print("KERNEL_OK")
</pallas_src>

<mosaic_0001>
module attributes {stable_mosaic.version = 11 : i64} {
  func.func @_bigru_mlp_kernel(%arg0: memref<64x128xbf16, #tpu.memory_space<vmem>>, %arg1: memref<8x1xi32, #tpu.memory_space<vmem>>, %arg2: memref<128x768xbf16, #tpu.memory_space<vmem>>, %arg3: memref<1x768xf32, #tpu.memory_space<vmem>>, %arg4: memref<128x768xbf16, #tpu.memory_space<vmem>>, %arg5: memref<1x256xf32, #tpu.memory_space<vmem>>, %arg6: memref<256x128xbf16, #tpu.memory_space<vmem>>, %arg7: memref<1x128xf32, #tpu.memory_space<vmem>>, %arg8: memref<1x128xf32, #tpu.memory_space<vmem>>, %arg9: memref<1x1xf32, #tpu.memory_space<vmem>>, %arg10: memref<64x1xf32, #tpu.memory_space<vmem>>, %arg11: memref<64x768xf32, #tpu.memory_space<vmem>>, %arg12: memref<64x256xf32, #tpu.memory_space<vmem>>) attributes {dimension_semantics = [], scalar_prefetch = 0 : i64, scratch_operands = 2 : i64, tpu.core_type = #tpu.core_type<tc>} {
    %c0 = arith.constant 0 : index
    %c0_0 = arith.constant 0 : index
    %0 = vector.load %arg0[%c0, %c0_0] : memref<64x128xbf16, #tpu.memory_space<vmem>>, vector<64x128xbf16>
    %c0_1 = arith.constant 0 : index
    %c0_2 = arith.constant 0 : index
    %1 = vector.load %arg2[%c0_1, %c0_2] : memref<128x768xbf16, #tpu.memory_space<vmem>>, vector<128x768xbf16>
    %cst = arith.constant dense<0.000000e+00> : vector<64x768xf32>
    %2 = tpu.matmul %0, %1, %cst {dimension_numbers = #tpu.dot_dimension_numbers<[1], [0], [0], [1], [0, 0, 1, 1], [], []>} : vector<64x128xbf16>, vector<128x768xbf16>, vector<64x768xf32> -> vector<64x768xf32>
    %c0_3 = arith.constant 0 : index
    %c0_4 = arith.constant 0 : index
    %3 = vector.load %arg3[%c0_3, %c0_4] : memref<1x768xf32, #tpu.memory_space<vmem>>, vector<1x768xf32>
    %4 = vector.broadcast %3 : vector<1x768xf32> to vector<64x768xf32>
    %5 = arith.addf %2, %4 : vector<64x768xf32>
    %c0_5 = arith.constant 0 : index
    %c0_6 = arith.constant 0 : index
    %6 = vector.load %arg11[%c0_5, %c0_6] : memref<64x768xf32, #tpu.memory_space<vmem>>, vector<64x768xf32>
    tpu.vector_store %arg11[%c0_5, %c0_6], %5 {strides = array<i32>} : memref<64x768xf32, #tpu.memory_space<vmem>>, vector<64x768xf32>,
    %c0_7 = arith.constant 0 : index
    %c0_8 = arith.constant 0 : index
    %7 = vector.load %arg1[%c0_7, %c0_8] : memref<8x1xi32, #tpu.memory_space<vmem>>, vector<8x1xi32>
    %8 = vector.shape_cast %7 : vector<8x1xi32> to vector<8x1xi32>
    %9 = vector.broadcast %8 : vector<8x1xi32> to vector<8x128xi32>
    %c0_9 = arith.constant 0 : index
    %c0_10 = arith.constant 0 : index
    %10 = vector.load %arg5[%c0_9, %c0_10] : memref<1x256xf32, #tpu.memory_space<vmem>>, vector<1x128xf32>
    %11 = vector.shape_cast %10 : vector<1x128xf32> to vector<1x128xf32>
    %12 = vector.broadcast %11 : vector<1x128xf32> to vector<8x128xf32>
    %c0_11 = arith.constant 0 : index
    %c128 = arith.constant 128 : index
    %13 = vector.load %arg5[%c0_11, %c128] : memref<1x256xf32, #tpu.memory_space<vmem>>, vector<1x128xf32>
    %14 = vector.shape_cast %13 : vector<1x128xf32> to vector<1x128xf32>
    %15 = vector.broadcast %14 : vector<1x128xf32> to vector<8x128xf32>
    %cst_12 = arith.constant 0.000000e+00 : f32
    %16 = vector.broadcast %cst_12 : f32 to vector<16x128xf32>
    %17 = arith.truncf %16 : vector<16x128xf32> to vector<16x128xbf16>
    %c0_13 = arith.constant 0 : index
    %c0_14 = arith.constant 0 : index
    %18 = vector.load %arg4[%c0_13, %c0_14] : memref<128x768xbf16, #tpu.memory_space<vmem>>, vector<128x768xbf16>
    %cst_15 = arith.constant dense<0.000000e+00> : vector<16x768xf32>
    %19 = tpu.matmul %17, %18, %cst_15 {dimension_numbers = #tpu.dot_dimension_numbers<[1], [0], [0], [1], [0, 0, 1, 1], [], []>} : vector<16x128xbf16>, vector<128x768xbf16>, vector<16x768xf32> -> vector<16x768xf32>
    %20 = vector.extract_strided_slice %19 {offsets = [0, 0], sizes = [8, 384], strides = [1, 1]} : vector<16x768xf32> to vector<8x384xf32>
    %21 = vector.extract_strided_slice %19 {offsets = [8, 384], sizes = [8, 384], strides = [1, 1]} : vector<16x768xf32> to vector<8x384xf32>
    %c0_16 = arith.constant 0 : index
    %c0_17 = arith.constant 0 : index
    %22 = vector.load %arg11[%c0_16, %c0_17] : memref<64x768xf32, #tpu.memory_space<vmem>>, vector<8x384xf32>
    %c56 = arith.constant 56 : index
    %c384 = arith.constant 384 : index
    %23 = vector.load %arg11[%c56, %c384] : memref<64x768xf32, #tpu.memory_space<vmem>>, vector<8x384xf32>
    %24 = vector.extract_strided_slice %16 {offsets = [0, 0], sizes = [8, 128], strides = [1, 1]} : vector<16x128xf32> to vector<8x128xf32>
    %25 = vector.extract_strided_slice %16 {offsets = [8, 0], sizes = [8, 128], strides = [1, 1]} : vector<16x128xf32> to vector<8x128xf32>
    %26 = vector.extract_strided_slice %22 {offsets = [0, 0], sizes = [8, 128], strides = [1, 1]} : vector<8x384xf32> to vector<8x128xf32>
    %27 = vector.extract_strided_slice %20 {offsets = [0, 0], sizes = [8, 128], strides = [1, 1]} : vector<8x384xf32> to vector<8x128xf32>
    %28 = arith.addf %26, %27 : vector<8x128xf32>
    %29 = arith.negf %28 : vector<8x128xf32>
    %30 = math.exp %29 : vector<8x128xf32>
    %cst_18 = arith.constant 1.000000e+00 : f32
    %31 = vector.broadcast %cst_18 : f32 to vector<8x128xf32>
    %32 = arith.addf %31, %30 : vector<8x128xf32>
    %33 = arith.divf %31, %32 : vector<8x128xf32>
    %34 = vector.extract_strided_slice %22 {offsets = [0, 128], sizes = [8, 128], strides = [1, 1]} : vector<8x384xf32> to vector<8x128xf32>
    %35 = vector.extract_strided_slice %20 {offsets = [0, 128], sizes = [8, 128], strides = [1, 1]} : vector<8x384xf32> to vector<8x128xf32>
    %36 = arith.addf %34, %35 : vector<8x128xf32>
    %37 = arith.negf %36 : vector<8x128xf32>
    %38 = math.exp %37 : vector<8x128xf32>
    %cst_19 = arith.constant 1.000000e+00 : f32
    %39 = vector.broadcast %cst_19 : f32 to vector<8x128xf32>
    %40 = arith.addf %39, %38 : vector<8x128xf32>
    %41 = arith.divf %39, %40 : vector<8x128xf32>
    %42 = vector.extract_strided_slice %22 {offsets = [0, 256], sizes = [8, 128], strides = [1, 1]} : vector<8x384xf32> to vector<8x128xf32>
    %43 = vector.extract_strided_slice %20 {offsets = [0, 256], sizes = [8, 128], strides = [1, 1]} : vector<8x384xf32> to vector<8x128xf32>
    %44 = arith.addf %43, %12 : vector<8x128xf32>
    %45 = arith.mulf %33, %44 : vector<8x128xf32>
    %46 = arith.addf %42, %45 : vector<8x128xf32>
    %47 = math.tanh %46 : vector<8x128xf32>
    %cst_20 = arith.constant 1.000000e+00 : f32
    %48 = vector.broadcast %cst_20 : f32 to vector<8x128xf32>
    %49 = arith.subf %48, %41 : vector<8x128xf32>
    %50 = arith.mulf %49, %47 : vector<8x128xf32>
    %51 = arith.mulf %41, %24 : vector<8x128xf32>
    %52 = arith.addf %50, %51 : vector<8x128xf32>
    %53 = vector.extract_strided_slice %23 {offsets = [0, 0], sizes = [8, 128], strides = [1, 1]} : vector<8x384xf32> to vector<8x128xf32>
    %54 = vector.extract_strided_slice %21 {offsets = [0, 0], sizes = [8, 128], strides = [1, 1]} : vector<8x384xf32> to vector<8x128xf32>
    %55 = arith.addf %53, %54 : vector<8x128xf32>
    %56 = arith.negf %55 : vector<8x128xf32>
    %57 = math.exp %56 : vector<8x128xf32>
    %cst_21 = arith.constant 1.000000e+00 : f32
    %58 = vector.broadcast %cst_21 : f32 to vector<8x128xf32>
    %59 = arith.addf %58, %57 : vector<8x128xf32>
    %60 = arith.divf %58, %59 : vector<8x128xf32>
    %61 = vector.extract_strided_slice %23 {offsets = [0, 128], sizes = [8, 128], strides = [1, 1]} : vector<8x384xf32> to vector<8x128xf32>
    %62 = vector.extract_strided_slice %21 {offsets = [0, 128], sizes = [8, 128], strides = [1, 1]} : vector<8x384xf32> to vector<8x128xf32>
    %63 = arith.addf %61, %62 : vector<8x128xf32>
    %64 = arith.negf %63 : vector<8x128xf32>
    %65 = math.exp %64 : vector<8x128xf32>
    %cst_22 = arith.constant 1.000000e+00 : f32
    %66 = vector.broadcast %cst_22 : f32 to vector<8x128xf32>
    %67 = arith.addf %66, %65 : vector<8x128xf32>
    %68 = arith.divf %66, %67 : vector<8x128xf32>
    %69 = vector.extract_strided_slice %23 {offsets = [0, 256], sizes = [8, 128], strides = [1, 1]} : vector<8x384xf32> to vector<8x128xf32>
    %70 = vector.extract_strided_slice %21 {offsets = [0, 256], sizes = [8, 128], strides = [1, 1]} : vector<8x384xf32> to vector<8x128xf32>
    %71 = arith.addf %70, %15 : vector<8x128xf32>
    %72 = arith.mulf %60, %71 : vector<8x128xf32>
    %73 = arith.addf %69, %72 : vector<8x128xf32>
    %74 = math.tanh %73 : vector<8x128xf32>
    %cst_23 = arith.constant 1.000000e+00 : f32
    %75 = vector.broadcast %cst_23 : f32 to vector<8x128xf32>
    %76 = arith.subf %75, %68 : vector<8x128xf32>
    %77 = arith.mulf %76, %74 : vector<8x128xf32>
    %78 = arith.mulf %68, %25 : vector<8x128xf32>
    %79 = arith.addf %77, %78 : vector<8x128xf32>
    %c0_i32 = arith.constant 0 : i32
    %80 = vector.broadcast %c0_i32 : i32 to vector<8x128xi32>
    %81 = arith.cmpi sgt, %9, %80 : vector<8x128xi32>
    %c7_i32 = arith.constant 7 : i32
    %82 = vector.broadcast %c7_i32 : i32 to vector<8x128xi32>
    %83 = arith.cmpi sgt, %9, %82 : vector<8x128xi32>
    %cst_24 = arith.constant 0.000000e+00 : f32
    %84 = vector.broadcast %cst_24 : f32 to vector<8x128xf32>
    %85 = arith.select %81, %52, %84 : vector<8x128xi1>, vector<8x128xf32>
    %c0_25 = arith.constant 0 : index
    %c0_26 = arith.constant 0 : index
    %86 = vector.load %arg12[%c0_25, %c0_26] : memref<64x256xf32, #tpu.memory_space<vmem>>, vector<8x128xf32>
    tpu.vector_store %arg12[%c0_25, %c0_26], %85 {strides = array<i32>} : memref<64x256xf32, #tpu.memory_space<vmem>>, vector<8x128xf32>,
    %cst_27 = arith.constant 0.000000e+00 : f32
    %87 = vector.broadcast %cst_27 : f32 to vector<8x128xf32>
    %88 = arith.select %83, %79, %87 : vector<8x128xi1>, vector<8x128xf32>
    %c56_28 = arith.constant 56 : index
    %c128_29 = arith.constant 128 : index
    %89 = vector.load %arg12[%c56_28, %c128_29] : memref<64x256xf32, #tpu.memory_space<vmem>>, vector<8x128xf32>
    tpu.vector_store %arg12[%c56_28, %c128_29], %88 {strides = array<i32>} : memref<64x256xf32, #tpu.memory_space<vmem>>, vector<8x128xf32>,
    %90 = arith.select %81, %52, %24 : vector<8x128xi1>, vector<8x128xf32>
    %91 = arith.select %83, %79, %25 : vector<8x128xi1>, vector<8x128xf32>
    %92 = tpu.concatenate %90, %91 in 0 : vector<8x128xf32>, vector<8x128xf32> -> vector<16x128xf32>
    %93 = arith.truncf %92 : vector<16x128xf32> to vector<16x128xbf16>
    %c0_30 = arith.constant 0 : index
    %c0_31 = arith.constant 0 : index
    %94 = vector.load %arg4[%c0_30, %c0_31] : memref<128x768xbf16, #tpu.memory_space<vmem>>, vector<128x768xbf16>
    %cst_32 = arith.constant dense<0.000000e+00> : vector<16x768xf32>
    %95 = tpu.matmul %93, %94, %cst_32 {dimension_numbers = #tpu.dot_dimension_numbers<[1], [0], [0], [1], [0, 0, 1, 1], [], []>} : vector<16x128xbf16>, vector<128x768xbf16>, vector<16x768xf32> -> vector<16x768xf32>
    %96 = vector.extract_strided_slice %95 {offsets = [0, 0], sizes = [8, 384], strides = [1, 1]} : vector<16x768xf32> to vector<8x384xf32>
    %97 = vector.extract_strided_slice %95 {offsets = [8, 384], sizes = [8, 384], strides = [1, 1]} : vector<16x768xf32> to vector<8x384xf32>
    %c8 = arith.constant 8 : index
    %c0_33 = arith.constant 0 : index
    %98 = vector.load %arg11[%c8, %c0_33] : memref<64x768xf32, #tpu.memory_space<vmem>>, vector<8x384xf32>
    %c48 = arith.constant 48 : index
    %c384_34 = arith.constant 384 : index
    %99 = vector.load %arg11[%c48, %c384_34] : memref<64x768xf32, #tpu.memory_space<vmem>>, vector<8x384xf32>
    %100 = vector.extract_strided_slice %92 {offsets = [0, 0], sizes = [8, 128], strides = [1, 1]} : vector<16x128xf32> to vector<8x128xf32>
    %101 = vector.extract_strided_slice %92 {offsets = [8, 0], sizes = [8, 128], strides = [1, 1]} : vector<16x128xf32> to vector<8x128xf32>
    %102 = vector.extract_strided_slice %98 {offsets = [0, 0], sizes = [8, 128], strides = [1, 1]} : vector<8x384xf32> to vector<8x128xf32>
    %103 = vector.extract_strided_slice %96 {offsets = [0, 0], sizes = [8, 128], strides = [1, 1]} : vector<8x384xf32> to vector<8x128xf32>
    %104 = arith.addf %102, %103 : vector<8x128xf32>
    %105 = arith.negf %104 : vector<8x128xf32>
    %106 = math.exp %105 : vector<8x128xf32>
    %cst_35 = arith.constant 1.000000e+00 : f32
    %107 = vector.broadcast %cst_35 : f32 to vector<8x128xf32>
    %108 = arith.addf %107, %106 : vector<8x128xf32>
    %109 = arith.divf %107, %108 : vector<8x128xf32>
    %110 = vector.extract_strided_slice %98 {offsets = [0, 128], sizes = [8, 128], strides = [1, 1]} : vector<8x384xf32> to vector<8x128xf32>
    %111 = vector.extract_strided_slice %96 {offsets = [0, 128], sizes = [8, 128], strides = [1, 1]} : vector<8x384xf32> to vector<8x128xf32>
    %112 = arith.addf %110, %111 : vector<8x128xf32>
    %113 = arith.negf %112 : vector<8x128xf32>
    %114 = math.exp %113 : vector<8x128xf32>
    %cst_36 = arith.constant 1.000000e+00 : f32
    %115 = vector.broadcast %cst_36 : f32 to vector<8x128xf32>
    %116 = arith.addf %115, %114 : vector<8x128xf32>
    %117 = arith.divf %115, %116 : vector<8x128xf32>
    %118 = vector.extract_strided_slice %98 {offsets = [0, 256], sizes = [8, 128], strides = [1, 1]} : vector<8x384xf32> to vector<8x128xf32>
    %119 = vector.extract_strided_slice %96 {offsets = [0, 256], sizes = [8, 128], strides = [1, 1]} : vector<8x384xf32> to vector<8x128xf32>
    %120 = arith.addf %119, %12 : vector<8x128xf32>
    %121 = arith.mulf %109, %120 : vector<8x128xf32>
    %122 = arith.addf %118, %121 : vector<8x128xf32>
    %123 = math.tanh %122 : vector<8x128xf32>
    %cst_37 = arith.constant 1.000000e+00 : f32
    %124 = vector.broadcast %cst_37 : f32 to vector<8x128xf32>
    %125 = arith.subf %124, %117 : vector<8x128xf32>
    %126 = arith.mulf %125, %123 : vector<8x128xf32>
    %127 = arith.mulf %117, %100 : vector<8x128xf32>
    %128 = arith.addf %126, %127 : vector<8x128xf32>
    %129 = vector.extract_strided_slice %99 {offsets = [0, 0], sizes = [8, 128], strides = [1, 1]} : vector<8x384xf32> to vector<8x128xf32>
    %130 = vector.extract_strided_slice %97 {offsets = [0, 0], sizes = [8, 128], strides = [1, 1]} : vector<8x384xf32> to vector<8x128xf32>
    %131 = arith.addf %129, %130 : vector<8x128xf32>
    %132 = arith.negf %131 : vector<8x128xf32>
    %133 = math.exp %132 : vector<8x128xf32>
    %cst_38 = arith.constant 1.000000e+00 : f32
    %134 = vector.broadcast %cst_38 : f32 to vector<8x128xf32>
    %135 = arith.addf %134, %133 : vector<8x128xf32>
    %136 = arith.divf %134, %135 : vector<8x128xf32>
    %137 = vector.extract_strided_slice %99 {offsets = [0, 128], sizes = [8, 128], strides = [1, 1]} : vector<8x384xf32> to vector<8x128xf32>
    %138 = vector.extract_strided_slice %97 {offsets = [0, 128], sizes = [8, 128], strides = [1, 1]} : vector<8x384xf32> to vector<8x128xf32>
    %139 = arith.addf %137, %138 : vector<8x128xf32>
    %140 = arith.negf %139 : vector<8x128xf32>
    %141 = math.exp %140 : vector<8x128xf32>
    %cst_39 = arith.constant 1.000000e+00 : f32
    %142 = vector.broadcast %cst_39 : f32 to vector<8x128xf32>
    %143 = arith.addf %142, %141 : vector<8x128xf32>
    %144 = arith.divf %142, %143 : vector<8x128xf32>
    %145 = vector.extract_strided_slice %99 {offsets = [0, 256], sizes = [8, 128], strides = [1, 1]} : vector<8x384xf32> to vector<8x128xf32>
    %146 = vector.extract_strided_slice %97 {offsets = [0, 256], sizes = [8, 128], strides = [1, 1]} : vector<8x384xf32> to vector<8x128xf32>
    %147 = arith.addf %146, %15 : vector<8x128xf32>
    %148 = arith.mulf %136, %147 : vector<8x128xf32>
    %149 = arith.addf %145, %148 : vector<8x128xf32>
    %150 = math.tanh %149 : vector<8x128xf32>
    %cst_40 = arith.constant 1.000000e+00 : f32
    %151 = vector.broadcast %cst_40 : f32 to vector<8x128xf32>
    %152 = arith.subf %151, %144 : vector<8x128xf32>
    %153 = arith.mulf %152, %150 : vector<8x128xf32>
    %154 = arith.mulf %144, %101 : vector<8x128xf32>
    %155 = arith.addf %153, %154 : vector<8x128xf32>
    %c1_i32 = arith.constant 1 : i32
    %156 = vector.broadcast %c1_i32 : i32 to vector<8x128xi32>
    %157 = arith.cmpi sgt, %9, %156 : vector<8x128xi32>
    %c6_i32 = arith.constant 6 : i32
    %158 = vector.broadcast %c6_i32 : i32 to vector<8x128xi32>
    %159 = arith.cmpi sgt, %9, %158 : vector<8x128xi32>
    %cst_41 = arith.constant 0.000000e+00 : f32
    %160 = vector.broadcast %cst_41 : f32 to vector<8x128xf32>
    %161 = arith.select %157, %128, %160 : vector<8x128xi1>, vector<8x128xf32>
    %c8_42 = arith.constant 8 : index
    %c0_43 = arith.constant 0 : index
    %162 = vector.load %arg12[%c8_42, %c0_43] : memref<64x256xf32, #tpu.memory_space<vmem>>, vector<8x128xf32>
    tpu.vector_store %arg12[%c8_42, %c0_43], %161 {strides = array<i32>} : memref<64x256xf32, #tpu.memory_space<vmem>>, vector<8x128xf32>,
    %cst_44 = arith.constant 0.000000e+00 : f32
    %163 = vector.broadcast %cst_44 : f32 to vector<8x128xf32>
    %164 = arith.select %159, %155, %163 : vector<8x128xi1>, vector<8x128xf32>
    %c48_45 = arith.constant 48 : index
    %c128_46 = arith.constant 128 : index
    %165 = vector.load %arg12[%c48_45, %c128_46] : memref<64x256xf32, #tpu.memory_space<vmem>>, vector<8x128xf32>
    tpu.vector_store %arg12[%c48_45, %c128_46], %164 {strides = array<i32>} : memref<64x256xf32, #tpu.memory_space<vmem>>, vector<8x128xf32>,
    %166 = arith.select %157, %128, %100 : vector<8x128xi1>, vector<8x128xf32>
    %167 = arith.select %159, %155, %101 : vector<8x128xi1>, vector<8x128xf32>
    %168 = tpu.concatenate %166, %167 in 0 : vector<8x128xf32>, vector<8x128xf32> -> vector<16x128xf32>
    %169 = arith.truncf %168 : vector<16x128xf32> to vector<16x128xbf16>
    %c0_47 = arith.constant 0 : index
    %c0_48 = arith.constant 0 : index
    %170 = vector.load %arg4[%c0_47, %c0_48] : memref<128x768xbf16, #tpu.memory_space<vmem>>, vector<128x768xbf16>
    %cst_49 = arith.constant dense<0.000000e+00> : vector<16x768xf32>
    %171 = tpu.matmul %169, %170, %cst_49 {dimension_numbers = #tpu.dot_dimension_numbers<[1], [0], [0], [1], [0, 0, 1, 1], [], []>} : vector<16x128xbf16>, vector<128x768xbf16>, vector<16x768xf32> -> vector<16x768xf32>
    %172 = vector.extract_strided_slice %171 {offsets = [0, 0], sizes = [8, 384], strides = [1, 1]} : vector<16x768xf32> to vector<8x384xf32>
    %173 = vector.extract_strided_slice %171 {offsets = [8, 384], sizes = [8, 384], strides = [1, 1]} : vector<16x768xf32> to vector<8x384xf32>
    %c16 = arith.constant 16 : index
    %c0_50 = arith.constant 0 : index
    %174 = vector.load %arg11[%c16, %c0_50] : memref<64x768xf32, #tpu.memory_space<vmem>>, vector<8x384xf32>
    %c40 = arith.constant 40 : index
    %c384_51 = arith.constant 384 : index
    %175 = vector.load %arg11[%c40, %c384_51] : memref<64x768xf32, #tpu.memory_space<vmem>>, vector<8x384xf32>
    %176 = vector.extract_strided_slice %168 {offsets = [0, 0], sizes = [8, 128], strides = [1, 1]} : vector<16x128xf32> to vector<8x128xf32>
    %177 = vector.extract_strided_slice %168 {offsets = [8, 0], sizes = [8, 128], strides = [1, 1]} : vector<16x128xf32> to vector<8x128xf32>
    %178 = vector.extract_strided_slice %174 {offsets = [0, 0], sizes = [8, 128], strides = [1, 1]} : vector<8x384xf32> to vector<8x128xf32>
    %179 = vector.extract_strided_slice %172 {offsets = [0, 0], sizes = [8, 128], strides = [1, 1]} : vector<8x384xf32> to vector<8x128xf32>
    %180 = arith.addf %178, %179 : vector<8x128xf32>
    %181 = arith.negf %180 : vector<8x128xf32>
    %182 = math.exp %181 : vector<8x128xf32>
    %cst_52 = arith.constant 1.000000e+00 : f32
    %183 = vector.broadcast %cst_52 : f32 to vector<8x128xf32>
    %184 = arith.addf %183, %182 : vector<8x128xf32>
    %185 = arith.divf %183, %184 : vector<8x128xf32>
    %186 = vector.extract_strided_slice %174 {offsets = [0, 128], sizes = [8, 128], strides = [1, 1]} : vector<8x384xf32> to vector<8x128xf32>
    %187 = vector.extract_strided_slice %172 {offsets = [0, 128], sizes = [8, 128], strides = [1, 1]} : vector<8x384xf32> to vector<8x128xf32>
    %188 = arith.addf %186, %187 : vector<8x128xf32>
    %189 = arith.negf %188 : vector<8x128xf32>
    %190 = math.exp %189 : vector<8x128xf32>
    %cst_53 = arith.constant 1.000000e+00 : f32
    %191 = vector.broadcast %cst_53 : f32 to vector<8x128xf32>
    %192 = arith.addf %191, %190 : vector<8x128xf32>
    %193 = arith.divf %191, %192 : vector<8x128xf32>
    %194 = vector.extract_strided_slice %174 {offsets = [0, 256], sizes = [8, 128], strides = [1, 1]} : vector<8x384xf32> to vector<8x128xf32>
    %195 = vector.extract_strided_slice %172 {offsets = [0, 256], sizes = [8, 128], strides = [1, 1]} : vector<8x384xf32> to vector<8x128xf32>
    %196 = arith.addf %195, %12 : vector<8x128xf32>
    %197 = arith.mulf %185, %196 : vector<8x128xf32>
    %198 = arith.addf %194, %197 : vector<8x128xf32>
    %199 = math.tanh %198 : vector<8x128xf32>
    %cst_54 = arith.constant 1.000000e+00 : f32
    %200 = vector.broadcast %cst_54 : f32 to vector<8x128xf32>
    %201 = arith.subf %200, %193 : vector<8x128xf32>
    %202 = arith.mulf %201, %199 : vector<8x128xf32>
    %203 = arith.mulf %193, %176 : vector<8x128xf32>
    %204 = arith.addf %202, %203 : vector<8x128xf32>
    %205 = vector.extract_strided_slice %175 {offsets = [0, 0], sizes = [8, 128], strides = [1, 1]} : vector<8x384xf32> to vector<8x128xf32>
    %206 = vector.extract_strided_slice %173 {offsets = [0, 0], sizes = [8, 128], strides = [1, 1]} : vector<8x384xf32> to vector<8x128xf32>
    %207 = arith.addf %205, %206 : vector<8x128xf32>
    %208 = arith.negf %207 : vector<8x128xf32>
    %209 = math.exp %208 : vector<8x128xf32>
    %cst_55 = arith.constant 1.000000e+00 : f32
    %210 = vector.broadcast %cst_55 : f32 to vector<8x128xf32>
    %211 = arith.addf %210, %209 : vector<8x128xf32>
    %212 = arith.divf %210, %211 : vector<8x128xf32>
    %213 = vector.extract_strided_slice %175 {offsets = [0, 128], sizes = [8, 128], strides = [1, 1]} : vector<8x384xf32> to vector<8x128xf32>
    %214 = vector.extract_strided_slice %173 {offsets = [0, 128], sizes = [8, 128], strides = [1, 1]} : vector<8x384xf32> to vector<8x128xf32>
    %215 = arith.addf %213, %214 : vector<8x128xf32>
    %216 = arith.negf %215 : vector<8x128xf32>
    %217 = math.exp %216 : vector<8x128xf32>
    %cst_56 = arith.constant 1.000000e+00 : f32
    %218 = vector.broadcast %cst_56 : f32 to vector<8x128xf32>
    %219 = arith.addf %218, %217 : vector<8x128xf32>
    %220 = arith.divf %218, %219 : vector<8x128xf32>
    %221 = vector.extract_strided_slice %175 {offsets = [0, 256], sizes = [8, 128], strides = [1, 1]} : vector<8x384xf32> to vector<8x128xf32>
    %222 = vector.extract_strided_slice %173 {offsets = [0, 256], sizes = [8, 128], strides = [1, 1]} : vector<8x384xf32> to vector<8x128xf32>
    %223 = arith.addf %222, %15 : vector<8x128xf32>
    %224 = arith.mulf %212, %223 : vector<8x128xf32>
    %225 = arith.addf %221, %224 : vector<8x128xf32>
    %226 = math.tanh %225 : vector<8x128xf32>
    %cst_57 = arith.constant 1.000000e+00 : f32
    %227 = vector.broadcast %cst_57 : f32 to vector<8x128xf32>
    %228 = arith.subf %227, %220 : vector<8x128xf32>
    %229 = arith.mulf %228, %226 : vector<8x128xf32>
    %230 = arith.mulf %220, %177 : vector<8x128xf32>
    %231 = arith.addf %229, %230 : vector<8x128xf32>
    %c2_i32 = arith.constant 2 : i32
    %232 = vector.broadcast %c2_i32 : i32 to vector<8x128xi32>
    %233 = arith.cmpi sgt, %9, %232 : vector<8x128xi32>
    %c5_i32 = arith.constant 5 : i32
    %234 = vector.broadcast %c5_i32 : i32 to vector<8x128xi32>
    %235 = arith.cmpi sgt, %9, %234 : vector<8x128xi32>
    %cst_58 = arith.constant 0.000000e+00 : f32
    %236 = vector.broadcast %cst_58 : f32 to vector<8x128xf32>
    %237 = arith.select %233, %204, %236 : vector<8x128xi1>, vector<8x128xf32>
    %c16_59 = arith.constant 16 : index
    %c0_60 = arith.constant 0 : index
    %238 = vector.load %arg12[%c16_59, %c0_60] : memref<64x256xf32, #tpu.memory_space<vmem>>, vector<8x128xf32>
    tpu.vector_store %arg12[%c16_59, %c0_60], %237 {strides = array<i32>} : memref<64x256xf32, #tpu.memory_space<vmem>>, vector<8x128xf32>,
    %cst_61 = arith.constant 0.000000e+00 : f32
    %239 = vector.broadcast %cst_61 : f32 to vector<8x128xf32>
    %240 = arith.select %235, %231, %239 : vector<8x128xi1>, vector<8x128xf32>
    %c40_62 = arith.constant 40 : index
    %c128_63 = arith.constant 128 : index
    %241 = vector.load %arg12[%c40_62, %c128_63] : memref<64x256xf32, #tpu.memory_space<vmem>>, vector<8x128xf32>
    tpu.vector_store %arg12[%c40_62, %c128_63], %240 {strides = array<i32>} : memref<64x256xf32, #tpu.memory_space<vmem>>, vector<8x128xf32>,
    %242 = arith.select %233, %204, %176 : vector<8x128xi1>, vector<8x128xf32>
    %243 = arith.select %235, %231, %177 : vector<8x128xi1>, vector<8x128xf32>
    %244 = tpu.concatenate %242, %243 in 0 : vector<8x128xf32>, vector<8x128xf32> -> vector<16x128xf32>
    %245 = arith.truncf %244 : vector<16x128xf32> to vector<16x128xbf16>
    %c0_64 = arith.constant 0 : index
    %c0_65 = arith.constant 0 : index
    %246 = vector.load %arg4[%c0_64, %c0_65] : memref<128x768xbf16, #tpu.memory_space<vmem>>, vector<128x768xbf16>
    %cst_66 = arith.constant dense<0.000000e+00> : vector<16x768xf32>
    %247 = tpu.matmul %245, %246, %cst_66 {dimension_numbers = #tpu.dot_dimension_numbers<[1], [0], [0], [1], [0, 0, 1, 1], [], []>} : vector<16x128xbf16>, vector<128x768xbf16>, vector<16x768xf32> -> vector<16x768xf32>
    %248 = vector.extract_strided_slice %247 {offsets = [0, 0], sizes = [8, 384], strides = [1, 1]} : vector<16x768xf32> to vector<8x384xf32>
    %249 = vector.extract_strided_slice %247 {offsets = [8, 384], sizes = [8, 384], strides = [1, 1]} : vector<16x768xf32> to vector<8x384xf32>
    %c24 = arith.constant 24 : index
    %c0_67 = arith.constant 0 : index
    %250 = vector.load %arg11[%c24, %c0_67] : memref<64x768xf32, #tpu.memory_space<vmem>>, vector<8x384xf32>
    %c32 = arith.constant 32 : index
    %c384_68 = arith.constant 384 : index
    %251 = vector.load %arg11[%c32, %c384_68] : memref<64x768xf32, #tpu.memory_space<vmem>>, vector<8x384xf32>
    %252 = vector.extract_strided_slice %244 {offsets = [0, 0], sizes = [8, 128], strides = [1, 1]} : vector<16x128xf32> to vector<8x128xf32>
    %253 = vector.extract_strided_slice %244 {offsets = [8, 0], sizes = [8, 128], strides = [1, 1]} : vector<16x128xf32> to vector<8x128xf32>
    %254 = vector.extract_strided_slice %250 {offsets = [0, 0], sizes = [8, 128], strides = [1, 1]} : vector<8x384xf32> to vector<8x128xf32>
    %255 = vector.extract_strided_slice %248 {offsets = [0, 0], sizes = [8, 128], strides = [1, 1]} : vector<8x384xf32> to vector<8x128xf32>
    %256 = arith.addf %254, %255 : vector<8x128xf32>
    %257 = arith.negf %256 : vector<8x128xf32>
    %258 = math.exp %257 : vector<8x128xf32>
    %cst_69 = arith.constant 1.000000e+00 : f32
    %259 = vector.broadcast %cst_69 : f32 to vector<8x128xf32>
    %260 = arith.addf %259, %258 : vector<8x128xf32>
    %261 = arith.divf %259, %260 : vector<8x128xf32>
    %262 = vector.extract_strided_slice %250 {offsets = [0, 128], sizes = [8, 128], strides = [1, 1]} : vector<8x384xf32> to vector<8x128xf32>
    %263 = vector.extract_strided_slice %248 {offsets = [0, 128], sizes = [8, 128], strides = [1, 1]} : vector<8x384xf32> to vector<8x128xf32>
    %264 = arith.addf %262, %263 : vector<8x128xf32>
    %265 = arith.negf %264 : vector<8x128xf32>
    %266 = math.exp %265 : vector<8x128xf32>
    %cst_70 = arith.constant 1.000000e+00 : f32
    %267 = vector.broadcast %cst_70 : f32 to vector<8x128xf32>
    %268 = arith.addf %267, %266 : vector<8x128xf32>
    %269 = arith.divf %267, %268 : vector<8x128xf32>
    %270 = vector.extract_strided_slice %250 {offsets = [0, 256], sizes = [8, 128], strides = [1, 1]} : vector<8x384xf32> to vector<8x128xf32>
    %271 = vector.extract_strided_slice %248 {offsets = [0, 256], sizes = [8, 128], strides = [1, 1]} : vector<8x384xf32> to vector<8x128xf32>
    %272 = arith.addf %271, %12 : vector<8x128xf32>
    %273 = arith.mulf %261, %272 : vector<8x128xf32>
    %274 = arith.addf %270, %273 : vector<8x128xf32>
    %275 = math.tanh %274 : vector<8x128xf32>
    %cst_71 = arith.constant 1.000000e+00 : f32
    %276 = vector.broadcast %cst_71 : f32 to vector<8x128xf32>
    %277 = arith.subf %276, %269 : vector<8x128xf32>
    %278 = arith.mulf %277, %275 : vector<8x128xf32>
    %279 = arith.mulf %269, %252 : vector<8x128xf32>
    %280 = arith.addf %278, %279 : vector<8x128xf32>
    %281 = vector.extract_strided_slice %251 {offsets = [0, 0], sizes = [8, 128], strides = [1, 1]} : vector<8x384xf32> to vector<8x128xf32>
    %282 = vector.extract_strided_slice %249 {offsets = [0, 0], sizes = [8, 128], strides = [1, 1]} : vector<8x384xf32> to vector<8x128xf32>
    %283 = arith.addf %281, %282 : vector<8x128xf32>
    %284 = arith.negf %283 : vector<8x128xf32>
    %285 = math.exp %284 : vector<8x128xf32>
    %cst_72 = arith.constant 1.000000e+00 : f32
    %286 = vector.broadcast %cst_72 : f32 to vector<8x128xf32>
    %287 = arith.addf %286, %285 : vector<8x128xf32>
    %288 = arith.divf %286, %287 : vector<8x128xf32>
    %289 = vector.extract_strided_slice %251 {offsets = [0, 128], sizes = [8, 128], strides = [1, 1]} : vector<8x384xf32> to vector<8x128xf32>
    %290 = vector.extract_strided_slice %249 {offsets = [0, 128], sizes = [8, 128], strides = [1, 1]} : vector<8x384xf32> to vector<8x128xf32>
    %291 = arith.addf %289, %290 : vector<8x128xf32>
    %292 = arith.negf %291 : vector<8x128xf32>
    %293 = math.exp %292 : vector<8x128xf32>
    %cst_73 = arith.constant 1.000000e+00 : f32
    %294 = vector.broadcast %cst_73 : f32 to vector<8x128xf32>
    %295 = arith.addf %294, %293 : vector<8x128xf32>
    %296 = arith.divf %294, %295 : vector<8x128xf32>
    %297 = vector.extract_strided_slice %251 {offsets = [0, 256], sizes = [8, 128], strides = [1, 1]} : vector<8x384xf32> to vector<8x128xf32>
    %298 = vector.extract_strided_slice %249 {offsets = [0, 256], sizes = [8, 128], strides = [1, 1]} : vector<8x384xf32> to vector<8x128xf32>
    %299 = arith.addf %298, %15 : vector<8x128xf32>
    %300 = arith.mulf %288, %299 : vector<8x128xf32>
    %301 = arith.addf %297, %300 : vector<8x128xf32>
    %302 = math.tanh %301 : vector<8x128xf32>
    %cst_74 = arith.constant 1.000000e+00 : f32
    %303 = vector.broadcast %cst_74 : f32 to vector<8x128xf32>
    %304 = arith.subf %303, %296 : vector<8x128xf32>
    %305 = arith.mulf %304, %302 : vector<8x128xf32>
    %306 = arith.mulf %296, %253 : vector<8x128xf32>
    %307 = arith.addf %305, %306 : vector<8x128xf32>
    %c3_i32 = arith.constant 3 : i32
    %308 = vector.broadcast %c3_i32 : i32 to vector<8x128xi32>
    %309 = arith.cmpi sgt, %9, %308 : vector<8x128xi32>
    %c4_i32 = arith.constant 4 : i32
    %310 = vector.broadcast %c4_i32 : i32 to vector<8x128xi32>
    %311 = arith.cmpi sgt, %9, %310 : vector<8x128xi32>
    %cst_75 = arith.constant 0.000000e+00 : f32
    %312 = vector.broadcast %cst_75 : f32 to vector<8x128xf32>
    %313 = arith.select %309, %280, %312 : vector<8x128xi1>, vector<8x128xf32>
    %c24_76 = arith.constant 24 : index
    %c0_77 = arith.constant 0 : index
    %314 = vector.load %arg12[%c24_76, %c0_77] : memref<64x256xf32, #tpu.memory_space<vmem>>, vector<8x128xf32>
    tpu.vector_store %arg12[%c24_76, %c0_77], %313 {strides = array<i32>} : memref<64x256xf32, #tpu.memory_space<vmem>>, vector<8x128xf32>,
    %cst_78 = arith.constant 0.000000e+00 : f32
    %315 = vector.broadcast %cst_78 : f32 to vector<8x128xf32>
    %316 = arith.select %311, %307, %315 : vector<8x128xi1>, vector<8x128xf32>
    %c32_79 = arith.constant 32 : index
    %c128_80 = arith.constant 128 : index
    %317 = vector.load %arg12[%c32_79, %c128_80] : memref<64x256xf32, #tpu.memory_space<vmem>>, vector<8x128xf32>
    tpu.vector_store %arg12[%c32_79, %c128_80], %316 {strides = array<i32>} : memref<64x256xf32, #tpu.memory_space<vmem>>, vector<8x128xf32>,
    %318 = arith.select %309, %280, %252 : vector<8x128xi1>, vector<8x128xf32>
    %319 = arith.select %311, %307, %253 : vector<8x128xi1>, vector<8x128xf32>
    %320 = tpu.concatenate %318, %319 in 0 : vector<8x128xf32>, vector<8x128xf32> -> vector<16x128xf32>
    %321 = arith.truncf %320 : vector<16x128xf32> to vector<16x128xbf16>
    %c0_81 = arith.constant 0 : index
    %c0_82 = arith.constant 0 : index
    %322 = vector.load %arg4[%c0_81, %c0_82] : memref<128x768xbf16, #tpu.memory_space<vmem>>, vector<128x768xbf16>
    %cst_83 = arith.constant dense<0.000000e+00> : vector<16x768xf32>
    %323 = tpu.matmul %321, %322, %cst_83 {dimension_numbers = #tpu.dot_dimension_numbers<[1], [0], [0], [1], [0, 0, 1, 1], [], []>} : vector<16x128xbf16>, vector<128x768xbf16>, vector<16x768xf32> -> vector<16x768xf32>
    %324 = vector.extract_strided_slice %323 {offsets = [0, 0], sizes = [8, 384], strides = [1, 1]} : vector<16x768xf32> to vector<8x384xf32>
    %325 = vector.extract_strided_slice %323 {offsets = [8, 384], sizes = [8, 384], strides = [1, 1]} : vector<16x768xf32> to vector<8x384xf32>
    %c32_84 = arith.constant 32 : index
    %c0_85 = arith.constant 0 : index
    %326 = vector.load %arg11[%c32_84, %c0_85] : memref<64x768xf32, #tpu.memory_space<vmem>>, vector<8x384xf32>
    %c24_86 = arith.constant 24 : index
    %c384_87 = arith.constant 384 : index
    %327 = vector.load %arg11[%c24_86, %c384_87] : memref<64x768xf32, #tpu.memory_space<vmem>>, vector<8x384xf32>
    %328 = vector.extract_strided_slice %320 {offsets = [0, 0], sizes = [8, 128], strides = [1, 1]} : vector<16x128xf32> to vector<8x128xf32>
    %329 = vector.extract_strided_slice %320 {offsets = [8, 0], sizes = [8, 128], strides = [1, 1]} : vector<16x128xf32> to vector<8x128xf32>
    %330 = vector.extract_strided_slice %326 {offsets = [0, 0], sizes = [8, 128], strides = [1, 1]} : vector<8x384xf32> to vector<8x128xf32>
    %331 = vector.extract_strided_slice %324 {offsets = [0, 0], sizes = [8, 128], strides = [1, 1]} : vector<8x384xf32> to vector<8x128xf32>
    %332 = arith.addf %330, %331 : vector<8x128xf32>
    %333 = arith.negf %332 : vector<8x128xf32>
    %334 = math.exp %333 : vector<8x128xf32>
    %cst_88 = arith.constant 1.000000e+00 : f32
    %335 = vector.broadcast %cst_88 : f32 to vector<8x128xf32>
    %336 = arith.addf %335, %334 : vector<8x128xf32>
    %337 = arith.divf %335, %336 : vector<8x128xf32>
    %338 = vector.extract_strided_slice %326 {offsets = [0, 128], sizes = [8, 128], strides = [1, 1]} : vector<8x384xf32> to vector<8x128xf32>
    %339 = vector.extract_strided_slice %324 {offsets = [0, 128], sizes = [8, 128], strides = [1, 1]} : vector<8x384xf32> to vector<8x128xf32>
    %340 = arith.addf %338, %339 : vector<8x128xf32>
    %341 = arith.negf %340 : vector<8x128xf32>
    %342 = math.exp %341 : vector<8x128xf32>
    %cst_89 = arith.constant 1.000000e+00 : f32
    %343 = vector.broadcast %cst_89 : f32 to vector<8x128xf32>
    %344 = arith.addf %343, %342 : vector<8x128xf32>
    %345 = arith.divf %343, %344 : vector<8x128xf32>
    %346 = vector.extract_strided_slice %326 {offsets = [0, 256], sizes = [8, 128], strides = [1, 1]} : vector<8x384xf32> to vector<8x128xf32>
    %347 = vector.extract_strided_slice %324 {offsets = [0, 256], sizes = [8, 128], strides = [1, 1]} : vector<8x384xf32> to vector<8x128xf32>
    %348 = arith.addf %347, %12 : vector<8x128xf32>
    %349 = arith.mulf %337, %348 : vector<8x128xf32>
    %350 = arith.addf %346, %349 : vector<8x128xf32>
    %351 = math.tanh %350 : vector<8x128xf32>
    %cst_90 = arith.constant 1.000000e+00 : f32
    %352 = vector.broadcast %cst_90 : f32 to vector<8x128xf32>
    %353 = arith.subf %352, %345 : vector<8x128xf32>
    %354 = arith.mulf %353, %351 : vector<8x128xf32>
    %355 = arith.mulf %345, %328 : vector<8x128xf32>
    %356 = arith.addf %354, %355 : vector<8x128xf32>
    %357 = vector.extract_strided_slice %327 {offsets = [0, 0], sizes = [8, 128], strides = [1, 1]} : vector<8x384xf32> to vector<8x128xf32>
    %358 = vector.extract_strided_slice %325 {offsets = [0, 0], sizes = [8, 128], strides = [1, 1]} : vector<8x384xf32> to vector<8x128xf32>
    %359 = arith.addf %357, %358 : vector<8x128xf32>
    %360 = arith.negf %359 : vector<8x128xf32>
    %361 = math.exp %360 : vector<8x128xf32>
    %cst_91 = arith.constant 1.000000e+00 : f32
    %362 = vector.broadcast %cst_91 : f32 to vector<8x128xf32>
    %363 = arith.addf %362, %361 : vector<8x128xf32>
    %364 = arith.divf %362, %363 : vector<8x128xf32>
    %365 = vector.extract_strided_slice %327 {offsets = [0, 128], sizes = [8, 128], strides = [1, 1]} : vector<8x384xf32> to vector<8x128xf32>
    %366 = vector.extract_strided_slice %325 {offsets = [0, 128], sizes = [8, 128], strides = [1, 1]} : vector<8x384xf32> to vector<8x128xf32>
    %367 = arith.addf %365, %366 : vector<8x128xf32>
    %368 = arith.negf %367 : vector<8x128xf32>
    %369 = math.exp %368 : vector<8x128xf32>
    %cst_92 = arith.constant 1.000000e+00 : f32
    %370 = vector.broadcast %cst_92 : f32 to vector<8x128xf32>
    %371 = arith.addf %370, %369 : vector<8x128xf32>
    %372 = arith.divf %370, %371 : vector<8x128xf32>
    %373 = vector.extract_strided_slice %327 {offsets = [0, 256], sizes = [8, 128], strides = [1, 1]} : vector<8x384xf32> to vector<8x128xf32>
    %374 = vector.extract_strided_slice %325 {offsets = [0, 256], sizes = [8, 128], strides = [1, 1]} : vector<8x384xf32> to vector<8x128xf32>
    %375 = arith.addf %374, %15 : vector<8x128xf32>
    %376 = arith.mulf %364, %375 : vector<8x128xf32>
    %377 = arith.addf %373, %376 : vector<8x128xf32>
    %378 = math.tanh %377 : vector<8x128xf32>
    %cst_93 = arith.constant 1.000000e+00 : f32
    %379 = vector.broadcast %cst_93 : f32 to vector<8x128xf32>
    %380 = arith.subf %379, %372 : vector<8x128xf32>
    %381 = arith.mulf %380, %378 : vector<8x128xf32>
    %382 = arith.mulf %372, %329 : vector<8x128xf32>
    %383 = arith.addf %381, %382 : vector<8x128xf32>
    %c4_i32_94 = arith.constant 4 : i32
    %384 = vector.broadcast %c4_i32_94 : i32 to vector<8x128xi32>
    %385 = arith.cmpi sgt, %9, %384 : vector<8x128xi32>
    %c3_i32_95 = arith.constant 3 : i32
    %386 = vector.broadcast %c3_i32_95 : i32 to vector<8x128xi32>
    %387 = arith.cmpi sgt, %9, %386 : vector<8x128xi32>
    %cst_96 = arith.constant 0.000000e+00 : f32
    %388 = vector.broadcast %cst_96 : f32 to vector<8x128xf32>
    %389 = arith.select %385, %356, %388 : vector<8x128xi1>, vector<8x128xf32>
    %c32_97 = arith.constant 32 : index
    %c0_98 = arith.constant 0 : index
    %390 = vector.load %arg12[%c32_97, %c0_98] : memref<64x256xf32, #tpu.memory_space<vmem>>, vector<8x128xf32>
    tpu.vector_store %arg12[%c32_97, %c0_98], %389 {strides = array<i32>} : memref<64x256xf32, #tpu.memory_space<vmem>>, vector<8x128xf32>,
    %cst_99 = arith.constant 0.000000e+00 : f32
    %391 = vector.broadcast %cst_99 : f32 to vector<8x128xf32>
    %392 = arith.select %387, %383, %391 : vector<8x128xi1>, vector<8x128xf32>
    %c24_100 = arith.constant 24 : index
    %c128_101 = arith.constant 128 : index
    %393 = vector.load %arg12[%c24_100, %c128_101] : memref<64x256xf32, #tpu.memory_space<vmem>>, vector<8x128xf32>
    tpu.vector_store %arg12[%c24_100, %c128_101], %392 {strides = array<i32>} : memref<64x256xf32, #tpu.memory_space<vmem>>, vector<8x128xf32>,
    %394 = arith.select %385, %356, %328 : vector<8x128xi1>, vector<8x128xf32>
    %395 = arith.select %387, %383, %329 : vector<8x128xi1>, vector<8x128xf32>
    %396 = tpu.concatenate %394, %395 in 0 : vector<8x128xf32>, vector<8x128xf32> -> vector<16x128xf32>
    %397 = arith.truncf %396 : vector<16x128xf32> to vector<16x128xbf16>
    %c0_102 = arith.constant 0 : index
    %c0_103 = arith.constant 0 : index
    %398 = vector.load %arg4[%c0_102, %c0_103] : memref<128x768xbf16, #tpu.memory_space<vmem>>, vector<128x768xbf16>
    %cst_104 = arith.constant dense<0.000000e+00> : vector<16x768xf32>
    %399 = tpu.matmul %397, %398, %cst_104 {dimension_numbers = #tpu.dot_dimension_numbers<[1], [0], [0], [1], [0, 0, 1, 1], [], []>} : vector<16x128xbf16>, vector<128x768xbf16>, vector<16x768xf32> -> vector<16x768xf32>
    %400 = vector.extract_strided_slice %399 {offsets = [0, 0], sizes = [8, 384], strides = [1, 1]} : vector<16x768xf32> to vector<8x384xf32>
    %401 = vector.extract_strided_slice %399 {offsets = [8, 384], sizes = [8, 384], strides = [1, 1]} : vector<16x768xf32> to vector<8x384xf32>
    %c40_105 = arith.constant 40 : index
    %c0_106 = arith.constant 0 : index
    %402 = vector.load %arg11[%c40_105, %c0_106] : memref<64x768xf32, #tpu.memory_space<vmem>>, vector<8x384xf32>
    %c16_107 = arith.constant 16 : index
    %c384_108 = arith.constant 384 : index
    %403 = vector.load %arg11[%c16_107, %c384_108] : memref<64x768xf32, #tpu.memory_space<vmem>>, vector<8x384xf32>
    %404 = vector.extract_strided_slice %396 {offsets = [0, 0], sizes = [8, 128], strides = [1, 1]} : vector<16x128xf32> to vector<8x128xf32>
    %405 = vector.extract_strided_slice %396 {offsets = [8, 0], sizes = [8, 128], strides = [1, 1]} : vector<16x128xf32> to vector<8x128xf32>
    %406 = vector.extract_strided_slice %402 {offsets = [0, 0], sizes = [8, 128], strides = [1, 1]} : vector<8x384xf32> to vector<8x128xf32>
    %407 = vector.extract_strided_slice %400 {offsets = [0, 0], sizes = [8, 128], strides = [1, 1]} : vector<8x384xf32> to vector<8x128xf32>
    %408 = arith.addf %406, %407 : vector<8x128xf32>
    %409 = arith.negf %408 : vector<8x128xf32>
    %410 = math.exp %409 : vector<8x128xf32>
    %cst_109 = arith.constant 1.000000e+00 : f32
    %411 = vector.broadcast %cst_109 : f32 to vector<8x128xf32>
    %412 = arith.addf %411, %410 : vector<8x128xf32>
    %413 = arith.divf %411, %412 : vector<8x128xf32>
    %414 = vector.extract_strided_slice %402 {offsets = [0, 128], sizes = [8, 128], strides = [1, 1]} : vector<8x384xf32> to vector<8x128xf32>
    %415 = vector.extract_strided_slice %400 {offsets = [0, 128], sizes = [8, 128], strides = [1, 1]} : vector<8x384xf32> to vector<8x128xf32>
    %416 = arith.addf %414, %415 : vector<8x128xf32>
    %417 = arith.negf %416 : vector<8x128xf32>
    %418 = math.exp %417 : vector<8x128xf32>
    %cst_110 = arith.constant 1.000000e+00 : f32
    %419 = vector.broadcast %cst_110 : f32 to vector<8x128xf32>
    %420 = arith.addf %419, %418 : vector<8x128xf32>
    %421 = arith.divf %419, %420 : vector<8x128xf32>
    %422 = vector.extract_strided_slice %402 {offsets = [0, 256], sizes = [8, 128], strides = [1, 1]} : vector<8x384xf32> to vector<8x128xf32>
    %423 = vector.extract_strided_slice %400 {offsets = [0, 256], sizes = [8, 128], strides = [1, 1]} : vector<8x384xf32> to vector<8x128xf32>
    %424 = arith.addf %423, %12 : vector<8x128xf32>
    %425 = arith.mulf %413, %424 : vector<8x128xf32>
    %426 = arith.addf %422, %425 : vector<8x128xf32>
    %427 = math.tanh %426 : vector<8x128xf32>
    %cst_111 = arith.constant 1.000000e+00 : f32
    %428 = vector.broadcast %cst_111 : f32 to vector<8x128xf32>
    %429 = arith.subf %428, %421 : vector<8x128xf32>
    %430 = arith.mulf %429, %427 : vector<8x128xf32>
    %431 = arith.mulf %421, %404 : vector<8x128xf32>
    %432 = arith.addf %430, %431 : vector<8x128xf32>
    %433 = vector.extract_strided_slice %403 {offsets = [0, 0], sizes = [8, 128], strides = [1, 1]} : vector<8x384xf32> to vector<8x128xf32>
    %434 = vector.extract_strided_slice %401 {offsets = [0, 0], sizes = [8, 128], strides = [1, 1]} : vector<8x384xf32> to vector<8x128xf32>
    %435 = arith.addf %433, %434 : vector<8x128xf32>
    %436 = arith.negf %435 : vector<8x128xf32>
    %437 = math.exp %436 : vector<8x128xf32>
    %cst_112 = arith.constant 1.000000e+00 : f32
    %438 = vector.broadcast %cst_112 : f32 to vector<8x128xf32>
    %439 = arith.addf %438, %437 : vector<8x128xf32>
    %440 = arith.divf %438, %439 : vector<8x128xf32>
    %441 = vector.extract_strided_slice %403 {offsets = [0, 128], sizes = [8, 128], strides = [1, 1]} : vector<8x384xf32> to vector<8x128xf32>
    %442 = vector.extract_strided_slice %401 {offsets = [0, 128], sizes = [8, 128], strides = [1, 1]} : vector<8x384xf32> to vector<8x128xf32>
    %443 = arith.addf %441, %442 : vector<8x128xf32>
    %444 = arith.negf %443 : vector<8x128xf32>
    %445 = math.exp %444 : vector<8x128xf32>
    %cst_113 = arith.constant 1.000000e+00 : f32
    %446 = vector.broadcast %cst_113 : f32 to vector<8x128xf32>
    %447 = arith.addf %446, %445 : vector<8x128xf32>
    %448 = arith.divf %446, %447 : vector<8x128xf32>
    %449 = vector.extract_strided_slice %403 {offsets = [0, 256], sizes = [8, 128], strides = [1, 1]} : vector<8x384xf32> to vector<8x128xf32>
    %450 = vector.extract_strided_slice %401 {offsets = [0, 256], sizes = [8, 128], strides = [1, 1]} : vector<8x384xf32> to vector<8x128xf32>
    %451 = arith.addf %450, %15 : vector<8x128xf32>
    %452 = arith.mulf %440, %451 : vector<8x128xf32>
    %453 = arith.addf %449, %452 : vector<8x128xf32>
    %454 = math.tanh %453 : vector<8x128xf32>
    %cst_114 = arith.constant 1.000000e+00 : f32
    %455 = vector.broadcast %cst_114 : f32 to vector<8x128xf32>
    %456 = arith.subf %455, %448 : vector<8x128xf32>
    %457 = arith.mulf %456, %454 : vector<8x128xf32>
    %458 = arith.mulf %448, %405 : vector<8x128xf32>
    %459 = arith.addf %457, %458 : vector<8x128xf32>
    %c5_i32_115 = arith.constant 5 : i32
    %460 = vector.broadcast %c5_i32_115 : i32 to vector<8x128xi32>
    %461 = arith.cmpi sgt, %9, %460 : vector<8x128xi32>
    %c2_i32_116 = arith.constant 2 : i32
    %462 = vector.broadcast %c2_i32_116 : i32 to vector<8x128xi32>
    %463 = arith.cmpi sgt, %9, %462 : vector<8x128xi32>
    %cst_117 = arith.constant 0.000000e+00 : f32
    %464 = vector.broadcast %cst_117 : f32 to vector<8x128xf32>
    %465 = arith.select %461, %432, %464 : vector<8x128xi1>, vector<8x128xf32>
    %c40_118 = arith.constant 40 : index
    %c0_119 = arith.constant 0 : index
    %466 = vector.load %arg12[%c40_118, %c0_119] : memref<64x256xf32, #tpu.memory_space<vmem>>, vector<8x128xf32>
    tpu.vector_store %arg12[%c40_118, %c0_119], %465 {strides = array<i32>} : memref<64x256xf32, #tpu.memory_space<vmem>>, vector<8x128xf32>,
    %cst_120 = arith.constant 0.000000e+00 : f32
    %467 = vector.broadcast %cst_120 : f32 to vector<8x128xf32>
    %468 = arith.select %463, %459, %467 : vector<8x128xi1>, vector<8x128xf32>
    %c16_121 = arith.constant 16 : index
    %c128_122 = arith.constant 128 : index
    %469 = vector.load %arg12[%c16_121, %c128_122] : memref<64x256xf32, #tpu.memory_space<vmem>>, vector<8x128xf32>
    tpu.vector_store %arg12[%c16_121, %c128_122], %468 {strides = array<i32>} : memref<64x256xf32, #tpu.memory_space<vmem>>, vector<8x128xf32>,
    %470 = arith.select %461, %432, %404 : vector<8x128xi1>, vector<8x128xf32>
    %471 = arith.select %463, %459, %405 : vector<8x128xi1>, vector<8x128xf32>
    %472 = tpu.concatenate %470, %471 in 0 : vector<8x128xf32>, vector<8x128xf32> -> vector<16x128xf32>
    %473 = arith.truncf %472 : vector<16x128xf32> to vector<16x128xbf16>
    %c0_123 = arith.constant 0 : index
    %c0_124 = arith.constant 0 : index
    %474 = vector.load %arg4[%c0_123, %c0_124] : memref<128x768xbf16, #tpu.memory_space<vmem>>, vector<128x768xbf16>
    %cst_125 = arith.constant dense<0.000000e+00> : vector<16x768xf32>
    %475 = tpu.matmul %473, %474, %cst_125 {dimension_numbers = #tpu.dot_dimension_numbers<[1], [0], [0], [1], [0, 0, 1, 1], [], []>} : vector<16x128xbf16>, vector<128x768xbf16>, vector<16x768xf32> -> vector<16x768xf32>
    %476 = vector.extract_strided_slice %475 {offsets = [0, 0], sizes = [8, 384], strides = [1, 1]} : vector<16x768xf32> to vector<8x384xf32>
    %477 = vector.extract_strided_slice %475 {offsets = [8, 384], sizes = [8, 384], strides = [1, 1]} : vector<16x768xf32> to vector<8x384xf32>
    %c48_126 = arith.constant 48 : index
    %c0_127 = arith.constant 0 : index
    %478 = vector.load %arg11[%c48_126, %c0_127] : memref<64x768xf32, #tpu.memory_space<vmem>>, vector<8x384xf32>
    %c8_128 = arith.constant 8 : index
    %c384_129 = arith.constant 384 : index
    %479 = vector.load %arg11[%c8_128, %c384_129] : memref<64x768xf32, #tpu.memory_space<vmem>>, vector<8x384xf32>
    %480 = vector.extract_strided_slice %472 {offsets = [0, 0], sizes = [8, 128], strides = [1, 1]} : vector<16x128xf32> to vector<8x128xf32>
    %481 = vector.extract_strided_slice %472 {offsets = [8, 0], sizes = [8, 128], strides = [1, 1]} : vector<16x128xf32> to vector<8x128xf32>
    %482 = vector.extract_strided_slice %478 {offsets = [0, 0], sizes = [8, 128], strides = [1, 1]} : vector<8x384xf32> to vector<8x128xf32>
    %483 = vector.extract_strided_slice %476 {offsets = [0, 0], sizes = [8, 128], strides = [1, 1]} : vector<8x384xf32> to vector<8x128xf32>
    %484 = arith.addf %482, %483 : vector<8x128xf32>
    %485 = arith.negf %484 : vector<8x128xf32>
    %486 = math.exp %485 : vector<8x128xf32>
    %cst_130 = arith.constant 1.000000e+00 : f32
    %487 = vector.broadcast %cst_130 : f32 to vector<8x128xf32>
    %488 = arith.addf %487, %486 : vector<8x128xf32>
    %489 = arith.divf %487, %488 : vector<8x128xf32>
    %490 = vector.extract_strided_slice %478 {offsets = [0, 128], sizes = [8, 128], strides = [1, 1]} : vector<8x384xf32> to vector<8x128xf32>
    %491 = vector.extract_strided_slice %476 {offsets = [0, 128], sizes = [8, 128], strides = [1, 1]} : vector<8x384xf32> to vector<8x128xf32>
    %492 = arith.addf %490, %491 : vector<8x128xf32>
    %493 = arith.negf %492 : vector<8x128xf32>
    %494 = math.exp %493 : vector<8x128xf32>
    %cst_131 = arith.constant 1.000000e+00 : f32
    %495 = vector.broadcast %cst_131 : f32 to vector<8x128xf32>
    %496 = arith.addf %495, %494 : vector<8x128xf32>
    %497 = arith.divf %495, %496 : vector<8x128xf32>
    %498 = vector.extract_strided_slice %478 {offsets = [0, 256], sizes = [8, 128], strides = [1, 1]} : vector<8x384xf32> to vector<8x128xf32>
    %499 = vector.extract_strided_slice %476 {offsets = [0, 256], sizes = [8, 128], strides = [1, 1]} : vector<8x384xf32> to vector<8x128xf32>
    %500 = arith.addf %499, %12 : vector<8x128xf32>
    %501 = arith.mulf %489, %500 : vector<8x128xf32>
    %502 = arith.addf %498, %501 : vector<8x128xf32>
    %503 = math.tanh %502 : vector<8x128xf32>
    %cst_132 = arith.constant 1.000000e+00 : f32
    %504 = vector.broadcast %cst_132 : f32 to vector<8x128xf32>
    %505 = arith.subf %504, %497 : vector<8x128xf32>
    %506 = arith.mulf %505, %503 : vector<8x128xf32>
    %507 = arith.mulf %497, %480 : vector<8x128xf32>
    %508 = arith.addf %506, %507 : vector<8x128xf32>
    %509 = vector.extract_strided_slice %479 {offsets = [0, 0], sizes = [8, 128], strides = [1, 1]} : vector<8x384xf32> to vector<8x128xf32>
    %510 = vector.extract_strided_slice %477 {offsets = [0, 0], sizes = [8, 128], strides = [1, 1]} : vector<8x384xf32> to vector<8x128xf32>
    %511 = arith.addf %509, %510 : vector<8x128xf32>
    %512 = arith.negf %511 : vector<8x128xf32>
    %513 = math.exp %512 : vector<8x128xf32>
    %cst_133 = arith.constant 1.000000e+00 : f32
    %514 = vector.broadcast %cst_133 : f32 to vector<8x128xf32>
    %515 = arith.addf %514, %513 : vector<8x128xf32>
    %516 = arith.divf %514, %515 : vector<8x128xf32>
    %517 = vector.extract_strided_slice %479 {offsets = [0, 128], sizes = [8, 128], strides = [1, 1]} : vector<8x384xf32> to vector<8x128xf32>
    %518 = vector.extract_strided_slice %477 {offsets = [0, 128], sizes = [8, 128], strides = [1, 1]} : vector<8x384xf32> to vector<8x128xf32>
    %519 = arith.addf %517, %518 : vector<8x128xf32>
    %520 = arith.negf %519 : vector<8x128xf32>
    %521 = math.exp %520 : vector<8x128xf32>
    %cst_134 = arith.constant 1.000000e+00 : f32
    %522 = vector.broadcast %cst_134 : f32 to vector<8x128xf32>
    %523 = arith.addf %522, %521 : vector<8x128xf32>
    %524 = arith.divf %522, %523 : vector<8x128xf32>
    %525 = vector.extract_strided_slice %479 {offsets = [0, 256], sizes = [8, 128], strides = [1, 1]} : vector<8x384xf32> to vector<8x128xf32>
    %526 = vector.extract_strided_slice %477 {offsets = [0, 256], sizes = [8, 128], strides = [1, 1]} : vector<8x384xf32> to vector<8x128xf32>
    %527 = arith.addf %526, %15 : vector<8x128xf32>
    %528 = arith.mulf %516, %527 : vector<8x128xf32>
    %529 = arith.addf %525, %528 : vector<8x128xf32>
    %530 = math.tanh %529 : vector<8x128xf32>
    %cst_135 = arith.constant 1.000000e+00 : f32
    %531 = vector.broadcast %cst_135 : f32 to vector<8x128xf32>
    %532 = arith.subf %531, %524 : vector<8x128xf32>
    %533 = arith.mulf %532, %530 : vector<8x128xf32>
    %534 = arith.mulf %524, %481 : vector<8x128xf32>
    %535 = arith.addf %533, %534 : vector<8x128xf32>
    %c6_i32_136 = arith.constant 6 : i32
    %536 = vector.broadcast %c6_i32_136 : i32 to vector<8x128xi32>
    %537 = arith.cmpi sgt, %9, %536 : vector<8x128xi32>
    %c1_i32_137 = arith.constant 1 : i32
    %538 = vector.broadcast %c1_i32_137 : i32 to vector<8x128xi32>
    %539 = arith.cmpi sgt, %9, %538 : vector<8x128xi32>
    %cst_138 = arith.constant 0.000000e+00 : f32
    %540 = vector.broadcast %cst_138 : f32 to vector<8x128xf32>
    %541 = arith.select %537, %508, %540 : vector<8x128xi1>, vector<8x128xf32>
    %c48_139 = arith.constant 48 : index
    %c0_140 = arith.constant 0 : index
    %542 = vector.load %arg12[%c48_139, %c0_140] : memref<64x256xf32, #tpu.memory_space<vmem>>, vector<8x128xf32>
    tpu.vector_store %arg12[%c48_139, %c0_140], %541 {strides = array<i32>} : memref<64x256xf32, #tpu.memory_space<vmem>>, vector<8x128xf32>,
    %cst_141 = arith.constant 0.000000e+00 : f32
    %543 = vector.broadcast %cst_141 : f32 to vector<8x128xf32>
    %544 = arith.select %539, %535, %543 : vector<8x128xi1>, vector<8x128xf32>
    %c8_142 = arith.constant 8 : index
    %c128_143 = arith.constant 128 : index
    %545 = vector.load %arg12[%c8_142, %c128_143] : memref<64x256xf32, #tpu.memory_space<vmem>>, vector<8x128xf32>
    tpu.vector_store %arg12[%c8_142, %c128_143], %544 {strides = array<i32>} : memref<64x256xf32, #tpu.memory_space<vmem>>, vector<8x128xf32>,
    %546 = arith.select %537, %508, %480 : vector<8x128xi1>, vector<8x128xf32>
    %547 = arith.select %539, %535, %481 : vector<8x128xi1>, vector<8x128xf32>
    %548 = tpu.concatenate %546, %547 in 0 : vector<8x128xf32>, vector<8x128xf32> -> vector<16x128xf32>
    %549 = arith.truncf %548 : vector<16x128xf32> to vector<16x128xbf16>
    %c0_144 = arith.constant 0 : index
    %c0_145 = arith.constant 0 : index
    %550 = vector.load %arg4[%c0_144, %c0_145] : memref<128x768xbf16, #tpu.memory_space<vmem>>, vector<128x768xbf16>
    %cst_146 = arith.constant dense<0.000000e+00> : vector<16x768xf32>
    %551 = tpu.matmul %549, %550, %cst_146 {dimension_numbers = #tpu.dot_dimension_numbers<[1], [0], [0], [1], [0, 0, 1, 1], [], []>} : vector<16x128xbf16>, vector<128x768xbf16>, vector<16x768xf32> -> vector<16x768xf32>
    %552 = vector.extract_strided_slice %551 {offsets = [0, 0], sizes = [8, 384], strides = [1, 1]} : vector<16x768xf32> to vector<8x384xf32>
    %553 = vector.extract_strided_slice %551 {offsets = [8, 384], sizes = [8, 384], strides = [1, 1]} : vector<16x768xf32> to vector<8x384xf32>
    %c56_147 = arith.constant 56 : index
    %c0_148 = arith.constant 0 : index
    %554 = vector.load %arg11[%c56_147, %c0_148] : memref<64x768xf32, #tpu.memory_space<vmem>>, vector<8x384xf32>
    %c0_149 = arith.constant 0 : index
    %c384_150 = arith.constant 384 : index
    %555 = vector.load %arg11[%c0_149, %c384_150] : memref<64x768xf32, #tpu.memory_space<vmem>>, vector<8x384xf32>
    %556 = vector.extract_strided_slice %548 {offsets = [0, 0], sizes = [8, 128], strides = [1, 1]} : vector<16x128xf32> to vector<8x128xf32>
    %557 = vector.extract_strided_slice %548 {offsets = [8, 0], sizes = [8, 128], strides = [1, 1]} : vector<16x128xf32> to vector<8x128xf32>
    %558 = vector.extract_strided_slice %554 {offsets = [0, 0], sizes = [8, 128], strides = [1, 1]} : vector<8x384xf32> to vector<8x128xf32>
    %559 = vector.extract_strided_slice %552 {offsets = [0, 0], sizes = [8, 128], strides = [1, 1]} : vector<8x384xf32> to vector<8x128xf32>
    %560 = arith.addf %558, %559 : vector<8x128xf32>
    %561 = arith.negf %560 : vector<8x128xf32>
    %562 = math.exp %561 : vector<8x128xf32>
    %cst_151 = arith.constant 1.000000e+00 : f32
    %563 = vector.broadcast %cst_151 : f32 to vector<8x128xf32>
    %564 = arith.addf %563, %562 : vector<8x128xf32>
    %565 = arith.divf %563, %564 : vector<8x128xf32>
    %566 = vector.extract_strided_slice %554 {offsets = [0, 128], sizes = [8, 128], strides = [1, 1]} : vector<8x384xf32> to vector<8x128xf32>
    %567 = vector.extract_strided_slice %552 {offsets = [0, 128], sizes = [8, 128], strides = [1, 1]} : vector<8x384xf32> to vector<8x128xf32>
    %568 = arith.addf %566, %567 : vector<8x128xf32>
    %569 = arith.negf %568 : vector<8x128xf32>
    %570 = math.exp %569 : vector<8x128xf32>
    %cst_152 = arith.constant 1.000000e+00 : f32
    %571 = vector.broadcast %cst_152 : f32 to vector<8x128xf32>
    %572 = arith.addf %571, %570 : vector<8x128xf32>
    %573 = arith.divf %571, %572 : vector<8x128xf32>
    %574 = vector.extract_strided_slice %554 {offsets = [0, 256], sizes = [8, 128], strides = [1, 1]} : vector<8x384xf32> to vector<8x128xf32>
    %575 = vector.extract_strided_slice %552 {offsets = [0, 256], sizes = [8, 128], strides = [1, 1]} : vector<8x384xf32> to vector<8x128xf32>
    %576 = arith.addf %575, %12 : vector<8x128xf32>
    %577 = arith.mulf %565, %576 : vector<8x128xf32>
    %578 = arith.addf %574, %577 : vector<8x128xf32>
    %579 = math.tanh %578 : vector<8x128xf32>
    %cst_153 = arith.constant 1.000000e+00 : f32
    %580 = vector.broadcast %cst_153 : f32 to vector<8x128xf32>
    %581 = arith.subf %580, %573 : vector<8x128xf32>
    %582 = arith.mulf %581, %579 : vector<8x128xf32>
    %583 = arith.mulf %573, %556 : vector<8x128xf32>
    %584 = arith.addf %582, %583 : vector<8x128xf32>
    %585 = vector.extract_strided_slice %555 {offsets = [0, 0], sizes = [8, 128], strides = [1, 1]} : vector<8x384xf32> to vector<8x128xf32>
    %586 = vector.extract_strided_slice %553 {offsets = [0, 0], sizes = [8, 128], strides = [1, 1]} : vector<8x384xf32> to vector<8x128xf32>
    %587 = arith.addf %585, %586 : vector<8x128xf32>
    %588 = arith.negf %587 : vector<8x128xf32>
    %589 = math.exp %588 : vector<8x128xf32>
    %cst_154 = arith.constant 1.000000e+00 : f32
    %590 = vector.broadcast %cst_154 : f32 to vector<8x128xf32>
    %591 = arith.addf %590, %589 : vector<8x128xf32>
    %592 = arith.divf %590, %591 : vector<8x128xf32>
    %593 = vector.extract_strided_slice %555 {offsets = [0, 128], sizes = [8, 128], strides = [1, 1]} : vector<8x384xf32> to vector<8x128xf32>
    %594 = vector.extract_strided_slice %553 {offsets = [0, 128], sizes = [8, 128], strides = [1, 1]} : vector<8x384xf32> to vector<8x128xf32>
    %595 = arith.addf %593, %594 : vector<8x128xf32>
    %596 = arith.negf %595 : vector<8x128xf32>
    %597 = math.exp %596 : vector<8x128xf32>
    %cst_155 = arith.constant 1.000000e+00 : f32
    %598 = vector.broadcast %cst_155 : f32 to vector<8x128xf32>
    %599 = arith.addf %598, %597 : vector<8x128xf32>
    %600 = arith.divf %598, %599 : vector<8x128xf32>
    %601 = vector.extract_strided_slice %555 {offsets = [0, 256], sizes = [8, 128], strides = [1, 1]} : vector<8x384xf32> to vector<8x128xf32>
    %602 = vector.extract_strided_slice %553 {offsets = [0, 256], sizes = [8, 128], strides = [1, 1]} : vector<8x384xf32> to vector<8x128xf32>
    %603 = arith.addf %602, %15 : vector<8x128xf32>
    %604 = arith.mulf %592, %603 : vector<8x128xf32>
    %605 = arith.addf %601, %604 : vector<8x128xf32>
    %606 = math.tanh %605 : vector<8x128xf32>
    %cst_156 = arith.constant 1.000000e+00 : f32
    %607 = vector.broadcast %cst_156 : f32 to vector<8x128xf32>
    %608 = arith.subf %607, %600 : vector<8x128xf32>
    %609 = arith.mulf %608, %606 : vector<8x128xf32>
    %610 = arith.mulf %600, %557 : vector<8x128xf32>
    %611 = arith.addf %609, %610 : vector<8x128xf32>
    %c7_i32_157 = arith.constant 7 : i32
    %612 = vector.broadcast %c7_i32_157 : i32 to vector<8x128xi32>
    %613 = arith.cmpi sgt, %9, %612 : vector<8x128xi32>
    %c0_i32_158 = arith.constant 0 : i32
    %614 = vector.broadcast %c0_i32_158 : i32 to vector<8x128xi32>
    %615 = arith.cmpi sgt, %9, %614 : vector<8x128xi32>
    %cst_159 = arith.constant 0.000000e+00 : f32
    %616 = vector.broadcast %cst_159 : f32 to vector<8x128xf32>
    %617 = arith.select %613, %584, %616 : vector<8x128xi1>, vector<8x128xf32>
    %c56_160 = arith.constant 56 : index
    %c0_161 = arith.constant 0 : index
    %618 = vector.load %arg12[%c56_160, %c0_161] : memref<64x256xf32, #tpu.memory_space<vmem>>, vector<8x128xf32>
    tpu.vector_store %arg12[%c56_160, %c0_161], %617 {strides = array<i32>} : memref<64x256xf32, #tpu.memory_space<vmem>>, vector<8x128xf32>,
    %cst_162 = arith.constant 0.000000e+00 : f32
    %619 = vector.broadcast %cst_162 : f32 to vector<8x128xf32>
    %620 = arith.select %615, %611, %619 : vector<8x128xi1>, vector<8x128xf32>
    %c0_163 = arith.constant 0 : index
    %c128_164 = arith.constant 128 : index
    %621 = vector.load %arg12[%c0_163, %c128_164] : memref<64x256xf32, #tpu.memory_space<vmem>>, vector<8x128xf32>
    tpu.vector_store %arg12[%c0_163, %c128_164], %620 {strides = array<i32>} : memref<64x256xf32, #tpu.memory_space<vmem>>, vector<8x128xf32>,
    %c0_165 = arith.constant 0 : index
    %c0_166 = arith.constant 0 : index
    %622 = vector.load %arg12[%c0_165, %c0_166] : memref<64x256xf32, #tpu.memory_space<vmem>>, vector<64x256xf32>
    %623 = arith.truncf %622 : vector<64x256xf32> to vector<64x256xbf16>
    %c0_167 = arith.constant 0 : index
    %c0_168 = arith.constant 0 : index
    %624 = vector.load %arg6[%c0_167, %c0_168] : memref<256x128xbf16, #tpu.memory_space<vmem>>, vector<256x128xbf16>
    %cst_169 = arith.constant dense<0.000000e+00> : vector<64x128xf32>
    %625 = tpu.matmul %623, %624, %cst_169 {dimension_numbers = #tpu.dot_dimension_numbers<[1], [0], [0], [1], [0, 0, 1, 1], [], []>} : vector<64x256xbf16>, vector<256x128xbf16>, vector<64x128xf32> -> vector<64x128xf32>
    %c0_170 = arith.constant 0 : index
    %c0_171 = arith.constant 0 : index
    %626 = vector.load %arg7[%c0_170, %c0_171] : memref<1x128xf32, #tpu.memory_space<vmem>>, vector<1x128xf32>
    %627 = vector.broadcast %626 : vector<1x128xf32> to vector<64x128xf32>
    %628 = arith.addf %625, %627 : vector<64x128xf32>
    %cst_172 = arith.constant 0.000000e+00 : f32
    %629 = vector.broadcast %cst_172 : f32 to vector<64x128xf32>
    %630 = arith.maximumf %628, %629 : vector<64x128xf32>
    %c0_173 = arith.constant 0 : index
    %c0_174 = arith.constant 0 : index
    %631 = vector.load %arg8[%c0_173, %c0_174] : memref<1x128xf32, #tpu.memory_space<vmem>>, vector<1x128xf32>
    %632 = vector.broadcast %631 : vector<1x128xf32> to vector<64x128xf32>
    %633 = arith.mulf %630, %632 : vector<64x128xf32>
    %cst_175 = arith.constant dense<0.000000e+00> : vector<64xf32>
    %634 = vector.multi_reduction <add>, %633, %cst_175 [1] : vector<64x128xf32> to vector<64xf32>
    %635 = vector.shape_cast %634 : vector<64xf32> to vector<64x1xf32>
    %c0_176 = arith.constant 0 : index
    %c0_177 = arith.constant 0 : index
    %636 = vector.load %arg9[%c0_176, %c0_177] : memref<1x1xf32, #tpu.memory_space<vmem>>, vector<1x1xf32>
    %637 = vector.broadcast %636 : vector<1x1xf32> to vector<64x1xf32>
    %638 = arith.addf %635, %637 : vector<64x1xf32>
    %c0_178 = arith.constant 0 : index
    %c0_179 = arith.constant 0 : index
    %639 = vector.load %arg10[%c0_178, %c0_179] : memref<64x1xf32, #tpu.memory_space<vmem>>, vector<64x1xf32>
    tpu.vector_store %arg10[%c0_178, %c0_179], %638 {strides = array<i32>} : memref<64x1xf32, #tpu.memory_space<vmem>>, vector<64x1xf32>,
    return
  }
}

</mosaic_0001>

<llo_original>
// kernel: rnn_sentence_extractor_forward.1
$region0: #{rnn_sentence_extractor_forward.1}
  #allocation0 [shape = 'u32[]', space=smem, size = 0x4, offset = 0x4, fixed_abs, tag = 'smem constant byte address 0x4 - core index']
  #allocation1 [shape = 'u32[144,128]{1,0:T(1,128)}', space=vmem, size = 0x12000, scoped, tag = 'internal scratch']
  #allocation2 [shape = 'f32[64,768]{1,0:T(8,128)}', space=vmem, size = 0x30000, scoped, tag = 'scratch operand']
  #allocation3 [shape = 'f32[64,256]{1,0:T(8,128)}', space=vmem, size = 0x10000, scoped, tag = 'scratch operand']
  #allocation4 [shape = 'f32[1,1]{1,0:T(1,128)S(1)}', space=vmem, size = 0x200, scoped, tag = 'scoped memory for rnn_sentence_extractor_forward.1']
  %s0 = inlined_call_operand.vmem [shape: bf16[64,128], index: 0, kind: input, shape index: {}]
  %s1 = inlined_call_operand.vmem [shape: s32[8,1], index: 1, kind: input, shape index: {}]
  %s2 = inlined_call_operand.hbm [shape: bf16[128,768], index: 2, kind: input, shape index: {}]
  %s3 = inlined_call_operand.vmem [shape: f32[1,768], index: 3, kind: input, shape index: {}]
  %s4 = inlined_call_operand.hbm [shape: bf16[128,768], index: 4, kind: input, shape index: {}]
  %s5 = inlined_call_operand.vmem [shape: f32[1,256], index: 5, kind: input, shape index: {}]
  %s6 = inlined_call_operand.vmem [shape: bf16[256,128], index: 6, kind: input, shape index: {}]
  %s7 = inlined_call_operand.vmem [shape: f32[1,128], index: 7, kind: input, shape index: {}]
  %s8 = inlined_call_operand.vmem [shape: f32[1,128], index: 8, kind: input, shape index: {}]
  %s9 = inlined_call_operand.<no memory space> [shape: f32[1,1], index: 9, kind: input, shape index: {}]
  %s10 = inlined_call_operand.vmem [shape: f32[64,1], index: 10, kind: output, shape index: {}]
  %s11 = sld [smem:[#allocation0]]
  $region58: #{rnn_sentence_extractor_forward.1} parent=0
    _
  %s13 = ssub.s32 1, %s11
  %s14 = scalar_select 0, %s13, %s11
  %v15 = vstv %s9
  %16 = vst [vmem:[#allocation4] sm:$0x1] %v15
  $region1: #{rnn_sentence_extractor_forward.1} parent=0
    #allocation5 [shape = 'u8[196608]{0}', space=vmem, size = 0x30000, scoped, tag = 'input window, operand 2, single buffered']
    #allocation6 [shape = 's32[1]{0}', space=sflag, size = 0x4, scoped, tag = 'scoped memory for rnn_sentence_extractor_forward.1']
    #allocation7 [shape = 'u8[196608]{0}', space=vmem, size = 0x30000, scoped, tag = 'input window, operand 4, single buffered']
    #allocation8 [shape = 's32[1]{0}', space=sflag, size = 0x4, scoped, tag = 'scoped memory for rnn_sentence_extractor_forward.1']
    %17 = vsyncpa [#allocation6], 0
    %18 = vsyncpa [#allocation8], 0
    // Predicated region
    $region2: #{rnn_sentence_extractor_forward.1} parent=1 // pred_check
      _
    $region3: #{rnn_sentence_extractor_forward.1} parent=1 // pred_check_branch
      %20 = sbr.rel (0) target = $region5
    $region4: #{rnn_sentence_extractor_forward.1} parent=1 // pred_region
      _
    $region5: #{rnn_sentence_extractor_forward.1} parent=1 // pred_fallthru
      _
    // Predicated region
    $region6: #{rnn_sentence_extractor_forward.1} parent=1 // pred_check
      _
    $region7: #{rnn_sentence_extractor_forward.1} parent=1 // pred_check_branch
      %22 = sbr.rel (0) target = $region9
    $region8: #{rnn_sentence_extractor_forward.1} parent=1 // pred_region
      _
    $region9: #{rnn_sentence_extractor_forward.1} parent=1 // pred_fallthru
      _
    // Predicated region
    $region10: #{rnn_sentence_extractor_forward.1} parent=1 // pred_check
      _
    $region11: #{rnn_sentence_extractor_forward.1} parent=1 // pred_check_branch
      %24 = sbr.rel (0) target = $region13
    $region12: #{rnn_sentence_extractor_forward.1} parent=1 // pred_region
      %s26 = ssub.s32 6144, 6144
      %27 = vsyncadd [#allocation6], %s26
      %s28 = sshll.u32 [#allocation5], 4
      %s29 = int_to_ptr.vmem [resolvable:$true] %s28
      %34 = dma.hbm_to_vmem [thread:$0]  %s2, 6144, %s29, [#allocation6], 384, 384, 24
    $region13: #{rnn_sentence_extractor_forward.1} parent=1 // pred_fallthru
      _
    // Predicated region
    $region14: #{rnn_sentence_extractor_forward.1} parent=1 // pred_check
      _
    $region15: #{rnn_sentence_extractor_forward.1} parent=1 // pred_check_branch
      %36 = sbr.rel (0) target = $region17
    $region16: #{rnn_sentence_extractor_forward.1} parent=1 // pred_region
      _
    $region17: #{rnn_sentence_extractor_forward.1} parent=1 // pred_fallthru
      _
    // Predicated region
    $region18: #{rnn_sentence_extractor_forward.1} parent=1 // pred_check
      _
    $region19: #{rnn_sentence_extractor_forward.1} parent=1 // pred_check_branch
      %38 = sbr.rel (0) target = $region21
    $region20: #{rnn_sentence_extractor_forward.1} parent=1 // pred_region
      %s40 = ssub.s32 6144, 6144
      %41 = vsyncadd [#allocation8], %s40
      %s42 = sshll.u32 [#allocation7], 4
      %s43 = int_to_ptr.vmem [resolvable:$true] %s42
      %48 = dma.hbm_to_vmem [thread:$0]  %s4, 6144, %s43, [#allocation8], 384, 384, 24
    $region21: #{rnn_sentence_extractor_forward.1} parent=1 // pred_fallthru
      _
    // Predicated region
    $region22: #{rnn_sentence_extractor_forward.1} parent=1 // pred_check
      _
    $region23: #{rnn_sentence_extractor_forward.1} parent=1 // pred_check_branch
      %50 = sbr.rel (0) target = $region25
    $region24: #{rnn_sentence_extractor_forward.1} parent=1 // pred_region
      _
    $region25: #{rnn_sentence_extractor_forward.1} parent=1 // pred_fallthru
      _
    // Predicated region
    $region26: #{rnn_sentence_extractor_forward.1} parent=1 // pred_check
      _
    $region27: #{rnn_sentence_extractor_forward.1} parent=1 // pred_check_branch
      %52 = sbr.rel (0) target = $region29
    $region28: #{rnn_sentence_extractor_forward.1} parent=1 // pred_region
      _
    $region29: #{rnn_sentence_extractor_forward.1} parent=1 // pred_fallthru
      _
    // Predicated region
    $region30: #{rnn_sentence_extractor_forward.1} parent=1 // pred_check
      _
    $region31: #{rnn_sentence_extractor_forward.1} parent=1 // pred_check_branch
      %54 = sbr.rel (0) target = $region33
    $region32: #{rnn_sentence_extractor_forward.1} parent=1 // pred_region
      _
    $region33: #{rnn_sentence_extractor_forward.1} parent=1 // pred_fallthru
      _
    // Predicated region
    $region34: #{rnn_sentence_extractor_forward.1} parent=1 // pred_check
      _
    $region35: #{rnn_sentence_extractor_forward.1} parent=1 // pred_check_branch
      %56 = sbr.rel (0) target = $region37
    $region36: #{rnn_sentence_extractor_forward.1} parent=1 // pred_region
      _
    $region37: #{rnn_sentence_extractor_forward.1} parent=1 // pred_fallthru
      _
    // Predicated region
    $region38: #{rnn_sentence_extractor_forward.1} parent=1 // pred_check
      _
    $region39: #{rnn_sentence_extractor_forward.1} parent=1 // pred_check_branch
      %58 = sbr.rel (0) target = $region41
    $region40: #{rnn_sentence_extractor_forward.1} parent=1 // pred_region
      _
    $region41: #{rnn_sentence_extractor_forward.1} parent=1 // pred_fallthru
      _
    // Predicated region
    $region42: #{rnn_sentence_extractor_forward.1} parent=1 // pred_check
      _
    $region43: #{rnn_sentence_extractor_forward.1} parent=1 // pred_check_branch
      %60 = sbr.rel (0) target = $region45
    $region44: #{rnn_sentence_extractor_forward.1} parent=1 // pred_region
      %61 = dma.done [#allocation6], 6144
    $region45: #{rnn_sentence_extractor_forward.1} parent=1 // pred_fallthru
      _
    // Predicated region
    $region46: #{rnn_sentence_extractor_forward.1} parent=1 // pred_check
      _
    $region47: #{rnn_sentence_extractor_forward.1} parent=1 // pred_check_branch
      %63 = sbr.rel (0) target = $region49
    $region48: #{rnn_sentence_extractor_forward.1} parent=1 // pred_region
      %64 = dma.done [#allocation8], 6144
    $region49: #{rnn_sentence_extractor_forward.1} parent=1 // pred_fallthru
      _
    %v66 = vld [vmem:[%s0] sm:$0xf]
    %v67 = vld [vmem:[%s0 + $0x4] sm:$0xf]
    %v68 = vld [vmem:[%s0 + $0x8] sm:$0xf]
    %v69 = vld [vmem:[%s0 + $0xc] sm:$0xf]
    %v70 = vld [vmem:[%s0 + $0x10] sm:$0xf]
    %v71 = vld [vmem:[%s0 + $0x14] sm:$0xf]
    %v72 = vld [vmem:[%s0 + $0x18] sm:$0xf]
    %v73 = vld [vmem:[%s0 + $0x1c] sm:$0xf]
    %v74 = vld [vmem:[#allocation5] sm:$0xff]
    %v75 = vld [vmem:[#allocation5 + $0x8] sm:$0xff]
    %v76 = vld [vmem:[#allocation5 + $0x10] sm:$0xff]
    %v77 = vld [vmem:[#allocation5 + $0x18] sm:$0xff]
    %v78 = vld [vmem:[#allocation5 + $0x20] sm:$0xff]
    %v79 = vld [vmem:[#allocation5 + $0x28] sm:$0xff]
    %v80 = vld [vmem:[#allocation5 + $0x30] sm:$0xff]
    %v81 = vld [vmem:[#allocation5 + $0x38] sm:$0xff]
    %v82 = vld [vmem:[#allocation5 + $0x40] sm:$0xff]
    %v83 = vld [vmem:[#allocation5 + $0x48] sm:$0xff]
    %v84 = vld [vmem:[#allocation5 + $0x50] sm:$0xff]
    %v85 = vld [vmem:[#allocation5 + $0x58] sm:$0xff]
    %v86 = vld [vmem:[#allocation5 + $0x60] sm:$0xff]
    %v87 = vld [vmem:[#allocation5 + $0x68] sm:$0xff]
    %v88 = vld [vmem:[#allocation5 + $0x70] sm:$0xff]
    %v89 = vld [vmem:[#allocation5 + $0x78] sm:$0xff]
    %v90 = vld [vmem:[#allocation5 + $0x80] sm:$0xff]
    %v91 = vld [vmem:[#allocation5 + $0x88] sm:$0xff]
    %v92 = vld [vmem:[#allocation5 + $0x90] sm:$0xff]
    %v93 = vld [vmem:[#allocation5 + $0x98] sm:$0xff]
    %v94 = vld [vmem:[#allocation5 + $0xa0] sm:$0xff]
    %v95 = vld [vmem:[#allocation5 + $0xa8] sm:$0xff]
    %v96 = vld [vmem:[#allocation5 + $0xb0] sm:$0xff]
    %v97 = vld [vmem:[#allocation5 + $0xb8] sm:$0xff]
    %v98 = vld [vmem:[#allocation5 + $0xc0] sm:$0xff]
    %v99 = vld [vmem:[#allocation5 + $0xc8] sm:$0xff]
    %v100 = vld [vmem:[#allocation5 + $0xd0] sm:$0xff]
    %v101 = vld [vmem:[#allocation5 + $0xd8] sm:$0xff]
    %v102 = vld [vmem:[#allocation5 + $0xe0] sm:$0xff]
    %v103 = vld [vmem:[#allocation5 + $0xe8] sm:$0xff]
    %v104 = vld [vmem:[#allocation5 + $0xf0] sm:$0xff]
    %v105 = vld [vmem:[#allocation5 + $0xf8] sm:$0xff]
    %v106 = vld [vmem:[#allocation5 + $0x100] sm:$0xff]
    %v107 = vld [vmem:[#allocation5 + $0x108] sm:$0xff]
    %v108 = vld [vmem:[#allocation5 + $0x110] sm:$0xff]
    %v109 = vld [vmem:[#allocation5 + $0x118] sm:$0xff]
    %v110 = vld [vmem:[#allocation5 + $0x120] sm:$0xff]
    %v111 = vld [vmem:[#allocation5 + $0x128] sm:$0xff]
    %v112 = vld [vmem:[#allocation5 + $0x130] sm:$0xff]
    %v113 = vld [vmem:[#allocation5 + $0x138] sm:$0xff]
    %v114 = vld [vmem:[#allocation5 + $0x140] sm:$0xff]
    %v115 = vld [vmem:[#allocation5 + $0x148] sm:$0xff]
    %v116 = vld [vmem:[#allocation5 + $0x150] sm:$0xff]
    %v117 = vld [vmem:[#allocation5 + $0x158] sm:$0xff]
    %v118 = vld [vmem:[#allocation5 + $0x160] sm:$0xff]
    %v119 = vld [vmem:[#allocation5 + $0x168] sm:$0xff]
    %v120 = vld [vmem:[#allocation5 + $0x170] sm:$0xff]
    %v121 = vld [vmem:[#allocation5 + $0x178] sm:$0xff]
    %v122 = vld [vmem:[%s3] sm:$0x3f]
    %v124 = vlaneseq
    %v125 = vshrl.u32 %v124, 7
    %v126 = vsub.s32 0, %v125
    %v127 = vrot.slane %v122, %v126
    %v128 = vlaneseq
    %v129 = vshrl.u32 %v128, 7
    %v130 = vsub.s32 1, %v129
    %v131 = vrot.slane %v122, %v130
    %v132 = vlaneseq
    %v133 = vshrl.u32 %v132, 7
    %v134 = vsub.s32 2, %v133
    %v135 = vrot.slane %v122, %v134
    %v136 = vlaneseq
    %v137 = vshrl.u32 %v136, 7
    %v138 = vsub.s32 3, %v137
    %v139 = vrot.slane %v122, %v138
    %v140 = vlaneseq
    %v141 = vshrl.u32 %v140, 7
    %v142 = vsub.s32 4, %v141
    %v143 = vrot.slane %v122, %v142
    %v144 = vlaneseq
    %v145 = vshrl.u32 %v144, 7
    %v146 = vsub.s32 5, %v145
    %v147 = vrot.slane %v122, %v146
    %v162 = vunpack.c.l.b16 %v66
    %v163 = vunpack.c.l.b16 %v67
    %v164 = vunpack.c.l.b16 %v68
    %v165 = vunpack.c.l.b16 %v69
    %v166 = vunpack.c.l.b16 %v70
    %v167 = vunpack.c.l.b16 %v71
    %v168 = vunpack.c.l.b16 %v72
    %v169 = vunpack.c.l.b16 %v73
    %v170 = vpack.c.b16 %v163, %v162
    %v171 = vpack.c.b16 %v165, %v164
    %v172 = vpack.c.b16 %v167, %v166
    %v173 = vpack.c.b16 %v169, %v168
    %v226 = vunpack.c.l.b16 %v74
    %v227 = vunpack.c.h.b16 %v74
    %v228 = vunpack.c.l.b16 %v75
    %v229 = vunpack.c.h.b16 %v75
    %v230 = vunpack.c.l.b16 %v76
    %v231 = vunpack.c.h.b16 %v76
    %v232 = vunpack.c.l.b16 %v77
    %v233 = vunpack.c.h.b16 %v77
    %v234 = vunpack.c.l.b16 %v78
    %v235 = vunpack.c.h.b16 %v78
    %v236 = vunpack.c.l.b16 %v79
    %v237 = vunpack.c.h.b16 %v79
    %v238 = vunpack.c.l.b16 %v80
    %v239 = vunpack.c.h.b16 %v80
    %v240 = vunpack.c.l.b16 %v81
    %v241 = vunpack.c.h.b16 %v81
    %v242 = vunpack.c.l.b16 %v82
    %v243 = vunpack.c.h.b16 %v82
    %v244 = vunpack.c.l.b16 %v83
    %v245 = vunpack.c.h.b16 %v83
    %v246 = vunpack.c.l.b16 %v84
    %v247 = vunpack.c.h.b16 %v84
    %v248 = vunpack.c.l.b16 %v85
    %v249 = vunpack.c.h.b16 %v85
    %v250 = vunpack.c.l.b16 %v86
    %v251 = vunpack.c.h.b16 %v86
    %v252 = vunpack.c.l.b16 %v87
    %v253 = vunpack.c.h.b16 %v87
    %v254 = vunpack.c.l.b16 %v88
    %v255 = vunpack.c.h.b16 %v88
    %v256 = vunpack.c.l.b16 %v89
    %v257 = vunpack.c.h.b16 %v89
    %v258 = vunpack.c.l.b16 %v90
    %v259 = vunpack.c.h.b16 %v90
    %v260 = vunpack.c.l.b16 %v91
    %v261 = vunpack.c.h.b16 %v91
    %v262 = vunpack.c.l.b16 %v92
    %v263 = vunpack.c.h.b16 %v92
    %v264 = vunpack.c.l.b16 %v93
    %v265 = vunpack.c.h.b16 %v93
    %v266 = vunpack.c.l.b16 %v94
    %v267 = vunpack.c.h.b16 %v94
    %v268 = vunpack.c.l.b16 %v95
    %v269 = vunpack.c.h.b16 %v95
    %v270 = vunpack.c.l.b16 %v96
    %v271 = vunpack.c.h.b16 %v96
    %v272 = vunpack.c.l.b16 %v97
    %v273 = vunpack.c.h.b16 %v97
    %v274 = vunpack.c.l.b16 %v98
    %v275 = vunpack.c.h.b16 %v98
    %v276 = vunpack.c.l.b16 %v99
    %v277 = vunpack.c.h.b16 %v99
    %v278 = vunpack.c.l.b16 %v100
    %v279 = vunpack.c.h.b16 %v100
    %v280 = vunpack.c.l.b16 %v101
    %v281 = vunpack.c.h.b16 %v101
    %v282 = vunpack.c.l.b16 %v102
    %v283 = vunpack.c.h.b16 %v102
    %v284 = vunpack.c.l.b16 %v103
    %v285 = vunpack.c.h.b16 %v103
    %v286 = vunpack.c.l.b16 %v104
    %v287 = vunpack.c.h.b16 %v104
    %v288 = vunpack.c.l.b16 %v105
    %v289 = vunpack.c.h.b16 %v105
    %v290 = vunpack.c.l.b16 %v106
    %v291 = vunpack.c.h.b16 %v106
    %v292 = vunpack.c.l.b16 %v107
    %v293 = vunpack.c.h.b16 %v107
    %v294 = vunpack.c.l.b16 %v108
    %v295 = vunpack.c.h.b16 %v108
    %v296 = vunpack.c.l.b16 %v109
    %v297 = vunpack.c.h.b16 %v109
    %v298 = vunpack.c.l.b16 %v110
    %v299 = vunpack.c.h.b16 %v110
    %v300 = vunpack.c.l.b16 %v111
    %v301 = vunpack.c.h.b16 %v111
    %v302 = vunpack.c.l.b16 %v112
    %v303 = vunpack.c.h.b16 %v112
    %v304 = vunpack.c.l.b16 %v113
    %v305 = vunpack.c.h.b16 %v113
    %v306 = vunpack.c.l.b16 %v114
    %v307 = vunpack.c.h.b16 %v114
    %v308 = vunpack.c.l.b16 %v115
    %v309 = vunpack.c.h.b16 %v115
    %v310 = vunpack.c.l.b16 %v116
    %v311 = vunpack.c.h.b16 %v116
    %v312 = vunpack.c.l.b16 %v117
    %v313 = vunpack.c.h.b16 %v117
    %v314 = vunpack.c.l.b16 %v118
    %v315 = vunpack.c.h.b16 %v118
    %v316 = vunpack.c.l.b16 %v119
    %v317 = vunpack.c.h.b16 %v119
    %v318 = vunpack.c.l.b16 %v120
    %v319 = vunpack.c.h.b16 %v120
    %v320 = vunpack.c.l.b16 %v121
    %v321 = vunpack.c.h.b16 %v121
    %v322 = vpack.c.b16 %v232, %v226
    %v323 = vpack.c.b16 %v233, %v227
    %v324 = vpack.c.b16 %v234, %v228
    %v325 = vpack.c.b16 %v235, %v229
    %v326 = vpack.c.b16 %v236, %v230
    %v327 = vpack.c.b16 %v237, %v231
    %v328 = vpack.c.b16 %v244, %v238
    %v329 = vpack.c.b16 %v245, %v239
    %v330 = vpack.c.b16 %v246, %v240
    %v331 = vpack.c.b16 %v247, %v241
    %v332 = vpack.c.b16 %v248, %v242
    %v333 = vpack.c.b16 %v249, %v243
    %v334 = vpack.c.b16 %v256, %v250
    %v335 = vpack.c.b16 %v257, %v251
    %v336 = vpack.c.b16 %v258, %v252
    %v337 = vpack.c.b16 %v259, %v253
    %v338 = vpack.c.b16 %v260, %v254
    %v339 = vpack.c.b16 %v261, %v255
    %v340 = vpack.c.b16 %v268, %v262
    %v341 = vpack.c.b16 %v269, %v263
    %v342 = vpack.c.b16 %v270, %v264
    %v343 = vpack.c.b16 %v271, %v265
    %v344 = vpack.c.b16 %v272, %v266
    %v345 = vpack.c.b16 %v273, %v267
    %v346 = vpack.c.b16 %v280, %v274
    %v347 = vpack.c.b16 %v281, %v275
    %v348 = vpack.c.b16 %v282, %v276
    %v349 = vpack.c.b16 %v283, %v277
    %v350 = vpack.c.b16 %v284, %v278
    %v351 = vpack.c.b16 %v285, %v279
    %v352 = vpack.c.b16 %v292, %v286
    %v353 = vpack.c.b16 %v293, %v287
    %v354 = vpack.c.b16 %v294, %v288
    %v355 = vpack.c.b16 %v295, %v289
    %v356 = vpack.c.b16 %v296, %v290
    %v357 = vpack.c.b16 %v297, %v291
    %v358 = vpack.c.b16 %v304, %v298
    %v359 = vpack.c.b16 %v305, %v299
    %v360 = vpack.c.b16 %v306, %v300
    %v361 = vpack.c.b16 %v307, %v301
    %v362 = vpack.c.b16 %v308, %v302
    %v363 = vpack.c.b16 %v309, %v303
    %v364 = vpack.c.b16 %v316, %v310
    %v365 = vpack.c.b16 %v317, %v311
    %v366 = vpack.c.b16 %v318, %v312
    %v367 = vpack.c.b16 %v319, %v313
    %v368 = vpack.c.b16 %v320, %v314
    %v369 = vpack.c.b16 %v321, %v315
    %418 = vmatprep.subr.bf16.mxu0 %v365
    %419 = vmatpush1.bf16.msra.mxu0 %v364
    %420 = vmatprep.subr.bf16.mxu0 %v359
    %421 = vmatpush1.bf16.msra.mxu0 %v358
    %422 = vmatprep.subr.bf16.mxu0 %v353
    %423 = vmatpush1.bf16.msra.mxu0 %v352
    %424 = vmatprep.subr.bf16.mxu0 %v347
    %425 = vmatpush1.bf16.msra.mxu0 %v346
    %426 = vmatprep.subr.bf16.mxu0 %v341
    %427 = vmatpush1.bf16.msra.mxu0 %v340
    %428 = vmatprep.subr.bf16.mxu0 %v335
    %429 = vmatpush1.bf16.msra.mxu0 %v334
    %430 = vmatprep.subr.bf16.mxu0 %v329
    %431 = vmatpush1.bf16.msra.mxu0 %v328
    %432 = vmatprep.subr.bf16.mxu0 %v323
    %433 = vmatpush1.bf16.msra.mxu0 %v322
    %434 = vmatprep.subr.bf16.mxu0 0
    %435 = vmatpush2.bf16.msra.mxu0 0
    %436 = vmatprep.subr.bf16.mxu0 0
    %437 = vmatpush2.bf16.msra.mxu0 0
    %438 = vmatprep.subr.bf16.mxu0 0
    %439 = vmatpush2.bf16.msra.mxu0 0
    %440 = vmatprep.subr.bf16.mxu0 0
    %441 = vmatpush2.bf16.msra.mxu0 0
    %442 = vmatprep.subr.bf16.mxu0 0
    %443 = vmatpush2.bf16.msra.mxu0 0
    %444 = vmatprep.subr.bf16.mxu0 0
    %445 = vmatpush2.bf16.msra.mxu0 0
    %446 = vmatprep.subr.bf16.mxu0 0
    %447 = vmatpush2.bf16.msra.mxu0 0
    %448 = vmatprep.subr.bf16.mxu0 0
    %449 = vmatpush2.bf16.msra.mxu0 0
    %450 = vmatprep.mubr.bf16.mxu0 0
    %451 = vmatmul.mubr.bf16.gmra.mxu0 %v170
    %v452 = vpop.f32.mrf.mxu0
    %v453 = vadd.f32 %v127, %v452
    %v454 = vpop.f32.mrf.mxu0
    %v455 = vadd.f32 %v131, %v454
    %v456 = vpop.f32.mrf.mxu0
    %v457 = vadd.f32 %v127, %v456
    %v458 = vpop.f32.mrf.mxu0
    %v459 = vadd.f32 %v131, %v458
    %460 = vmatprep.mubr.bf16.mxu0 0
    %461 = vmatmul.mubr.bf16.gmra.mxu0 %v171
    %v462 = vpop.f32.mrf.mxu0
    %v463 = vadd.f32 %v127, %v462
    %v464 = vpop.f32.mrf.mxu0
    %v465 = vadd.f32 %v131, %v464
    %v466 = vpop.f32.mrf.mxu0
    %v467 = vadd.f32 %v127, %v466
    %v468 = vpop.f32.mrf.mxu0
    %v469 = vadd.f32 %v131, %v468
    %470 = vmatprep.mubr.bf16.mxu0 0
    %471 = vmatmul.mubr.bf16.gmra.mxu0 %v172
    %v472 = vpop.f32.mrf.mxu0
    %v473 = vadd.f32 %v127, %v472
    %v474 = vpop.f32.mrf.mxu0
    %v475 = vadd.f32 %v131, %v474
    %v476 = vpop.f32.mrf.mxu0
    %v477 = vadd.f32 %v127, %v476
    %v478 = vpop.f32.mrf.mxu0
    %v479 = vadd.f32 %v131, %v478
    %480 = vmatprep.mubr.bf16.mxu0 0
    %481 = vmatmul.mubr.bf16.gmra.mxu0 %v173
    %v482 = vpop.f32.mrf.mxu0
    %v483 = vadd.f32 %v127, %v482
    %v484 = vpop.f32.mrf.mxu0
    %v485 = vadd.f32 %v131, %v484
    %v486 = vpop.f32.mrf.mxu0
    %v487 = vadd.f32 %v127, %v486
    %v488 = vpop.f32.mrf.mxu0
    %v489 = vadd.f32 %v131, %v488
    %490 = vdwg.mxu0
    %491 = vmatprep.subr.bf16.mxu0 %v367
    %492 = vmatpush1.bf16.msra.mxu0 %v366
    %493 = vmatprep.subr.bf16.mxu0 %v361
    %494 = vmatpush1.bf16.msra.mxu0 %v360
    %495 = vmatprep.subr.bf16.mxu0 %v355
    %496 = vmatpush1.bf16.msra.mxu0 %v354
    %497 = vmatprep.subr.bf16.mxu0 %v349
    %498 = vmatpush1.bf16.msra.mxu0 %v348
    %499 = vmatprep.subr.bf16.mxu0 %v343
    %500 = vmatpush1.bf16.msra.mxu0 %v342
    %501 = vmatprep.subr.bf16.mxu0 %v337
    %502 = vmatpush1.bf16.msra.mxu0 %v336
    %503 = vmatprep.subr.bf16.mxu0 %v331
    %504 = vmatpush1.bf16.msra.mxu0 %v330
    %505 = vmatprep.subr.bf16.mxu0 %v325
    %506 = vmatpush1.bf16.msra.mxu0 %v324
    %507 = vmatprep.subr.bf16.mxu0 0
    %508 = vmatpush2.bf16.msra.mxu0 0
    %509 = vmatprep.subr.bf16.mxu0 0
    %510 = vmatpush2.bf16.msra.mxu0 0
    %511 = vmatprep.subr.bf16.mxu0 0
    %512 = vmatpush2.bf16.msra.mxu0 0
    %513 = vmatprep.subr.bf16.mxu0 0
    %514 = vmatpush2.bf16.msra.mxu0 0
    %515 = vmatprep.subr.bf16.mxu0 0
    %516 = vmatpush2.bf16.msra.mxu0 0
    %517 = vmatprep.subr.bf16.mxu0 0
    %518 = vmatpush2.bf16.msra.mxu0 0
    %519 = vmatprep.subr.bf16.mxu0 0
    %520 = vmatpush2.bf16.msra.mxu0 0
    %521 = vmatprep.subr.bf16.mxu0 0
    %522 = vmatpush2.bf16.msra.mxu0 0
    %523 = vmatprep.mubr.bf16.mxu0 0
    %524 = vmatmul.mubr.bf16.gmra.mxu0 %v170
    %v525 = vpop.f32.mrf.mxu0
    %v526 = vadd.f32 %v135, %v525
    %v527 = vpop.f32.mrf.mxu0
    %v528 = vadd.f32 %v139, %v527
    %v529 = vpop.f32.mrf.mxu0
    %v530 = vadd.f32 %v135, %v529
    %v531 = vpop.f32.mrf.mxu0
    %v532 = vadd.f32 %v139, %v531
    %533 = vmatprep.mubr.bf16.mxu0 0
    %534 = vmatmul.mubr.bf16.gmra.mxu0 %v171
    %v535 = vpop.f32.mrf.mxu0
    %v536 = vadd.f32 %v135, %v535
    %v537 = vpop.f32.mrf.mxu0
    %v538 = vadd.f32 %v139, %v537
    %v539 = vpop.f32.mrf.mxu0
    %v540 = vadd.f32 %v135, %v539
    %v541 = vpop.f32.mrf.mxu0
    %v542 = vadd.f32 %v139, %v541
    %543 = vmatprep.mubr.bf16.mxu0 0
    %544 = vmatmul.mubr.bf16.gmra.mxu0 %v172
    %v545 = vpop.f32.mrf.mxu0
    %v546 = vadd.f32 %v135, %v545
    %v547 = vpop.f32.mrf.mxu0
    %v548 = vadd.f32 %v139, %v547
    %v549 = vpop.f32.mrf.mxu0
    %v550 = vadd.f32 %v135, %v549
    %v551 = vpop.f32.mrf.mxu0
    %v552 = vadd.f32 %v139, %v551
    %553 = vmatprep.mubr.bf16.mxu0 0
    %554 = vmatmul.mubr.bf16.gmra.mxu0 %v173
    %v555 = vpop.f32.mrf.mxu0
    %v556 = vadd.f32 %v135, %v555
    %v557 = vpop.f32.mrf.mxu0
    %v558 = vadd.f32 %v139, %v557
    %v559 = vpop.f32.mrf.mxu0
    %v560 = vadd.f32 %v135, %v559
    %v561 = vpop.f32.mrf.mxu0
    %v562 = vadd.f32 %v139, %v561
    %563 = vdwg.mxu0
    %564 = vmatprep.subr.bf16.mxu0 %v369
    %565 = vmatpush1.bf16.msra.mxu0 %v368
    %566 = vmatprep.subr.bf16.mxu0 %v363
    %567 = vmatpush1.bf16.msra.mxu0 %v362
    %568 = vmatprep.subr.bf16.mxu0 %v357
    %569 = vmatpush1.bf16.msra.mxu0 %v356
    %570 = vmatprep.subr.bf16.mxu0 %v351
    %571 = vmatpush1.bf16.msra.mxu0 %v350
    %572 = vmatprep.subr.bf16.mxu0 %v345
    %573 = vmatpush1.bf16.msra.mxu0 %v344
    %574 = vmatprep.subr.bf16.mxu0 %v339
    %575 = vmatpush1.bf16.msra.mxu0 %v338
    %576 = vmatprep.subr.bf16.mxu0 %v333
    %577 = vmatpush1.bf16.msra.mxu0 %v332
    %578 = vmatprep.subr.bf16.mxu0 %v327
    %579 = vmatpush1.bf16.msra.mxu0 %v326
    %580 = vmatprep.subr.bf16.mxu0 0
    %581 = vmatpush2.bf16.msra.mxu0 0
    %582 = vmatprep.subr.bf16.mxu0 0
    %583 = vmatpush2.bf16.msra.mxu0 0
    %584 = vmatprep.subr.bf16.mxu0 0
    %585 = vmatpush2.bf16.msra.mxu0 0
    %586 = vmatprep.subr.bf16.mxu0 0
    %587 = vmatpush2.bf16.msra.mxu0 0
    %588 = vmatprep.subr.bf16.mxu0 0
    %589 = vmatpush2.bf16.msra.mxu0 0
    %590 = vmatprep.subr.bf16.mxu0 0
    %591 = vmatpush2.bf16.msra.mxu0 0
    %592 = vmatprep.subr.bf16.mxu0 0
    %593 = vmatpush2.bf16.msra.mxu0 0
    %594 = vmatprep.subr.bf16.mxu0 0
    %595 = vmatpush2.bf16.msra.mxu0 0
    %596 = vmatprep.mubr.bf16.mxu0 0
    %597 = vmatmul.mubr.bf16.gmra.mxu0 %v170
    %v598 = vpop.f32.mrf.mxu0
    %v599 = vadd.f32 %v143, %v598
    %v600 = vpop.f32.mrf.mxu0
    %v601 = vadd.f32 %v147, %v600
    %v602 = vpop.f32.mrf.mxu0
    %v603 = vadd.f32 %v143, %v602
    %v604 = vpop.f32.mrf.mxu0
    %v605 = vadd.f32 %v147, %v604
    %606 = vmatprep.mubr.bf16.mxu0 0
    %607 = vmatmul.mubr.bf16.gmra.mxu0 %v171
    %v608 = vpop.f32.mrf.mxu0
    %v609 = vadd.f32 %v143, %v608
    %v610 = vpop.f32.mrf.mxu0
    %v611 = vadd.f32 %v147, %v610
    %v612 = vpop.f32.mrf.mxu0
    %v613 = vadd.f32 %v143, %v612
    %v614 = vpop.f32.mrf.mxu0
    %v615 = vadd.f32 %v147, %v614
    %616 = vmatprep.mubr.bf16.mxu0 0
    %617 = vmatmul.mubr.bf16.gmra.mxu0 %v172
    %v618 = vpop.f32.mrf.mxu0
    %v619 = vadd.f32 %v143, %v618
    %v620 = vpop.f32.mrf.mxu0
    %v621 = vadd.f32 %v147, %v620
    %v622 = vpop.f32.mrf.mxu0
    %v623 = vadd.f32 %v143, %v622
    %v624 = vpop.f32.mrf.mxu0
    %v625 = vadd.f32 %v147, %v624
    %626 = vmatprep.mubr.bf16.mxu0 0
    %627 = vmatmul.mubr.bf16.gmra.mxu0 %v173
    %v628 = vpop.f32.mrf.mxu0
    %v629 = vadd.f32 %v143, %v628
    %v630 = vpop.f32.mrf.mxu0
    %v631 = vadd.f32 %v147, %v630
    %v632 = vpop.f32.mrf.mxu0
    %v633 = vadd.f32 %v143, %v632
    %v634 = vpop.f32.mrf.mxu0
    %v635 = vadd.f32 %v147, %v634
    %636 = vdwg.mxu0
    %637 = vst [vmem:[#allocation2] sm:$0xff] %v453
    %638 = vst [vmem:[#allocation2 + $0x8] sm:$0xff] %v455
    %639 = vst [vmem:[#allocation2 + $0x10] sm:$0xff] %v526
    %640 = vst [vmem:[#allocation2 + $0x18] sm:$0xff] %v528
    %641 = vst [vmem:[#allocation2 + $0x20] sm:$0xff] %v599
    %642 = vst [vmem:[#allocation2 + $0x28] sm:$0xff] %v601
    %643 = vst [vmem:[#allocation2 + $0x30] sm:$0xff] %v457
    %644 = vst [vmem:[#allocation2 + $0x38] sm:$0xff] %v459
    %645 = vst [vmem:[#allocation2 + $0x40] sm:$0xff] %v530
    %646 = vst [vmem:[#allocation2 + $0x48] sm:$0xff] %v532
    %647 = vst [vmem:[#allocation2 + $0x50] sm:$0xff] %v603
    %648 = vst [vmem:[#allocation2 + $0x58] sm:$0xff] %v605
    %649 = vst [vmem:[#allocation2 + $0x60] sm:$0xff] %v463
    %650 = vst [vmem:[#allocation2 + $0x68] sm:$0xff] %v465
    %651 = vst [vmem:[#allocation2 + $0x70] sm:$0xff] %v536
    %652 = vst [vmem:[#allocation2 + $0x78] sm:$0xff] %v538
    %653 = vst [vmem:[#allocation2 + $0x80] sm:$0xff] %v609
    %654 = vst [vmem:[#allocation2 + $0x88] sm:$0xff] %v611
    %655 = vst [vmem:[#allocation2 + $0x90] sm:$0xff] %v467
    %656 = vst [vmem:[#allocation2 + $0x98] sm:$0xff] %v469
    %657 = vst [vmem:[#allocation2 + $0xa0] sm:$0xff] %v540
    %658 = vst [vmem:[#allocation2 + $0xa8] sm:$0xff] %v542
    %659 = vst [vmem:[#allocation2 + $0xb0] sm:$0xff] %v613
    %660 = vst [vmem:[#allocation2 + $0xb8] sm:$0xff] %v615
    %661 = vst [vmem:[#allocation2 + $0xc0] sm:$0xff] %v473
    %662 = vst [vmem:[#allocation2 + $0xc8] sm:$0xff] %v475
    %663 = vst [vmem:[#allocation2 + $0xd0] sm:$0xff] %v546
    %664 = vst [vmem:[#allocation2 + $0xd8] sm:$0xff] %v548
    %665 = vst [vmem:[#allocation2 + $0xe0] sm:$0xff] %v619
    %666 = vst [vmem:[#allocation2 + $0xe8] sm:$0xff] %v621
    %667 = vst [vmem:[#allocation2 + $0xf0] sm:$0xff] %v477
    %668 = vst [vmem:[#allocation2 + $0xf8] sm:$0xff] %v479
    %669 = vst [vmem:[#allocation2 + $0x100] sm:$0xff] %v550
    %670 = vst [vmem:[#allocation2 + $0x108] sm:$0xff] %v552
    %671 = vst [vmem:[#allocation2 + $0x110] sm:$0xff] %v623
    %672 = vst [vmem:[#allocation2 + $0x118] sm:$0xff] %v625
    %673 = vst [vmem:[#allocation2 + $0x120] sm:$0xff] %v483
    %674 = vst [vmem:[#allocation2 + $0x128] sm:$0xff] %v485
    %675 = vst [vmem:[#allocation2 + $0x130] sm:$0xff] %v556
    %676 = vst [vmem:[#allocation2 + $0x138] sm:$0xff] %v558
    %677 = vst [vmem:[#allocation2 + $0x140] sm:$0xff] %v629
    %678 = vst [vmem:[#allocation2 + $0x148] sm:$0xff] %v631
    %679 = vst [vmem:[#allocation2 + $0x150] sm:$0xff] %v487
    %680 = vst [vmem:[#allocation2 + $0x158] sm:$0xff] %v489
    %681 = vst [vmem:[#allocation2 + $0x160] sm:$0xff] %v560
    %682 = vst [vmem:[#allocation2 + $0x168] sm:$0xff] %v562
    %683 = vst [vmem:[#allocation2 + $0x170] sm:$0xff] %v633
    %684 = vst [vmem:[#allocation2 + $0x178] sm:$0xff] %v635
    %v685 = vld [vmem:[%s1] sm:$0xff]
    %686 = vset.pattern.permute.xlu0 0
    %687 = vperm.xlu0 %686, %v685
    %v688 = vpop.permute.xlu0 %687
    %v689 = vld [vmem:[%s5] sm:$0x1]
    %v691 = vlaneseq
    %v692 = vshrl.u32 %v691, 7
    %v693 = vsub.s32 0, %v692
    %v694 = vrot.slane %v689, %v693
    %v696 = vld [vmem:[%s5 + $0x1] sm:$0x1]
    %v698 = vlaneseq
    %v699 = vshrl.u32 %v698, 7
    %v700 = vsub.s32 0, %v699
    %v701 = vrot.slane %v696, %v700
    %v703 = vld [vmem:[#allocation7] sm:$0xff]
    %v704 = vld [vmem:[#allocation7 + $0x8] sm:$0xff]
    %v705 = vld [vmem:[#allocation7 + $0x10] sm:$0xff]
    %v706 = vld [vmem:[#allocation7 + $0x18] sm:$0xff]
    %v707 = vld [vmem:[#allocation7 + $0x20] sm:$0xff]
    %v708 = vld [vmem:[#allocation7 + $0x28] sm:$0xff]
    %v709 = vld [vmem:[#allocation7 + $0x30] sm:$0xff]
    %v710 = vld [vmem:[#allocation7 + $0x38] sm:$0xff]
    %v711 = vld [vmem:[#allocation7 + $0x40] sm:$0xff]
    %v712 = vld [vmem:[#allocation7 + $0x48] sm:$0xff]
    %v713 = vld [vmem:[#allocation7 + $0x50] sm:$0xff]
    %v714 = vld [vmem:[#allocation7 + $0x58] sm:$0xff]
    %v715 = vld [vmem:[#allocation7 + $0x60] sm:$0xff]
    %v716 = vld [vmem:[#allocation7 + $0x68] sm:$0xff]
    %v717 = vld [vmem:[#allocation7 + $0x70] sm:$0xff]
    %v718 = vld [vmem:[#allocation7 + $0x78] sm:$0xff]
    %v719 = vld [vmem:[#allocation7 + $0x80] sm:$0xff]
    %v720 = vld [vmem:[#allocation7 + $0x88] sm:$0xff]
    %v721 = vld [vmem:[#allocation7 + $0x90] sm:$0xff]
    %v722 = vld [vmem:[#allocation7 + $0x98] sm:$0xff]
    %v723 = vld [vmem:[#allocation7 + $0xa0] sm:$0xff]
    %v724 = vld [vmem:[#allocation7 + $0xa8] sm:$0xff]
    %v725 = vld [vmem:[#allocation7 + $0xb0] sm:$0xff]
    %v726 = vld [vmem:[#allocation7 + $0xb8] sm:$0xff]
    %v727 = vld [vmem:[#allocation7 + $0xc0] sm:$0xff]
    %v728 = vld [vmem:[#allocation7 + $0xc8] sm:$0xff]
    %v729 = vld [vmem:[#allocation7 + $0xd0] sm:$0xff]
    %v730 = vld [vmem:[#allocation7 + $0xd8] sm:$0xff]
    %v731 = vld [vmem:[#allocation7 + $0xe0] sm:$0xff]
    %v732 = vld [vmem:[#allocation7 + $0xe8] sm:$0xff]
    %v733 = vld [vmem:[#allocation7 + $0xf0] sm:$0xff]
    %v734 = vld [vmem:[#allocation7 + $0xf8] sm:$0xff]
    %v735 = vld [vmem:[#allocation7 + $0x100] sm:$0xff]
    %v736 = vld [vmem:[#allocation7 + $0x108] sm:$0xff]
    %v737 = vld [vmem:[#allocation7 + $0x110] sm:$0xff]
    %v738 = vld [vmem:[#allocation7 + $0x118] sm:$0xff]
    %v739 = vld [vmem:[#allocation7 + $0x120] sm:$0xff]
    %v740 = vld [vmem:[#allocation7 + $0x128] sm:$0xff]
    %v741 = vld [vmem:[#allocation7 + $0x130] sm:$0xff]
    %v742 = vld [vmem:[#allocation7 + $0x138] sm:$0xff]
    %v743 = vld [vmem:[#allocation7 + $0x140] sm:$0xff]
    %v744 = vld [vmem:[#allocation7 + $0x148] sm:$0xff]
    %v745 = vld [vmem:[#allocation7 + $0x150] sm:$0xff]
    %v746 = vld [vmem:[#allocation7 + $0x158] sm:$0xff]
    %v747 = vld [vmem:[#allocation7 + $0x160] sm:$0xff]
    %v748 = vld [vmem:[#allocation7 + $0x168] sm:$0xff]
    %v749 = vld [vmem:[#allocation7 + $0x170] sm:$0xff]
    %v750 = vld [vmem:[#allocation7 + $0x178] sm:$0xff]
    %v799 = vunpack.c.l.b16 %v703
    %v800 = vunpack.c.h.b16 %v703
    %v801 = vunpack.c.l.b16 %v704
    %v802 = vunpack.c.h.b16 %v704
    %v803 = vunpack.c.l.b16 %v705
    %v804 = vunpack.c.h.b16 %v705
    %v805 = vunpack.c.l.b16 %v706
    %v806 = vunpack.c.h.b16 %v706
    %v807 = vunpack.c.l.b16 %v707
    %v808 = vunpack.c.h.b16 %v707
    %v809 = vunpack.c.l.b16 %v708
    %v810 = vunpack.c.h.b16 %v708
    %v811 = vunpack.c.l.b16 %v709
    %v812 = vunpack.c.h.b16 %v709
    %v813 = vunpack.c.l.b16 %v710
    %v814 = vunpack.c.h.b16 %v710
    %v815 = vunpack.c.l.b16 %v711
    %v816 = vunpack.c.h.b16 %v711
    %v817 = vunpack.c.l.b16 %v712
    %v818 = vunpack.c.h.b16 %v712
    %v819 = vunpack.c.l.b16 %v713
    %v820 = vunpack.c.h.b16 %v713
    %v821 = vunpack.c.l.b16 %v714
    %v822 = vunpack.c.h.b16 %v714
    %v823 = vunpack.c.l.b16 %v715
    %v824 = vunpack.c.h.b16 %v715
    %v825 = vunpack.c.l.b16 %v716
    %v826 = vunpack.c.h.b16 %v716
    %v827 = vunpack.c.l.b16 %v717
    %v828 = vunpack.c.h.b16 %v717
    %v829 = vunpack.c.l.b16 %v718
    %v830 = vunpack.c.h.b16 %v718
    %v831 = vunpack.c.l.b16 %v719
    %v832 = vunpack.c.h.b16 %v719
    %v833 = vunpack.c.l.b16 %v720
    %v834 = vunpack.c.h.b16 %v720
    %v835 = vunpack.c.l.b16 %v721
    %v836 = vunpack.c.h.b16 %v721
    %v837 = vunpack.c.l.b16 %v722
    %v838 = vunpack.c.h.b16 %v722
    %v839 = vunpack.c.l.b16 %v723
    %v840 = vunpack.c.h.b16 %v723
    %v841 = vunpack.c.l.b16 %v724
    %v842 = vunpack.c.h.b16 %v724
    %v843 = vunpack.c.l.b16 %v725
    %v844 = vunpack.c.h.b16 %v725
    %v845 = vunpack.c.l.b16 %v726
    %v846 = vunpack.c.h.b16 %v726
    %v847 = vunpack.c.l.b16 %v727
    %v848 = vunpack.c.h.b16 %v727
    %v849 = vunpack.c.l.b16 %v728
    %v850 = vunpack.c.h.b16 %v728
    %v851 = vunpack.c.l.b16 %v729
    %v852 = vunpack.c.h.b16 %v729
    %v853 = vunpack.c.l.b16 %v730
    %v854 = vunpack.c.h.b16 %v730
    %v855 = vunpack.c.l.b16 %v731
    %v856 = vunpack.c.h.b16 %v731
    %v857 = vunpack.c.l.b16 %v732
    %v858 = vunpack.c.h.b16 %v732
    %v859 = vunpack.c.l.b16 %v733
    %v860 = vunpack.c.h.b16 %v733
    %v861 = vunpack.c.l.b16 %v734
    %v862 = vunpack.c.h.b16 %v734
    %v863 = vunpack.c.l.b16 %v735
    %v864 = vunpack.c.h.b16 %v735
    %v865 = vunpack.c.l.b16 %v736
    %v866 = vunpack.c.h.b16 %v736
    %v867 = vunpack.c.l.b16 %v737
    %v868 = vunpack.c.h.b16 %v737
    %v869 = vunpack.c.l.b16 %v738
    %v870 = vunpack.c.h.b16 %v738
    %v871 = vunpack.c.l.b16 %v739
    %v872 = vunpack.c.h.b16 %v739
    %v873 = vunpack.c.l.b16 %v740
    %v874 = vunpack.c.h.b16 %v740
    %v875 = vunpack.c.l.b16 %v741
    %v876 = vunpack.c.h.b16 %v741
    %v877 = vunpack.c.l.b16 %v742
    %v878 = vunpack.c.h.b16 %v742
    %v879 = vunpack.c.l.b16 %v743
    %v880 = vunpack.c.h.b16 %v743
    %v881 = vunpack.c.l.b16 %v744
    %v882 = vunpack.c.h.b16 %v744
    %v883 = vunpack.c.l.b16 %v745
    %v884 = vunpack.c.h.b16 %v745
    %v885 = vunpack.c.l.b16 %v746
    %v886 = vunpack.c.h.b16 %v746
    %v887 = vunpack.c.l.b16 %v747
    %v888 = vunpack.c.h.b16 %v747
    %v889 = vunpack.c.l.b16 %v748
    %v890 = vunpack.c.h.b16 %v748
    %v891 = vunpack.c.l.b16 %v749
    %v892 = vunpack.c.h.b16 %v749
    %v893 = vunpack.c.l.b16 %v750
    %v894 = vunpack.c.h.b16 %v750
    %v895 = vpack.c.b16 %v805, %v799
    %v896 = vpack.c.b16 %v806, %v800
    %v897 = vpack.c.b16 %v807, %v801
    %v898 = vpack.c.b16 %v808, %v802
    %v899 = vpack.c.b16 %v809, %v803
    %v900 = vpack.c.b16 %v810, %v804
    %v901 = vpack.c.b16 %v817, %v811
    %v902 = vpack.c.b16 %v818, %v812
    %v903 = vpack.c.b16 %v819, %v813
    %v904 = vpack.c.b16 %v820, %v814
    %v905 = vpack.c.b16 %v821, %v815
    %v906 = vpack.c.b16 %v822, %v816
    %v907 = vpack.c.b16 %v829, %v823
    %v908 = vpack.c.b16 %v830, %v824
    %v909 = vpack.c.b16 %v831, %v825
    %v910 = vpack.c.b16 %v832, %v826
    %v911 = vpack.c.b16 %v833, %v827
    %v912 = vpack.c.b16 %v834, %v828
    %v913 = vpack.c.b16 %v841, %v835
    %v914 = vpack.c.b16 %v842, %v836
    %v915 = vpack.c.b16 %v843, %v837
    %v916 = vpack.c.b16 %v844, %v838
    %v917 = vpack.c.b16 %v845, %v839
    %v918 = vpack.c.b16 %v846, %v840
    %v919 = vpack.c.b16 %v853, %v847
    %v920 = vpack.c.b16 %v854, %v848
    %v921 = vpack.c.b16 %v855, %v849
    %v922 = vpack.c.b16 %v856, %v850
    %v923 = vpack.c.b16 %v857, %v851
    %v924 = vpack.c.b16 %v858, %v852
    %v925 = vpack.c.b16 %v865, %v859
    %v926 = vpack.c.b16 %v866, %v860
    %v927 = vpack.c.b16 %v867, %v861
    %v928 = vpack.c.b16 %v868, %v862
    %v929 = vpack.c.b16 %v869, %v863
    %v930 = vpack.c.b16 %v870, %v864
    %v931 = vpack.c.b16 %v877, %v871
    %v932 = vpack.c.b16 %v878, %v872
    %v933 = vpack.c.b16 %v879, %v873
    %v934 = vpack.c.b16 %v880, %v874
    %v935 = vpack.c.b16 %v881, %v875
    %v936 = vpack.c.b16 %v882, %v876
    %v937 = vpack.c.b16 %v889, %v883
    %v938 = vpack.c.b16 %v890, %v884
    %v939 = vpack.c.b16 %v891, %v885
    %v940 = vpack.c.b16 %v892, %v886
    %v941 = vpack.c.b16 %v893, %v887
    %v942 = vpack.c.b16 %v894, %v888
    %991 = vmatprep.subr.bf16.mxu0 %v938
    %992 = vmatpush1.bf16.msra.mxu0 %v937
    %993 = vmatprep.subr.bf16.mxu0 %v932
    %994 = vmatpush1.bf16.msra.mxu0 %v931
    %995 = vmatprep.subr.bf16.mxu0 %v926
    %996 = vmatpush1.bf16.msra.mxu0 %v925
    %997 = vmatprep.subr.bf16.mxu0 %v920
    %998 = vmatpush1.bf16.msra.mxu0 %v919
    %999 = vmatprep.subr.bf16.mxu0 %v914
    %1000 = vmatpush1.bf16.msra.mxu0 %v913
    %1001 = vmatprep.subr.bf16.mxu0 %v908
    %1002 = vmatpush1.bf16.msra.mxu0 %v907
    %1003 = vmatprep.subr.bf16.mxu0 %v902
    %1004 = vmatpush1.bf16.msra.mxu0 %v901
    %1005 = vmatprep.subr.bf16.mxu0 %v896
    %1006 = vmatpush1.bf16.msra.mxu0 %v895
    %1007 = vmatprep.subr.bf16.mxu0 0
    %1008 = vmatpush2.bf16.msra.mxu0 0
    %1009 = vmatprep.subr.bf16.mxu0 0
    %1010 = vmatpush2.bf16.msra.mxu0 0
    %1011 = vmatprep.subr.bf16.mxu0 0
    %1012 = vmatpush2.bf16.msra.mxu0 0
    %1013 = vmatprep.subr.bf16.mxu0 0
    %1014 = vmatpush2.bf16.msra.mxu0 0
    %1015 = vmatprep.subr.bf16.mxu0 0
    %1016 = vmatpush2.bf16.msra.mxu0 0
    %1017 = vmatprep.subr.bf16.mxu0 0
    %1018 = vmatpush2.bf16.msra.mxu0 0
    %1019 = vmatprep.subr.bf16.mxu0 0
    %1020 = vmatpush2.bf16.msra.mxu0 0
    %1021 = vmatprep.subr.bf16.mxu0 0
    %1022 = vmatpush2.bf16.msra.mxu0 0
    %1023 = vmatprep.mubr.bf16.mxu0 0
    %1024 = vmatmul.mubr.bf16.gmra.mxu0 0
    %v1025 = vpop.f32.mrf.mxu0
    %v1026 = vadd.f32 0.0, %v1025
    %v1027 = vpop.f32.mrf.mxu0
    %v1028 = vadd.f32 0.0, %v1027
    %v1029 = vpop.f32.mrf.mxu0
    %v1030 = vpop.f32.mrf.mxu0
    %1031 = vdwg.mxu0
    %1032 = vmatprep.subr.bf16.mxu0 %v940
    %1033 = vmatpush1.bf16.msra.mxu0 %v939
    %1034 = vmatprep.subr.bf16.mxu0 %v934
    %1035 = vmatpush1.bf16.msra.mxu0 %v933
    %1036 = vmatprep.subr.bf16.mxu0 %v928
    %1037 = vmatpush1.bf16.msra.mxu0 %v927
    %1038 = vmatprep.subr.bf16.mxu0 %v922
    %1039 = vmatpush1.bf16.msra.mxu0 %v921
    %1040 = vmatprep.subr.bf16.mxu0 %v916
    %1041 = vmatpush1.bf16.msra.mxu0 %v915
    %1042 = vmatprep.subr.bf16.mxu0 %v910
    %1043 = vmatpush1.bf16.msra.mxu0 %v909
    %1044 = vmatprep.subr.bf16.mxu0 %v904
    %1045 = vmatpush1.bf16.msra.mxu0 %v903
    %1046 = vmatprep.subr.bf16.mxu0 %v898
    %1047 = vmatpush1.bf16.msra.mxu0 %v897
    %1048 = vmatprep.subr.bf16.mxu0 0
    %1049 = vmatpush2.bf16.msra.mxu0 0
    %1050 = vmatprep.subr.bf16.mxu0 0
    %1051 = vmatpush2.bf16.msra.mxu0 0
    %1052 = vmatprep.subr.bf16.mxu0 0
    %1053 = vmatpush2.bf16.msra.mxu0 0
    %1054 = vmatprep.subr.bf16.mxu0 0
    %1055 = vmatpush2.bf16.msra.mxu0 0
    %1056 = vmatprep.subr.bf16.mxu0 0
    %1057 = vmatpush2.bf16.msra.mxu0 0
    %1058 = vmatprep.subr.bf16.mxu0 0
    %1059 = vmatpush2.bf16.msra.mxu0 0
    %1060 = vmatprep.subr.bf16.mxu0 0
    %1061 = vmatpush2.bf16.msra.mxu0 0
    %1062 = vmatprep.subr.bf16.mxu0 0
    %1063 = vmatpush2.bf16.msra.mxu0 0
    %1064 = vmatprep.mubr.bf16.mxu0 0
    %1065 = vmatmul.mubr.bf16.gmra.mxu0 0
    %v1066 = vpop.f32.mrf.mxu0
    %v1067 = vadd.f32 0.0, %v1066
    %v1068 = vpop.f32.mrf.mxu0
    %v1069 = vpop.f32.mrf.mxu0
    %v1070 = vpop.f32.mrf.mxu0
    %v1071 = vadd.f32 0.0, %v1070
    %1072 = vdwg.mxu0
    %1073 = vmatprep.subr.bf16.mxu0 %v942
    %1074 = vmatpush1.bf16.msra.mxu0 %v941
    %1075 = vmatprep.subr.bf16.mxu0 %v936
    %1076 = vmatpush1.bf16.msra.mxu0 %v935
    %1077 = vmatprep.subr.bf16.mxu0 %v930
    %1078 = vmatpush1.bf16.msra.mxu0 %v929
    %1079 = vmatprep.subr.bf16.mxu0 %v924
    %1080 = vmatpush1.bf16.msra.mxu0 %v923
    %1081 = vmatprep.subr.bf16.mxu0 %v918
    %1082 = vmatpush1.bf16.msra.mxu0 %v917
    %1083 = vmatprep.subr.bf16.mxu0 %v912
    %1084 = vmatpush1.bf16.msra.mxu0 %v911
    %1085 = vmatprep.subr.bf16.mxu0 %v906
    %1086 = vmatpush1.bf16.msra.mxu0 %v905
    %1087 = vmatprep.subr.bf16.mxu0 %v900
    %1088 = vmatpush1.bf16.msra.mxu0 %v899
    %1089 = vmatprep.subr.bf16.mxu0 0
    %1090 = vmatpush2.bf16.msra.mxu0 0
    %1091 = vmatprep.subr.bf16.mxu0 0
    %1092 = vmatpush2.bf16.msra.mxu0 0
    %1093 = vmatprep.subr.bf16.mxu0 0
    %1094 = vmatpush2.bf16.msra.mxu0 0
    %1095 = vmatprep.subr.bf16.mxu0 0
    %1096 = vmatpush2.bf16.msra.mxu0 0
    %1097 = vmatprep.subr.bf16.mxu0 0
    %1098 = vmatpush2.bf16.msra.mxu0 0
    %1099 = vmatprep.subr.bf16.mxu0 0
    %1100 = vmatpush2.bf16.msra.mxu0 0
    %1101 = vmatprep.subr.bf16.mxu0 0
    %1102 = vmatpush2.bf16.msra.mxu0 0
    %1103 = vmatprep.subr.bf16.mxu0 0
    %1104 = vmatpush2.bf16.msra.mxu0 0
    %1105 = vmatprep.mubr.bf16.mxu0 0
    %1106 = vmatmul.mubr.bf16.gmra.mxu0 0
    %v1107 = vpop.f32.mrf.mxu0
    %v1108 = vpop.f32.mrf.mxu0
    %v1109 = vpop.f32.mrf.mxu0
    %v1110 = vadd.f32 0.0, %v1109
    %v1111 = vpop.f32.mrf.mxu0
    %v1112 = vadd.f32 0.0, %v1111
    %1113 = vdwg.mxu0
    %v1114 = vld [vmem:[#allocation2] sm:$0xff]
    %v1115 = vld [vmem:[#allocation2 + $0x8] sm:$0xff]
    %v1116 = vld [vmem:[#allocation2 + $0x10] sm:$0xff]
    %v1117 = vld [vmem:[#allocation2 + $0x168] sm:$0xff]
    %v1118 = vld [vmem:[#allocation2 + $0x170] sm:$0xff]
    %v1119 = vld [vmem:[#allocation2 + $0x178] sm:$0xff]
    %v1120 = vadd.f32 %v1114, %v1026
    %v1121 = vxor.u32 %v1120, 2147483648
    %v1122 = vmul.f32 %v1121, 1.442695
    %v1123 = vpow.pop %v1122
    %v1124 = vadd.f32 %v1123, 1.0
    %v1125 = vrcp.pop %v1124
    %v1126 = vmul.f32 1.0, %v1125
    %v1127 = vadd.f32 %v1115, %v1028
    %v1128 = vxor.u32 %v1127, 2147483648
    %v1129 = vmul.f32 %v1128, 1.442695
    %v1130 = vpow.pop %v1129
    %v1131 = vadd.f32 %v1130, 1.0
    %v1132 = vrcp.pop %v1131
    %v1133 = vmul.f32 1.0, %v1132
    %v1134 = vadd.f32 %v1067, %v694
    %v1135 = vmul.f32 %v1126, %v1134
    %v1136 = vadd.f32 %v1116, %v1135
    %v1137 = vtanh.pop %v1136
    %v1138 = vsub.f32 1.0, %v1133
    %v1139 = vmul.f32 %v1138, %v1137
    %v1140 = vmul.f32 %v1133, 0.0
    %v1141 = vadd.f32 %v1139, %v1140
    %v1142 = vadd.f32 %v1117, %v1071
    %v1143 = vxor.u32 %v1142, 2147483648
    %v1144 = vmul.f32 %v1143, 1.442695
    %v1145 = vpow.pop %v1144
    %v1146 = vadd.f32 %v1145, 1.0
    %v1147 = vrcp.pop %v1146
    %v1148 = vmul.f32 1.0, %v1147
    %v1149 = vadd.f32 %v1118, %v1110
    %v1150 = vxor.u32 %v1149, 2147483648
    %v1151 = vmul.f32 %v1150, 1.442695
    %v1152 = vpow.pop %v1151
    %v1153 = vadd.f32 %v1152, 1.0
    %v1154 = vrcp.pop %v1153
    %v1155 = vmul.f32 1.0, %v1154
    %v1156 = vadd.f32 %v1112, %v701
    %v1157 = vmul.f32 %v1148, %v1156
    %v1158 = vadd.f32 %v1119, %v1157
    %v1159 = vtanh.pop %v1158
    %v1160 = vsub.f32 1.0, %v1155
    %v1161 = vmul.f32 %v1160, %v1159
    %v1162 = vmul.f32 %v1155, 0.0
    %v1163 = vadd.f32 %v1161, %v1162
    %vm1164 = vcmp.gt.s32.totalorder %v688, 0
    %vm1165 = vcmp.gt.s32.totalorder %v688, 7
    %v1166 = vsel %vm1164, %v1141, 0.0
    %1167 = vst [vmem:[#allocation3] sm:$0xff] %v1166
    %v1168 = vsel %vm1165, %v1163, 0.0
    %1169 = vst [vmem:[#allocation3 + $0x78] sm:$0xff] %v1168
    %v1170 = vpack.c.bf16 %v1168, %v1166
    %v1171 = vld [vmem:[#allocation7] sm:$0xff]
    %v1172 = vld [vmem:[#allocation7 + $0x8] sm:$0xff]
    %v1173 = vld [vmem:[#allocation7 + $0x10] sm:$0xff]
    %v1174 = vld [vmem:[#allocation7 + $0x18] sm:$0xff]
    %v1175 = vld [vmem:[#allocation7 + $0x20] sm:$0xff]
    %v1176 = vld [vmem:[#allocation7 + $0x28] sm:$0xff]
    %v1177 = vld [vmem:[#allocation7 + $0x30] sm:$0xff]
    %v1178 = vld [vmem:[#allocation7 + $0x38] sm:$0xff]
    %v1179 = vld [vmem:[#allocation7 + $0x40] sm:$0xff]
    %v1180 = vld [vmem:[#allocation7 + $0x48] sm:$0xff]
    %v1181 = vld [vmem:[#allocation7 + $0x50] sm:$0xff]
    %v1182 = vld [vmem:[#allocation7 + $0x58] sm:$0xff]
    %v1183 = vld [vmem:[#allocation7 + $0x60] sm:$0xff]
    %v1184 = vld [vmem:[#allocation7 + $0x68] sm:$0xff]
    %v1185 = vld [vmem:[#allocation7 + $0x70] sm:$0xff]
    %v1186 = vld [vmem:[#allocation7 + $0x78] sm:$0xff]
    %v1187 = vld [vmem:[#allocation7 + $0x80] sm:$0xff]
    %v1188 = vld [vmem:[#allocation7 + $0x88] sm:$0xff]
    %v1189 = vld [vmem:[#allocation7 + $0x90] sm:$0xff]
    %v1190 = vld [vmem:[#allocation7 + $0x98] sm:$0xff]
    %v1191 = vld [vmem:[#allocation7 + $0xa0] sm:$0xff]
    %v1192 = vld [vmem:[#allocation7 + $0xa8] sm:$0xff]
    %v1193 = vld [vmem:[#allocation7 + $0xb0] sm:$0xff]
    %v1194 = vld [vmem:[#allocation7 + $0xb8] sm:$0xff]
    %v1195 = vld [vmem:[#allocation7 + $0xc0] sm:$0xff]
    %v1196 = vld [vmem:[#allocation7 + $0xc8] sm:$0xff]
    %v1197 = vld [vmem:[#allocation7 + $0xd0] sm:$0xff]
    %v1198 = vld [vmem:[#allocation7 + $0xd8] sm:$0xff]
    %v1199 = vld [vmem:[#allocation7 + $0xe0] sm:$0xff]
    %v1200 = vld [vmem:[#allocation7 + $0xe8] sm:$0xff]
    %v1201 = vld [vmem:[#allocation7 + $0xf0] sm:$0xff]
    %v1202 = vld [vmem:[#allocation7 + $0xf8] sm:$0xff]
    %v1203 = vld [vmem:[#allocation7 + $0x100] sm:$0xff]
    %v1204 = vld [vmem:[#allocation7 + $0x108] sm:$0xff]
    %v1205 = vld [vmem:[#allocation7 + $0x110] sm:$0xff]
    %v1206 = vld [vmem:[#allocation7 + $0x118] sm:$0xff]
    %v1207 = vld [vmem:[#allocation7 + $0x120] sm:$0xff]
    %v1208 = vld [vmem:[#allocation7 + $0x128] sm:$0xff]
    %v1209 = vld [vmem:[#allocation7 + $0x130] sm:$0xff]
    %v1210 = vld [vmem:[#allocation7 + $0x138] sm:$0xff]
    %v1211 = vld [vmem:[#allocation7 + $0x140] sm:$0xff]
    %v1212 = vld [vmem:[#allocation7 + $0x148] sm:$0xff]
    %v1213 = vld [vmem:[#allocation7 + $0x150] sm:$0xff]
    %v1214 = vld [vmem:[#allocation7 + $0x158] sm:$0xff]
    %v1215 = vld [vmem:[#allocation7 + $0x160] sm:$0xff]
    %v1216 = vld [vmem:[#allocation7 + $0x168] sm:$0xff]
    %v1217 = vld [vmem:[#allocation7 + $0x170] sm:$0xff]
    %v1218 = vld [vmem:[#allocation7 + $0x178] sm:$0xff]
    %v1267 = vunpack.c.l.b16 %v1171
    %v1268 = vunpack.c.h.b16 %v1171
    %v1269 = vunpack.c.l.b16 %v1172
    %v1270 = vunpack.c.h.b16 %v1172
    %v1271 = vunpack.c.l.b16 %v1173
    %v1272 = vunpack.c.h.b16 %v1173
    %v1273 = vunpack.c.l.b16 %v1174
    %v1274 = vunpack.c.h.b16 %v1174
    %v1275 = vunpack.c.l.b16 %v1175
    %v1276 = vunpack.c.h.b16 %v1175
    %v1277 = vunpack.c.l.b16 %v1176
    %v1278 = vunpack.c.h.b16 %v1176
    %v1279 = vunpack.c.l.b16 %v1177
    %v1280 = vunpack.c.h.b16 %v1177
    %v1281 = vunpack.c.l.b16 %v1178
    %v1282 = vunpack.c.h.b16 %v1178
    %v1283 = vunpack.c.l.b16 %v1179
    %v1284 = vunpack.c.h.b16 %v1179
    %v1285 = vunpack.c.l.b16 %v1180
    %v1286 = vunpack.c.h.b16 %v1180
    %v1287 = vunpack.c.l.b16 %v1181
    %v1288 = vunpack.c.h.b16 %v1181
    %v1289 = vunpack.c.l.b16 %v1182
    %v1290 = vunpack.c.h.b16 %v1182
    %v1291 = vunpack.c.l.b16 %v1183
    %v1292 = vunpack.c.h.b16 %v1183
    %v1293 = vunpack.c.l.b16 %v1184
    %v1294 = vunpack.c.h.b16 %v1184
    %v1295 = vunpack.c.l.b16 %v1185
    %v1296 = vunpack.c.h.b16 %v1185
    %v1297 = vunpack.c.l.b16 %v1186
    %v1298 = vunpack.c.h.b16 %v1186
    %v1299 = vunpack.c.l.b16 %v1187
    %v1300 = vunpack.c.h.b16 %v1187
    %v1301 = vunpack.c.l.b16 %v1188
    %v1302 = vunpack.c.h.b16 %v1188
    %v1303 = vunpack.c.l.b16 %v1189
    %v1304 = vunpack.c.h.b16 %v1189
    %v1305 = vunpack.c.l.b16 %v1190
    %v1306 = vunpack.c.h.b16 %v1190
    %v1307 = vunpack.c.l.b16 %v1191
    %v1308 = vunpack.c.h.b16 %v1191
    %v1309 = vunpack.c.l.b16 %v1192
    %v1310 = vunpack.c.h.b16 %v1192
    %v1311 = vunpack.c.l.b16 %v1193
    %v1312 = vunpack.c.h.b16 %v1193
    %v1313 = vunpack.c.l.b16 %v1194
    %v1314 = vunpack.c.h.b16 %v1194
    %v1315 = vunpack.c.l.b16 %v1195
    %v1316 = vunpack.c.h.b16 %v1195
    %v1317 = vunpack.c.l.b16 %v1196
    %v1318 = vunpack.c.h.b16 %v1196
    %v1319 = vunpack.c.l.b16 %v1197
    %v1320 = vunpack.c.h.b16 %v1197
    %v1321 = vunpack.c.l.b16 %v1198
    %v1322 = vunpack.c.h.b16 %v1198
    %v1323 = vunpack.c.l.b16 %v1199
    %v1324 = vunpack.c.h.b16 %v1199
    %v1325 = vunpack.c.l.b16 %v1200
    %v1326 = vunpack.c.h.b16 %v1200
    %v1327 = vunpack.c.l.b16 %v1201
    %v1328 = vunpack.c.h.b16 %v1201
    %v1329 = vunpack.c.l.b16 %v1202
    %v1330 = vunpack.c.h.b16 %v1202
    %v1331 = vunpack.c.l.b16 %v1203
    %v1332 = vunpack.c.h.b16 %v1203
    %v1333 = vunpack.c.l.b16 %v1204
    %v1334 = vunpack.c.h.b16 %v1204
    %v1335 = vunpack.c.l.b16 %v1205
    %v1336 = vunpack.c.h.b16 %v1205
    %v1337 = vunpack.c.l.b16 %v1206
    %v1338 = vunpack.c.h.b16 %v1206
    %v1339 = vunpack.c.l.b16 %v1207
    %v1340 = vunpack.c.h.b16 %v1207
    %v1341 = vunpack.c.l.b16 %v1208
    %v1342 = vunpack.c.h.b16 %v1208
    %v1343 = vunpack.c.l.b16 %v1209
    %v1344 = vunpack.c.h.b16 %v1209
    %v1345 = vunpack.c.l.b16 %v1210
    %v1346 = vunpack.c.h.b16 %v1210
    %v1347 = vunpack.c.l.b16 %v1211
    %v1348 = vunpack.c.h.b16 %v1211
    %v1349 = vunpack.c.l.b16 %v1212
    %v1350 = vunpack.c.h.b16 %v1212
    %v1351 = vunpack.c.l.b16 %v1213
    %v1352 = vunpack.c.h.b16 %v1213
    %v1353 = vunpack.c.l.b16 %v1214
    %v1354 = vunpack.c.h.b16 %v1214
    %v1355 = vunpack.c.l.b16 %v1215
    %v1356 = vunpack.c.h.b16 %v1215
    %v1357 = vunpack.c.l.b16 %v1216
    %v1358 = vunpack.c.h.b16 %v1216
    %v1359 = vunpack.c.l.b16 %v1217
    %v1360 = vunpack.c.h.b16 %v1217
    %v1361 = vunpack.c.l.b16 %v1218
    %v1362 = vunpack.c.h.b16 %v1218
    %v1363 = vpack.c.b16 %v1273, %v1267
    %v1364 = vpack.c.b16 %v1274, %v1268
    %v1365 = vpack.c.b16 %v1275, %v1269
    %v1366 = vpack.c.b16 %v1276, %v1270
    %v1367 = vpack.c.b16 %v1277, %v1271
    %v1368 = vpack.c.b16 %v1278, %v1272
    %v1369 = vpack.c.b16 %v1285, %v1279
    %v1370 = vpack.c.b16 %v1286, %v1280
    %v1371 = vpack.c.b16 %v1287, %v1281
    %v1372 = vpack.c.b16 %v1288, %v1282
    %v1373 = vpack.c.b16 %v1289, %v1283
    %v1374 = vpack.c.b16 %v1290, %v1284
    %v1375 = vpack.c.b16 %v1297, %v1291
    %v1376 = vpack.c.b16 %v1298, %v1292
    %v1377 = vpack.c.b16 %v1299, %v1293
    %v1378 = vpack.c.b16 %v1300, %v1294
    %v1379 = vpack.c.b16 %v1301, %v1295
    %v1380 = vpack.c.b16 %v1302, %v1296
    %v1381 = vpack.c.b16 %v1309, %v1303
    %v1382 = vpack.c.b16 %v1310, %v1304
    %v1383 = vpack.c.b16 %v1311, %v1305
    %v1384 = vpack.c.b16 %v1312, %v1306
    %v1385 = vpack.c.b16 %v1313, %v1307
    %v1386 = vpack.c.b16 %v1314, %v1308
    %v1387 = vpack.c.b16 %v1321, %v1315
    %v1388 = vpack.c.b16 %v1322, %v1316
    %v1389 = vpack.c.b16 %v1323, %v1317
    %v1390 = vpack.c.b16 %v1324, %v1318
    %v1391 = vpack.c.b16 %v1325, %v1319
    %v1392 = vpack.c.b16 %v1326, %v1320
    %v1393 = vpack.c.b16 %v1333, %v1327
    %v1394 = vpack.c.b16 %v1334, %v1328
    %v1395 = vpack.c.b16 %v1335, %v1329
    %v1396 = vpack.c.b16 %v1336, %v1330
    %v1397 = vpack.c.b16 %v1337, %v1331
    %v1398 = vpack.c.b16 %v1338, %v1332
    %v1399 = vpack.c.b16 %v1345, %v1339
    %v1400 = vpack.c.b16 %v1346, %v1340
    %v1401 = vpack.c.b16 %v1347, %v1341
    %v1402 = vpack.c.b16 %v1348, %v1342
    %v1403 = vpack.c.b16 %v1349, %v1343
    %v1404 = vpack.c.b16 %v1350, %v1344
    %v1405 = vpack.c.b16 %v1357, %v1351
    %v1406 = vpack.c.b16 %v1358, %v1352
    %v1407 = vpack.c.b16 %v1359, %v1353
    %v1408 = vpack.c.b16 %v1360, %v1354
    %v1409 = vpack.c.b16 %v1361, %v1355
    %v1410 = vpack.c.b16 %v1362, %v1356
    %1459 = vmatprep.subr.bf16.mxu0 %v1406
    %1460 = vmatpush1.bf16.msra.mxu0 %v1405
    %1461 = vmatprep.subr.bf16.mxu0 %v1400
    %1462 = vmatpush1.bf16.msra.mxu0 %v1399
    %1463 = vmatprep.subr.bf16.mxu0 %v1394
    %1464 = vmatpush1.bf16.msra.mxu0 %v1393
    %1465 = vmatprep.subr.bf16.mxu0 %v1388
    %1466 = vmatpush1.bf16.msra.mxu0 %v1387
    %1467 = vmatprep.subr.bf16.mxu0 %v1382
    %1468 = vmatpush1.bf16.msra.mxu0 %v1381
    %1469 = vmatprep.subr.bf16.mxu0 %v1376
    %1470 = vmatpush1.bf16.msra.mxu0 %v1375
    %1471 = vmatprep.subr.bf16.mxu0 %v1370
    %1472 = vmatpush1.bf16.msra.mxu0 %v1369
    %1473 = vmatprep.subr.bf16.mxu0 %v1364
    %1474 = vmatpush1.bf16.msra.mxu0 %v1363
    %1475 = vmatprep.subr.bf16.mxu0 0
    %1476 = vmatpush2.bf16.msra.mxu0 0
    %1477 = vmatprep.subr.bf16.mxu0 0
    %1478 = vmatpush2.bf16.msra.mxu0 0
    %1479 = vmatprep.subr.bf16.mxu0 0
    %1480 = vmatpush2.bf16.msra.mxu0 0
    %1481 = vmatprep.subr.bf16.mxu0 0
    %1482 = vmatpush2.bf16.msra.mxu0 0
    %1483 = vmatprep.subr.bf16.mxu0 0
    %1484 = vmatpush2.bf16.msra.mxu0 0
    %1485 = vmatprep.subr.bf16.mxu0 0
    %1486 = vmatpush2.bf16.msra.mxu0 0
    %1487 = vmatprep.subr.bf16.mxu0 0
    %1488 = vmatpush2.bf16.msra.mxu0 0
    %1489 = vmatprep.subr.bf16.mxu0 0
    %1490 = vmatpush2.bf16.msra.mxu0 0
    %1491 = vmatprep.mubr.bf16.mxu0 0
    %1492 = vmatmul.mubr.bf16.gmra.mxu0 %v1170
    %v1493 = vpop.f32.mrf.mxu0
    %v1494 = vadd.f32 0.0, %v1493
    %v1495 = vpop.f32.mrf.mxu0
    %v1496 = vadd.f32 0.0, %v1495
    %v1497 = vpop.f32.mrf.mxu0
    %v1498 = vpop.f32.mrf.mxu0
    %1499 = vdwg.mxu0
    %1500 = vmatprep.subr.bf16.mxu0 %v1408
    %1501 = vmatpush1.bf16.msra.mxu0 %v1407
    %1502 = vmatprep.subr.bf16.mxu0 %v1402
    %1503 = vmatpush1.bf16.msra.mxu0 %v1401
    %1504 = vmatprep.subr.bf16.mxu0 %v1396
    %1505 = vmatpush1.bf16.msra.mxu0 %v1395
    %1506 = vmatprep.subr.bf16.mxu0 %v1390
    %1507 = vmatpush1.bf16.msra.mxu0 %v1389
    %1508 = vmatprep.subr.bf16.mxu0 %v1384
    %1509 = vmatpush1.bf16.msra.mxu0 %v1383
    %1510 = vmatprep.subr.bf16.mxu0 %v1378
    %1511 = vmatpush1.bf16.msra.mxu0 %v1377
    %1512 = vmatprep.subr.bf16.mxu0 %v1372
    %1513 = vmatpush1.bf16.msra.mxu0 %v1371
    %1514 = vmatprep.subr.bf16.mxu0 %v1366
    %1515 = vmatpush1.bf16.msra.mxu0 %v1365
    %1516 = vmatprep.subr.bf16.mxu0 0
    %1517 = vmatpush2.bf16.msra.mxu0 0
    %1518 = vmatprep.subr.bf16.mxu0 0
    %1519 = vmatpush2.bf16.msra.mxu0 0
    %1520 = vmatprep.subr.bf16.mxu0 0
    %1521 = vmatpush2.bf16.msra.mxu0 0
    %1522 = vmatprep.subr.bf16.mxu0 0
    %1523 = vmatpush2.bf16.msra.mxu0 0
    %1524 = vmatprep.subr.bf16.mxu0 0
    %1525 = vmatpush2.bf16.msra.mxu0 0
    %1526 = vmatprep.subr.bf16.mxu0 0
    %1527 = vmatpush2.bf16.msra.mxu0 0
    %1528 = vmatprep.subr.bf16.mxu0 0
    %1529 = vmatpush2.bf16.msra.mxu0 0
    %1530 = vmatprep.subr.bf16.mxu0 0
    %1531 = vmatpush2.bf16.msra.mxu0 0
    %1532 = vmatprep.mubr.bf16.mxu0 0
    %1533 = vmatmul.mubr.bf16.gmra.mxu0 %v1170
    %v1534 = vpop.f32.mrf.mxu0
    %v1535 = vadd.f32 0.0, %v1534
    %v1536 = vpop.f32.mrf.mxu0
    %v1537 = vpop.f32.mrf.mxu0
    %v1538 = vpop.f32.mrf.mxu0
    %v1539 = vadd.f32 0.0, %v1538
    %1540 = vdwg.mxu0
    %1541 = vmatprep.subr.bf16.mxu0 %v1410
    %1542 = vmatpush1.bf16.msra.mxu0 %v1409
    %1543 = vmatprep.subr.bf16.mxu0 %v1404
    %1544 = vmatpush1.bf16.msra.mxu0 %v1403
    %1545 = vmatprep.subr.bf16.mxu0 %v1398
    %1546 = vmatpush1.bf16.msra.mxu0 %v1397
    %1547 = vmatprep.subr.bf16.mxu0 %v1392
    %1548 = vmatpush1.bf16.msra.mxu0 %v1391
    %1549 = vmatprep.subr.bf16.mxu0 %v1386
    %1550 = vmatpush1.bf16.msra.mxu0 %v1385
    %1551 = vmatprep.subr.bf16.mxu0 %v1380
    %1552 = vmatpush1.bf16.msra.mxu0 %v1379
    %1553 = vmatprep.subr.bf16.mxu0 %v1374
    %1554 = vmatpush1.bf16.msra.mxu0 %v1373
    %1555 = vmatprep.subr.bf16.mxu0 %v1368
    %1556 = vmatpush1.bf16.msra.mxu0 %v1367
    %1557 = vmatprep.subr.bf16.mxu0 0
    %1558 = vmatpush2.bf16.msra.mxu0 0
    %1559 = vmatprep.subr.bf16.mxu0 0
    %1560 = vmatpush2.bf16.msra.mxu0 0
    %1561 = vmatprep.subr.bf16.mxu0 0
    %1562 = vmatpush2.bf16.msra.mxu0 0
    %1563 = vmatprep.subr.bf16.mxu0 0
    %1564 = vmatpush2.bf16.msra.mxu0 0
    %1565 = vmatprep.subr.bf16.mxu0 0
    %1566 = vmatpush2.bf16.msra.mxu0 0
    %1567 = vmatprep.subr.bf16.mxu0 0
    %1568 = vmatpush2.bf16.msra.mxu0 0
    %1569 = vmatprep.subr.bf16.mxu0 0
    %1570 = vmatpush2.bf16.msra.mxu0 0
    %1571 = vmatprep.subr.bf16.mxu0 0
    %1572 = vmatpush2.bf16.msra.mxu0 0
    %1573 = vmatprep.mubr.bf16.mxu0 0
    %1574 = vmatmul.mubr.bf16.gmra.mxu0 %v1170
    %v1575 = vpop.f32.mrf.mxu0
    %v1576 = vpop.f32.mrf.mxu0
    %v1577 = vpop.f32.mrf.mxu0
    %v1578 = vadd.f32 0.0, %v1577
    %v1579 = vpop.f32.mrf.mxu0
    %v1580 = vadd.f32 0.0, %v1579
    %1581 = vdwg.mxu0
    %v1582 = vld [vmem:[#allocation2 + $0x30] sm:$0xff]
    %v1583 = vld [vmem:[#allocation2 + $0x38] sm:$0xff]
    %v1584 = vld [vmem:[#allocation2 + $0x40] sm:$0xff]
    %v1585 = vld [vmem:[#allocation2 + $0x138] sm:$0xff]
    %v1586 = vld [vmem:[#allocation2 + $0x140] sm:$0xff]
    %v1587 = vld [vmem:[#allocation2 + $0x148] sm:$0xff]
    %v1588 = vadd.f32 %v1582, %v1494
    %v1589 = vxor.u32 %v1588, 2147483648
    %v1590 = vmul.f32 %v1589, 1.442695
    %v1591 = vpow.pop %v1590
    %v1592 = vadd.f32 %v1591, 1.0
    %v1593 = vrcp.pop %v1592
    %v1594 = vmul.f32 1.0, %v1593
    %v1595 = vadd.f32 %v1583, %v1496
    %v1596 = vxor.u32 %v1595, 2147483648
    %v1597 = vmul.f32 %v1596, 1.442695
    %v1598 = vpow.pop %v1597
    %v1599 = vadd.f32 %v1598, 1.0
    %v1600 = vrcp.pop %v1599
    %v1601 = vmul.f32 1.0, %v1600
    %v1602 = vadd.f32 %v1535, %v694
    %v1603 = vmul.f32 %v1594, %v1602
    %v1604 = vadd.f32 %v1584, %v1603
    %v1605 = vtanh.pop %v1604
    %v1606 = vsub.f32 1.0, %v1601
    %v1607 = vmul.f32 %v1606, %v1605
    %v1608 = vmul.f32 %v1601, %v1166
    %v1609 = vadd.f32 %v1607, %v1608
    %v1610 = vadd.f32 %v1585, %v1539
    %v1611 = vxor.u32 %v1610, 2147483648
    %v1612 = vmul.f32 %v1611, 1.442695
    %v1613 = vpow.pop %v1612
    %v1614 = vadd.f32 %v1613, 1.0
    %v1615 = vrcp.pop %v1614
    %v1616 = vmul.f32 1.0, %v1615
    %v1617 = vadd.f32 %v1586, %v1578
    %v1618 = vxor.u32 %v1617, 2147483648
    %v1619 = vmul.f32 %v1618, 1.442695
    %v1620 = vpow.pop %v1619
    %v1621 = vadd.f32 %v1620, 1.0
    %v1622 = vrcp.pop %v1621
    %v1623 = vmul.f32 1.0, %v1622
    %v1624 = vadd.f32 %v1580, %v701
    %v1625 = vmul.f32 %v1616, %v1624
    %v1626 = vadd.f32 %v1587, %v1625
    %v1627 = vtanh.pop %v1626
    %v1628 = vsub.f32 1.0, %v1623
    %v1629 = vmul.f32 %v1628, %v1627
    %v1630 = vmul.f32 %v1623, %v1168
    %v1631 = vadd.f32 %v1629, %v1630
    %vm1632 = vcmp.gt.s32.totalorder %v688, 1
    %vm1633 = vcmp.gt.s32.totalorder %v688, 6
    %v1634 = vsel %vm1632, %v1609, 0.0
    %1635 = vst [vmem:[#allocation3 + $0x10] sm:$0xff] %v1634
    %v1636 = vsel %vm1633, %v1631, 0.0
    %1637 = vst [vmem:[#allocation3 + $0x68] sm:$0xff] %v1636
    %v1638 = vsel %vm1632, %v1609, %v1166
    %v1639 = vsel %vm1633, %v1631, %v1168
    %v1640 = vpack.c.bf16 %v1639, %v1638
    %v1641 = vld [vmem:[#allocation7] sm:$0xff]
    %v1642 = vld [vmem:[#allocation7 + $0x8] sm:$0xff]
    %v1643 = vld [vmem:[#allocation7 + $0x10] sm:$0xff]
    %v1644 = vld [vmem:[#allocation7 + $0x18] sm:$0xff]
    %v1645 = vld [vmem:[#allocation7 + $0x20] sm:$0xff]
    %v1646 = vld [vmem:[#allocation7 + $0x28] sm:$0xff]
    %v1647 = vld [vmem:[#allocation7 + $0x30] sm:$0xff]
    %v1648 = vld [vmem:[#allocation7 + $0x38] sm:$0xff]
    %v1649 = vld [vmem:[#allocation7 + $0x40] sm:$0xff]
    %v1650 = vld [vmem:[#allocation7 + $0x48] sm:$0xff]
    %v1651 = vld [vmem:[#allocation7 + $0x50] sm:$0xff]
    %v1652 = vld [vmem:[#allocation7 + $0x58] sm:$0xff]
    %v1653 = vld [vmem:[#allocation7 + $0x60] sm:$0xff]
    %v1654 = vld [vmem:[#allocation7 + $0x68] sm:$0xff]
    %v1655 = vld [vmem:[#allocation7 + $0x70] sm:$0xff]
    %v1656 = vld [vmem:[#allocation7 + $0x78] sm:$0xff]
    %v1657 = vld [vmem:[#allocation7 + $0x80] sm:$0xff]
    %v1658 = vld [vmem:[#allocation7 + $0x88] sm:$0xff]
    %v1659 = vld [vmem:[#allocation7 + $0x90] sm:$0xff]
    %v1660 = vld [vmem:[#allocation7 + $0x98] sm:$0xff]
    %v1661 = vld [vmem:[#allocation7 + $0xa0] sm:$0xff]
    %v1662 = vld [vmem:[#allocation7 + $0xa8] sm:$0xff]
    %v1663 = vld [vmem:[#allocation7 + $0xb0] sm:$0xff]
    %v1664 = vld [vmem:[#allocation7 + $0xb8] sm:$0xff]
    %v1665 = vld [vmem:[#allocation7 + $0xc0] sm:$0xff]
    %v1666 = vld [vmem:[#allocation7 + $0xc8] sm:$0xff]
    %v1667 = vld [vmem:[#allocation7 + $0xd0] sm:$0xff]
    %v1668 = vld [vmem:[#allocation7 + $0xd8] sm:$0xff]
    %v1669 = vld [vmem:[#allocation7 + $0xe0] sm:$0xff]
    %v1670 = vld [vmem:[#allocation7 + $0xe8] sm:$0xff]
    %v1671 = vld [vmem:[#allocation7 + $0xf0] sm:$0xff]
    %v1672 = vld [vmem:[#allocation7 + $0xf8] sm:$0xff]
    %v1673 = vld [vmem:[#allocation7 + $0x100] sm:$0xff]
    %v1674 = vld [vmem:[#allocation7 + $0x108] sm:$0xff]
    %v1675 = vld [vmem:[#allocation7 + $0x110] sm:$0xff]
    %v1676 = vld [vmem:[#allocation7 + $0x118] sm:$0xff]
    %v1677 = vld [vmem:[#allocation7 + $0x120] sm:$0xff]
    %v1678 = vld [vmem:[#allocation7 + $0x128] sm:$0xff]
    %v1679 = vld [vmem:[#allocation7 + $0x130] sm:$0xff]
    %v1680 = vld [vmem:[#allocation7 + $0x138] sm:$0xff]
    %v1681 = vld [vmem:[#allocation7 + $0x140] sm:$0xff]
    %v1682 = vld [vmem:[#allocation7 + $0x148] sm:$0xff]
    %v1683 = vld [vmem:[#allocation7 + $0x150] sm:$0xff]
    %v1684 = vld [vmem:[#allocation7 + $0x158] sm:$0xff]
    %v1685 = vld [vmem:[#allocation7 + $0x160] sm:$0xff]
    %v1686 = vld [vmem:[#allocation7 + $0x168] sm:$0xff]
    %v1687 = vld [vmem:[#allocation7 + $0x170] sm:$0xff]
    %v1688 = vld [vmem:[#allocation7 + $0x178] sm:$0xff]
    %v1737 = vunpack.c.l.b16 %v1641
    %v1738 = vunpack.c.h.b16 %v1641
    %v1739 = vunpack.c.l.b16 %v1642
    %v1740 = vunpack.c.h.b16 %v1642
    %v1741 = vunpack.c.l.b16 %v1643
    %v1742 = vunpack.c.h.b16 %v1643
    %v1743 = vunpack.c.l.b16 %v1644
    %v1744 = vunpack.c.h.b16 %v1644
    %v1745 = vunpack.c.l.b16 %v1645
    %v1746 = vunpack.c.h.b16 %v1645
    %v1747 = vunpack.c.l.b16 %v1646
    %v1748 = vunpack.c.h.b16 %v1646
    %v1749 = vunpack.c.l.b16 %v1647
    %v1750 = vunpack.c.h.b16 %v1647
    %v1751 = vunpack.c.l.b16 %v1648
    %v1752 = vunpack.c.h.b16 %v1648
    %v1753 = vunpack.c.l.b16 %v1649
    %v1754 = vunpack.c.h.b16 %v1649
    %v1755 = vunpack.c.l.b16 %v1650
    %v1756 = vunpack.c.h.b16 %v1650
    %v1757 = vunpack.c.l.b16 %v1651
    %v1758 = vunpack.c.h.b16 %v1651
    %v1759 = vunpack.c.l.b16 %v1652
    %v1760 = vunpack.c.h.b16 %v1652
    %v1761 = vunpack.c.l.b16 %v1653
    %v1762 = vunpack.c.h.b16 %v1653
    %v1763 = vunpack.c.l.b16 %v1654
    %v1764 = vunpack.c.h.b16 %v1654
    %v1765 = vunpack.c.l.b16 %v1655
    %v1766 = vunpack.c.h.b16 %v1655
    %v1767 = vunpack.c.l.b16 %v1656
    %v1768 = vunpack.c.h.b16 %v1656
    %v1769 = vunpack.c.l.b16 %v1657
    %v1770 = vunpack.c.h.b16 %v1657
    %v1771 = vunpack.c.l.b16 %v1658
    %v1772 = vunpack.c.h.b16 %v1658
    %v1773 = vunpack.c.l.b16 %v1659
    %v1774 = vunpack.c.h.b16 %v1659
    %v1775 = vunpack.c.l.b16 %v1660
    %v1776 = vunpack.c.h.b16 %v1660
    %v1777 = vunpack.c.l.b16 %v1661
    %v1778 = vunpack.c.h.b16 %v1661
    %v1779 = vunpack.c.l.b16 %v1662
    %v1780 = vunpack.c.h.b16 %v1662
    %v1781 = vunpack.c.l.b16 %v1663
    %v1782 = vunpack.c.h.b16 %v1663
    %v1783 = vunpack.c.l.b16 %v1664
    %v1784 = vunpack.c.h.b16 %v1664
    %v1785 = vunpack.c.l.b16 %v1665
    %v1786 = vunpack.c.h.b16 %v1665
    %v1787 = vunpack.c.l.b16 %v1666
    %v1788 = vunpack.c.h.b16 %v1666
    %v1789 = vunpack.c.l.b16 %v1667
    %v1790 = vunpack.c.h.b16 %v1667
    %v1791 = vunpack.c.l.b16 %v1668
    %v1792 = vunpack.c.h.b16 %v1668
    %v1793 = vunpack.c.l.b16 %v1669
    %v1794 = vunpack.c.h.b16 %v1669
    %v1795 = vunpack.c.l.b16 %v1670
    %v1796 = vunpack.c.h.b16 %v1670
    %v1797 = vunpack.c.l.b16 %v1671
    %v1798 = vunpack.c.h.b16 %v1671
    %v1799 = vunpack.c.l.b16 %v1672
    %v1800 = vunpack.c.h.b16 %v1672
    %v1801 = vunpack.c.l.b16 %v1673
    %v1802 = vunpack.c.h.b16 %v1673
    %v1803 = vunpack.c.l.b16 %v1674
    %v1804 = vunpack.c.h.b16 %v1674
    %v1805 = vunpack.c.l.b16 %v1675
    %v1806 = vunpack.c.h.b16 %v1675
    %v1807 = vunpack.c.l.b16 %v1676
    %v1808 = vunpack.c.h.b16 %v1676
    %v1809 = vunpack.c.l.b16 %v1677
    %v1810 = vunpack.c.h.b16 %v1677
    %v1811 = vunpack.c.l.b16 %v1678
    %v1812 = vunpack.c.h.b16 %v1678
    %v1813 = vunpack.c.l.b16 %v1679
    %v1814 = vunpack.c.h.b16 %v1679
    %v1815 = vunpack.c.l.b16 %v1680
    %v1816 = vunpack.c.h.b16 %v1680
    %v1817 = vunpack.c.l.b16 %v1681
    %v1818 = vunpack.c.h.b16 %v1681
    %v1819 = vunpack.c.l.b16 %v1682
    %v1820 = vunpack.c.h.b16 %v1682
    %v1821 = vunpack.c.l.b16 %v1683
    %v1822 = vunpack.c.h.b16 %v1683
    %v1823 = vunpack.c.l.b16 %v1684
    %v1824 = vunpack.c.h.b16 %v1684
    %v1825 = vunpack.c.l.b16 %v1685
    %v1826 = vunpack.c.h.b16 %v1685
    %v1827 = vunpack.c.l.b16 %v1686
    %v1828 = vunpack.c.h.b16 %v1686
    %v1829 = vunpack.c.l.b16 %v1687
    %v1830 = vunpack.c.h.b16 %v1687
    %v1831 = vunpack.c.l.b16 %v1688
    %v1832 = vunpack.c.h.b16 %v1688
    %v1833 = vpack.c.b16 %v1743, %v1737
    %v1834 = vpack.c.b16 %v1744, %v1738
    %v1835 = vpack.c.b16 %v1745, %v1739
    %v1836 = vpack.c.b16 %v1746, %v1740
    %v1837 = vpack.c.b16 %v1747, %v1741
    %v1838 = vpack.c.b16 %v1748, %v1742
    %v1839 = vpack.c.b16 %v1755, %v1749
    %v1840 = vpack.c.b16 %v1756, %v1750
    %v1841 = vpack.c.b16 %v1757, %v1751
    %v1842 = vpack.c.b16 %v1758, %v1752
    %v1843 = vpack.c.b16 %v1759, %v1753
    %v1844 = vpack.c.b16 %v1760, %v1754
    %v1845 = vpack.c.b16 %v1767, %v1761
    %v1846 = vpack.c.b16 %v1768, %v1762
    %v1847 = vpack.c.b16 %v1769, %v1763
    %v1848 = vpack.c.b16 %v1770, %v1764
    %v1849 = vpack.c.b16 %v1771, %v1765
    %v1850 = vpack.c.b16 %v1772, %v1766
    %v1851 = vpack.c.b16 %v1779, %v1773
    %v1852 = vpack.c.b16 %v1780, %v1774
    %v1853 = vpack.c.b16 %v1781, %v1775
    %v1854 = vpack.c.b16 %v1782, %v1776
    %v1855 = vpack.c.b16 %v1783, %v1777
    %v1856 = vpack.c.b16 %v1784, %v1778
    %v1857 = vpack.c.b16 %v1791, %v1785
    %v1858 = vpack.c.b16 %v1792, %v1786
    %v1859 = vpack.c.b16 %v1793, %v1787
    %v1860 = vpack.c.b16 %v1794, %v1788
    %v1861 = vpack.c.b16 %v1795, %v1789
    %v1862 = vpack.c.b16 %v1796, %v1790
    %v1863 = vpack.c.b16 %v1803, %v1797
    %v1864 = vpack.c.b16 %v1804, %v1798
    %v1865 = vpack.c.b16 %v1805, %v1799
    %v1866 = vpack.c.b16 %v1806, %v1800
    %v1867 = vpack.c.b16 %v1807, %v1801
    %v1868 = vpack.c.b16 %v1808, %v1802
    %v1869 = vpack.c.b16 %v1815, %v1809
    %v1870 = vpack.c.b16 %v1816, %v1810
    %v1871 = vpack.c.b16 %v1817, %v1811
    %v1872 = vpack.c.b16 %v1818, %v1812
    %v1873 = vpack.c.b16 %v1819, %v1813
    %v1874 = vpack.c.b16 %v1820, %v1814
    %v1875 = vpack.c.b16 %v1827, %v1821
    %v1876 = vpack.c.b16 %v1828, %v1822
    %v1877 = vpack.c.b16 %v1829, %v1823
    %v1878 = vpack.c.b16 %v1830, %v1824
    %v1879 = vpack.c.b16 %v1831, %v1825
    %v1880 = vpack.c.b16 %v1832, %v1826
    %1929 = vmatprep.subr.bf16.mxu0 %v1876
    %1930 = vmatpush1.bf16.msra.mxu0 %v1875
    %1931 = vmatprep.subr.bf16.mxu0 %v1870
    %1932 = vmatpush1.bf16.msra.mxu0 %v1869
    %1933 = vmatprep.subr.bf16.mxu0 %v1864
    %1934 = vmatpush1.bf16.msra.mxu0 %v1863
    %1935 = vmatprep.subr.bf16.mxu0 %v1858
    %1936 = vmatpush1.bf16.msra.mxu0 %v1857
    %1937 = vmatprep.subr.bf16.mxu0 %v1852
    %1938 = vmatpush1.bf16.msra.mxu0 %v1851
    %1939 = vmatprep.subr.bf16.mxu0 %v1846
    %1940 = vmatpush1.bf16.msra.mxu0 %v1845
    %1941 = vmatprep.subr.bf16.mxu0 %v1840
    %1942 = vmatpush1.bf16.msra.mxu0 %v1839
    %1943 = vmatprep.subr.bf16.mxu0 %v1834
    %1944 = vmatpush1.bf16.msra.mxu0 %v1833
    %1945 = vmatprep.subr.bf16.mxu0 0
    %1946 = vmatpush2.bf16.msra.mxu0 0
    %1947 = vmatprep.subr.bf16.mxu0 0
    %1948 = vmatpush2.bf16.msra.mxu0 0
    %1949 = vmatprep.subr.bf16.mxu0 0
    %1950 = vmatpush2.bf16.msra.mxu0 0
    %1951 = vmatprep.subr.bf16.mxu0 0
    %1952 = vmatpush2.bf16.msra.mxu0 0
    %1953 = vmatprep.subr.bf16.mxu0 0
    %1954 = vmatpush2.bf16.msra.mxu0 0
    %1955 = vmatprep.subr.bf16.mxu0 0
    %1956 = vmatpush2.bf16.msra.mxu0 0
    %1957 = vmatprep.subr.bf16.mxu0 0
    %1958 = vmatpush2.bf16.msra.mxu0 0
    %1959 = vmatprep.subr.bf16.mxu0 0
    %1960 = vmatpush2.bf16.msra.mxu0 0
    %1961 = vmatprep.mubr.bf16.mxu0 0
    %1962 = vmatmul.mubr.bf16.gmra.mxu0 %v1640
    %v1963 = vpop.f32.mrf.mxu0
    %v1964 = vadd.f32 0.0, %v1963
    %v1965 = vpop.f32.mrf.mxu0
    %v1966 = vadd.f32 0.0, %v1965
    %v1967 = vpop.f32.mrf.mxu0
    %v1968 = vpop.f32.mrf.mxu0
    %1969 = vdwg.mxu0
    %1970 = vmatprep.subr.bf16.mxu0 %v1878
    %1971 = vmatpush1.bf16.msra.mxu0 %v1877
    %1972 = vmatprep.subr.bf16.mxu0 %v1872
    %1973 = vmatpush1.bf16.msra.mxu0 %v1871
    %1974 = vmatprep.subr.bf16.mxu0 %v1866
    %1975 = vmatpush1.bf16.msra.mxu0 %v1865
    %1976 = vmatprep.subr.bf16.mxu0 %v1860
    %1977 = vmatpush1.bf16.msra.mxu0 %v1859
    %1978 = vmatprep.subr.bf16.mxu0 %v1854
    %1979 = vmatpush1.bf16.msra.mxu0 %v1853
    %1980 = vmatprep.subr.bf16.mxu0 %v1848
    %1981 = vmatpush1.bf16.msra.mxu0 %v1847
    %1982 = vmatprep.subr.bf16.mxu0 %v1842
    %1983 = vmatpush1.bf16.msra.mxu0 %v1841
    %1984 = vmatprep.subr.bf16.mxu0 %v1836
    %1985 = vmatpush1.bf16.msra.mxu0 %v1835
    %1986 = vmatprep.subr.bf16.mxu0 0
    %1987 = vmatpush2.bf16.msra.mxu0 0
    %1988 = vmatprep.subr.bf16.mxu0 0
    %1989 = vmatpush2.bf16.msra.mxu0 0
    %1990 = vmatprep.subr.bf16.mxu0 0
    %1991 = vmatpush2.bf16.msra.mxu0 0
    %1992 = vmatprep.subr.bf16.mxu0 0
    %1993 = vmatpush2.bf16.msra.mxu0 0
    %1994 = vmatprep.subr.bf16.mxu0 0
    %1995 = vmatpush2.bf16.msra.mxu0 0
    %1996 = vmatprep.subr.bf16.mxu0 0
    %1997 = vmatpush2.bf16.msra.mxu0 0
    %1998 = vmatprep.subr.bf16.mxu0 0
    %1999 = vmatpush2.bf16.msra.mxu0 0
    %2000 = vmatprep.subr.bf16.mxu0 0
    %2001 = vmatpush2.bf16.msra.mxu0 0
    %2002 = vmatprep.mubr.bf16.mxu0 0
    %2003 = vmatmul.mubr.bf16.gmra.mxu0 %v1640
    %v2004 = vpop.f32.mrf.mxu0
    %v2005 = vadd.f32 0.0, %v2004
    %v2006 = vpop.f32.mrf.mxu0
    %v2007 = vpop.f32.mrf.mxu0
    %v2008 = vpop.f32.mrf.mxu0
    %v2009 = vadd.f32 0.0, %v2008
    %2010 = vdwg.mxu0
    %2011 = vmatprep.subr.bf16.mxu0 %v1880
    %2012 = vmatpush1.bf16.msra.mxu0 %v1879
    %2013 = vmatprep.subr.bf16.mxu0 %v1874
    %2014 = vmatpush1.bf16.msra.mxu0 %v1873
    %2015 = vmatprep.subr.bf16.mxu0 %v1868
    %2016 = vmatpush1.bf16.msra.mxu0 %v1867
    %2017 = vmatprep.subr.bf16.mxu0 %v1862
    %2018 = vmatpush1.bf16.msra.mxu0 %v1861
    %2019 = vmatprep.subr.bf16.mxu0 %v1856
    %2020 = vmatpush1.bf16.msra.mxu0 %v1855
    %2021 = vmatprep.subr.bf16.mxu0 %v1850
    %2022 = vmatpush1.bf16.msra.mxu0 %v1849
    %2023 = vmatprep.subr.bf16.mxu0 %v1844
    %2024 = vmatpush1.bf16.msra.mxu0 %v1843
    %2025 = vmatprep.subr.bf16.mxu0 %v1838
    %2026 = vmatpush1.bf16.msra.mxu0 %v1837
    %2027 = vmatprep.subr.bf16.mxu0 0
    %2028 = vmatpush2.bf16.msra.mxu0 0
    %2029 = vmatprep.subr.bf16.mxu0 0
    %2030 = vmatpush2.bf16.msra.mxu0 0
    %2031 = vmatprep.subr.bf16.mxu0 0
    %2032 = vmatpush2.bf16.msra.mxu0 0
    %2033 = vmatprep.subr.bf16.mxu0 0
    %2034 = vmatpush2.bf16.msra.mxu0 0
    %2035 = vmatprep.subr.bf16.mxu0 0
    %2036 = vmatpush2.bf16.msra.mxu0 0
    %2037 = vmatprep.subr.bf16.mxu0 0
    %2038 = vmatpush2.bf16.msra.mxu0 0
    %2039 = vmatprep.subr.bf16.mxu0 0
    %2040 = vmatpush2.bf16.msra.mxu0 0
    %2041 = vmatprep.subr.bf16.mxu0 0
    %2042 = vmatpush2.bf16.msra.mxu0 0
    %2043 = vmatprep.mubr.bf16.mxu0 0
    %2044 = vmatmul.mubr.bf16.gmra.mxu0 %v1640
    %v2045 = vpop.f32.mrf.mxu0
    %v2046 = vpop.f32.mrf.mxu0
    %v2047 = vpop.f32.mrf.mxu0
    %v2048 = vadd.f32 0.0, %v2047
    %v2049 = vpop.f32.mrf.mxu0
    %v2050 = vadd.f32 0.0, %v2049
    %2051 = vdwg.mxu0
    %v2052 = vld [vmem:[#allocation2 + $0x60] sm:$0xff]
    %v2053 = vld [vmem:[#allocation2 + $0x68] sm:$0xff]
    %v2054 = vld [vmem:[#allocation2 + $0x70] sm:$0xff]
    %v2055 = vld [vmem:[#allocation2 + $0x108] sm:$0xff]
    %v2056 = vld [vmem:[#allocation2 + $0x110] sm:$0xff]
    %v2057 = vld [vmem:[#allocation2 + $0x118] sm:$0xff]
    %v2058 = vadd.f32 %v2052, %v1964
    %v2059 = vxor.u32 %v2058, 2147483648
    %v2060 = vmul.f32 %v2059, 1.442695
    %v2061 = vpow.pop %v2060
    %v2062 = vadd.f32 %v2061, 1.0
    %v2063 = vrcp.pop %v2062
    %v2064 = vmul.f32 1.0, %v2063
    %v2065 = vadd.f32 %v2053, %v1966
    %v2066 = vxor.u32 %v2065, 2147483648
    %v2067 = vmul.f32 %v2066, 1.442695
    %v2068 = vpow.pop %v2067
    %v2069 = vadd.f32 %v2068, 1.0
    %v2070 = vrcp.pop %v2069
    %v2071 = vmul.f32 1.0, %v2070
    %v2072 = vadd.f32 %v2005, %v694
    %v2073 = vmul.f32 %v2064, %v2072
    %v2074 = vadd.f32 %v2054, %v2073
    %v2075 = vtanh.pop %v2074
    %v2076 = vsub.f32 1.0, %v2071
    %v2077 = vmul.f32 %v2076, %v2075
    %v2078 = vmul.f32 %v2071, %v1638
    %v2079 = vadd.f32 %v2077, %v2078
    %v2080 = vadd.f32 %v2055, %v2009
    %v2081 = vxor.u32 %v2080, 2147483648
    %v2082 = vmul.f32 %v2081, 1.442695
    %v2083 = vpow.pop %v2082
    %v2084 = vadd.f32 %v2083, 1.0
    %v2085 = vrcp.pop %v2084
    %v2086 = vmul.f32 1.0, %v2085
    %v2087 = vadd.f32 %v2056, %v2048
    %v2088 = vxor.u32 %v2087, 2147483648
    %v2089 = vmul.f32 %v2088, 1.442695
    %v2090 = vpow.pop %v2089
    %v2091 = vadd.f32 %v2090, 1.0
    %v2092 = vrcp.pop %v2091
    %v2093 = vmul.f32 1.0, %v2092
    %v2094 = vadd.f32 %v2050, %v701
    %v2095 = vmul.f32 %v2086, %v2094
    %v2096 = vadd.f32 %v2057, %v2095
    %v2097 = vtanh.pop %v2096
    %v2098 = vsub.f32 1.0, %v2093
    %v2099 = vmul.f32 %v2098, %v2097
    %v2100 = vmul.f32 %v2093, %v1639
    %v2101 = vadd.f32 %v2099, %v2100
    %vm2102 = vcmp.gt.s32.totalorder %v688, 2
    %vm2103 = vcmp.gt.s32.totalorder %v688, 5
    %v2104 = vsel %vm2102, %v2079, 0.0
    %2105 = vst [vmem:[#allocation3 + $0x20] sm:$0xff] %v2104
    %v2106 = vsel %vm2103, %v2101, 0.0
    %2107 = vst [vmem:[#allocation3 + $0x58] sm:$0xff] %v2106
    %v2108 = vsel %vm2102, %v2079, %v1638
    %v2109 = vsel %vm2103, %v2101, %v1639
    %v2110 = vpack.c.bf16 %v2109, %v2108
    %v2111 = vld [vmem:[#allocation7] sm:$0xff]
    %v2112 = vld [vmem:[#allocation7 + $0x8] sm:$0xff]
    %v2113 = vld [vmem:[#allocation7 + $0x10] sm:$0xff]
    %v2114 = vld [vmem:[#allocation7 + $0x18] sm:$0xff]
    %v2115 = vld [vmem:[#allocation7 + $0x20] sm:$0xff]
    %v2116 = vld [vmem:[#allocation7 + $0x28] sm:$0xff]
    %v2117 = vld [vmem:[#allocation7 + $0x30] sm:$0xff]
    %v2118 = vld [vmem:[#allocation7 + $0x38] sm:$0xff]
    %v2119 = vld [vmem:[#allocation7 + $0x40] sm:$0xff]
    %v2120 = vld [vmem:[#allocation7 + $0x48] sm:$0xff]
    %v2121 = vld [vmem:[#allocation7 + $0x50] sm:$0xff]
    %v2122 = vld [vmem:[#allocation7 + $0x58] sm:$0xff]
    %v2123 = vld [vmem:[#allocation7 + $0x60] sm:$0xff]
    %v2124 = vld [vmem:[#allocation7 + $0x68] sm:$0xff]
    %v2125 = vld [vmem:[#allocation7 + $0x70] sm:$0xff]
    %v2126 = vld [vmem:[#allocation7 + $0x78] sm:$0xff]
    %v2127 = vld [vmem:[#allocation7 + $0x80] sm:$0xff]
    %v2128 = vld [vmem:[#allocation7 + $0x88] sm:$0xff]
    %v2129 = vld [vmem:[#allocation7 + $0x90] sm:$0xff]
    %v2130 = vld [vmem:[#allocation7 + $0x98] sm:$0xff]
    %v2131 = vld [vmem:[#allocation7 + $0xa0] sm:$0xff]
    %v2132 = vld [vmem:[#allocation7 + $0xa8] sm:$0xff]
    %v2133 = vld [vmem:[#allocation7 + $0xb0] sm:$0xff]
    %v2134 = vld [vmem:[#allocation7 + $0xb8] sm:$0xff]
    %v2135 = vld [vmem:[#allocation7 + $0xc0] sm:$0xff]
    %v2136 = vld [vmem:[#allocation7 + $0xc8] sm:$0xff]
    %v2137 = vld [vmem:[#allocation7 + $0xd0] sm:$0xff]
    %v2138 = vld [vmem:[#allocation7 + $0xd8] sm:$0xff]
    %v2139 = vld [vmem:[#allocation7 + $0xe0] sm:$0xff]
    %v2140 = vld [vmem:[#allocation7 + $0xe8] sm:$0xff]
    %v2141 = vld [vmem:[#allocation7 + $0xf0] sm:$0xff]
    %v2142 = vld [vmem:[#allocation7 + $0xf8] sm:$0xff]
    %v2143 = vld [vmem:[#allocation7 + $0x100] sm:$0xff]
    %v2144 = vld [vmem:[#allocation7 + $0x108] sm:$0xff]
    %v2145 = vld [vmem:[#allocation7 + $0x110] sm:$0xff]
    %v2146 = vld [vmem:[#allocation7 + $0x118] sm:$0xff]
    %v2147 = vld [vmem:[#allocation7 + $0x120] sm:$0xff]
    %v2148 = vld [vmem:[#allocation7 + $0x128] sm:$0xff]
    %v2149 = vld [vmem:[#allocation7 + $0x130] sm:$0xff]
    %v2150 = vld [vmem:[#allocation7 + $0x138] sm:$0xff]
    %v2151 = vld [vmem:[#allocation7 + $0x140] sm:$0xff]
    %v2152 = vld [vmem:[#allocation7 + $0x148] sm:$0xff]
    %v2153 = vld [vmem:[#allocation7 + $0x150] sm:$0xff]
    %v2154 = vld [vmem:[#allocation7 + $0x158] sm:$0xff]
    %v2155 = vld [vmem:[#allocation7 + $0x160] sm:$0xff]
    %v2156 = vld [vmem:[#allocation7 + $0x168] sm:$0xff]
    %v2157 = vld [vmem:[#allocation7 + $0x170] sm:$0xff]
    %v2158 = vld [vmem:[#allocation7 + $0x178] sm:$0xff]
    %v2207 = vunpack.c.l.b16 %v2111
    %v2208 = vunpack.c.h.b16 %v2111
    %v2209 = vunpack.c.l.b16 %v2112
    %v2210 = vunpack.c.h.b16 %v2112
    %v2211 = vunpack.c.l.b16 %v2113
    %v2212 = vunpack.c.h.b16 %v2113
    %v2213 = vunpack.c.l.b16 %v2114
    %v2214 = vunpack.c.h.b16 %v2114
    %v2215 = vunpack.c.l.b16 %v2115
    %v2216 = vunpack.c.h.b16 %v2115
    %v2217 = vunpack.c.l.b16 %v2116
    %v2218 = vunpack.c.h.b16 %v2116
    %v2219 = vunpack.c.l.b16 %v2117
    %v2220 = vunpack.c.h.b16 %v2117
    %v2221 = vunpack.c.l.b16 %v2118
    %v2222 = vunpack.c.h.b16 %v2118
    %v2223 = vunpack.c.l.b16 %v2119
    %v2224 = vunpack.c.h.b16 %v2119
    %v2225 = vunpack.c.l.b16 %v2120
    %v2226 = vunpack.c.h.b16 %v2120
    %v2227 = vunpack.c.l.b16 %v2121
    %v2228 = vunpack.c.h.b16 %v2121
    %v2229 = vunpack.c.l.b16 %v2122
    %v2230 = vunpack.c.h.b16 %v2122
    %v2231 = vunpack.c.l.b16 %v2123
    %v2232 = vunpack.c.h.b16 %v2123
    %v2233 = vunpack.c.l.b16 %v2124
    %v2234 = vunpack.c.h.b16 %v2124
    %v2235 = vunpack.c.l.b16 %v2125
    %v2236 = vunpack.c.h.b16 %v2125
    %v2237 = vunpack.c.l.b16 %v2126
    %v2238 = vunpack.c.h.b16 %v2126
    %v2239 = vunpack.c.l.b16 %v2127
    %v2240 = vunpack.c.h.b16 %v2127
    %v2241 = vunpack.c.l.b16 %v2128
    %v2242 = vunpack.c.h.b16 %v2128
    %v2243 = vunpack.c.l.b16 %v2129
    %v2244 = vunpack.c.h.b16 %v2129
    %v2245 = vunpack.c.l.b16 %v2130
    %v2246 = vunpack.c.h.b16 %v2130
    %v2247 = vunpack.c.l.b16 %v2131
    %v2248 = vunpack.c.h.b16 %v2131
    %v2249 = vunpack.c.l.b16 %v2132
    %v2250 = vunpack.c.h.b16 %v2132
    %v2251 = vunpack.c.l.b16 %v2133
    %v2252 = vunpack.c.h.b16 %v2133
    %v2253 = vunpack.c.l.b16 %v2134
    %v2254 = vunpack.c.h.b16 %v2134
    %v2255 = vunpack.c.l.b16 %v2135
    %v2256 = vunpack.c.h.b16 %v2135
    %v2257 = vunpack.c.l.b16 %v2136
    %v2258 = vunpack.c.h.b16 %v2136
    %v2259 = vunpack.c.l.b16 %v2137
    %v2260 = vunpack.c.h.b16 %v2137
    %v2261 = vunpack.c.l.b16 %v2138
    %v2262 = vunpack.c.h.b16 %v2138
    %v2263 = vunpack.c.l.b16 %v2139
    %v2264 = vunpack.c.h.b16 %v2139
    %v2265 = vunpack.c.l.b16 %v2140
    %v2266 = vunpack.c.h.b16 %v2140
    %v2267 = vunpack.c.l.b16 %v2141
    %v2268 = vunpack.c.h.b16 %v2141
    %v2269 = vunpack.c.l.b16 %v2142
    %v2270 = vunpack.c.h.b16 %v2142
    %v2271 = vunpack.c.l.b16 %v2143
    %v2272 = vunpack.c.h.b16 %v2143
    %v2273 = vunpack.c.l.b16 %v2144
    %v2274 = vunpack.c.h.b16 %v2144
    %v2275 = vunpack.c.l.b16 %v2145
    %v2276 = vunpack.c.h.b16 %v2145
    %v2277 = vunpack.c.l.b16 %v2146
    %v2278 = vunpack.c.h.b16 %v2146
    %v2279 = vunpack.c.l.b16 %v2147
    %v2280 = vunpack.c.h.b16 %v2147
    %v2281 = vunpack.c.l.b16 %v2148
    %v2282 = vunpack.c.h.b16 %v2148
    %v2283 = vunpack.c.l.b16 %v2149
    %v2284 = vunpack.c.h.b16 %v2149
    %v2285 = vunpack.c.l.b16 %v2150
    %v2286 = vunpack.c.h.b16 %v2150
    %v2287 = vunpack.c.l.b16 %v2151
    %v2288 = vunpack.c.h.b16 %v2151
    %v2289 = vunpack.c.l.b16 %v2152
    %v2290 = vunpack.c.h.b16 %v2152
    %v2291 = vunpack.c.l.b16 %v2153
    %v2292 = vunpack.c.h.b16 %v2153
    %v2293 = vunpack.c.l.b16 %v2154
    %v2294 = vunpack.c.h.b16 %v2154
    %v2295 = vunpack.c.l.b16 %v2155
    %v2296 = vunpack.c.h.b16 %v2155
    %v2297 = vunpack.c.l.b16 %v2156
    %v2298 = vunpack.c.h.b16 %v2156
    %v2299 = vunpack.c.l.b16 %v2157
    %v2300 = vunpack.c.h.b16 %v2157
    %v2301 = vunpack.c.l.b16 %v2158
    %v2302 = vunpack.c.h.b16 %v2158
    %v2303 = vpack.c.b16 %v2213, %v2207
    %v2304 = vpack.c.b16 %v2214, %v2208
    %v2305 = vpack.c.b16 %v2215, %v2209
    %v2306 = vpack.c.b16 %v2216, %v2210
    %v2307 = vpack.c.b16 %v2217, %v2211
    %v2308 = vpack.c.b16 %v2218, %v2212
    %v2309 = vpack.c.b16 %v2225, %v2219
    %v2310 = vpack.c.b16 %v2226, %v2220
    %v2311 = vpack.c.b16 %v2227, %v2221
    %v2312 = vpack.c.b16 %v2228, %v2222
    %v2313 = vpack.c.b16 %v2229, %v2223
    %v2314 = vpack.c.b16 %v2230, %v2224
    %v2315 = vpack.c.b16 %v2237, %v2231
    %v2316 = vpack.c.b16 %v2238, %v2232
    %v2317 = vpack.c.b16 %v2239, %v2233
    %v2318 = vpack.c.b16 %v2240, %v2234
    %v2319 = vpack.c.b16 %v2241, %v2235
    %v2320 = vpack.c.b16 %v2242, %v2236
    %v2321 = vpack.c.b16 %v2249, %v2243
    %v2322 = vpack.c.b16 %v2250, %v2244
    %v2323 = vpack.c.b16 %v2251, %v2245
    %v2324 = vpack.c.b16 %v2252, %v2246
    %v2325 = vpack.c.b16 %v2253, %v2247
    %v2326 = vpack.c.b16 %v2254, %v2248
    %v2327 = vpack.c.b16 %v2261, %v2255
    %v2328 = vpack.c.b16 %v2262, %v2256
    %v2329 = vpack.c.b16 %v2263, %v2257
    %v2330 = vpack.c.b16 %v2264, %v2258
    %v2331 = vpack.c.b16 %v2265, %v2259
    %v2332 = vpack.c.b16 %v2266, %v2260
    %v2333 = vpack.c.b16 %v2273, %v2267
    %v2334 = vpack.c.b16 %v2274, %v2268
    %v2335 = vpack.c.b16 %v2275, %v2269
    %v2336 = vpack.c.b16 %v2276, %v2270
    %v2337 = vpack.c.b16 %v2277, %v2271
    %v2338 = vpack.c.b16 %v2278, %v2272
    %v2339 = vpack.c.b16 %v2285, %v2279
    %v2340 = vpack.c.b16 %v2286, %v2280
    %v2341 = vpack.c.b16 %v2287, %v2281
    %v2342 = vpack.c.b16 %v2288, %v2282
    %v2343 = vpack.c.b16 %v2289, %v2283
    %v2344 = vpack.c.b16 %v2290, %v2284
    %v2345 = vpack.c.b16 %v2297, %v2291
    %v2346 = vpack.c.b16 %v2298, %v2292
    %v2347 = vpack.c.b16 %v2299, %v2293
    %v2348 = vpack.c.b16 %v2300, %v2294
    %v2349 = vpack.c.b16 %v2301, %v2295
    %v2350 = vpack.c.b16 %v2302, %v2296
    %2399 = vmatprep.subr.bf16.mxu0 %v2346
    %2400 = vmatpush1.bf16.msra.mxu0 %v2345
    %2401 = vmatprep.subr.bf16.mxu0 %v2340
    %2402 = vmatpush1.bf16.msra.mxu0 %v2339
    %2403 = vmatprep.subr.bf16.mxu0 %v2334
    %2404 = vmatpush1.bf16.msra.mxu0 %v2333
    %2405 = vmatprep.subr.bf16.mxu0 %v2328
    %2406 = vmatpush1.bf16.msra.mxu0 %v2327
    %2407 = vmatprep.subr.bf16.mxu0 %v2322
    %2408 = vmatpush1.bf16.msra.mxu0 %v2321
    %2409 = vmatprep.subr.bf16.mxu0 %v2316
    %2410 = vmatpush1.bf16.msra.mxu0 %v2315
    %2411 = vmatprep.subr.bf16.mxu0 %v2310
    %2412 = vmatpush1.bf16.msra.mxu0 %v2309
    %2413 = vmatprep.subr.bf16.mxu0 %v2304
    %2414 = vmatpush1.bf16.msra.mxu0 %v2303
    %2415 = vmatprep.subr.bf16.mxu0 0
    %2416 = vmatpush2.bf16.msra.mxu0 0
    %2417 = vmatprep.subr.bf16.mxu0 0
    %2418 = vmatpush2.bf16.msra.mxu0 0
    %2419 = vmatprep.subr.bf16.mxu0 0
    %2420 = vmatpush2.bf16.msra.mxu0 0
    %2421 = vmatprep.subr.bf16.mxu0 0
    %2422 = vmatpush2.bf16.msra.mxu0 0
    %2423 = vmatprep.subr.bf16.mxu0 0
    %2424 = vmatpush2.bf16.msra.mxu0 0
    %2425 = vmatprep.subr.bf16.mxu0 0
    %2426 = vmatpush2.bf16.msra.mxu0 0
    %2427 = vmatprep.subr.bf16.mxu0 0
    %2428 = vmatpush2.bf16.msra.mxu0 0
    %2429 = vmatprep.subr.bf16.mxu0 0
    %2430 = vmatpush2.bf16.msra.mxu0 0
    %2431 = vmatprep.mubr.bf16.mxu0 0
    %2432 = vmatmul.mubr.bf16.gmra.mxu0 %v2110
    %v2433 = vpop.f32.mrf.mxu0
    %v2434 = vadd.f32 0.0, %v2433
    %v2435 = vpop.f32.mrf.mxu0
    %v2436 = vadd.f32 0.0, %v2435
    %v2437 = vpop.f32.mrf.mxu0
    %v2438 = vpop.f32.mrf.mxu0
    %2439 = vdwg.mxu0
    %2440 = vmatprep.subr.bf16.mxu0 %v2348
    %2441 = vmatpush1.bf16.msra.mxu0 %v2347
    %2442 = vmatprep.subr.bf16.mxu0 %v2342
    %2443 = vmatpush1.bf16.msra.mxu0 %v2341
    %2444 = vmatprep.subr.bf16.mxu0 %v2336
    %2445 = vmatpush1.bf16.msra.mxu0 %v2335
    %2446 = vmatprep.subr.bf16.mxu0 %v2330
    %2447 = vmatpush1.bf16.msra.mxu0 %v2329
    %2448 = vmatprep.subr.bf16.mxu0 %v2324
    %2449 = vmatpush1.bf16.msra.mxu0 %v2323
    %2450 = vmatprep.subr.bf16.mxu0 %v2318
    %2451 = vmatpush1.bf16.msra.mxu0 %v2317
    %2452 = vmatprep.subr.bf16.mxu0 %v2312
    %2453 = vmatpush1.bf16.msra.mxu0 %v2311
    %2454 = vmatprep.subr.bf16.mxu0 %v2306
    %2455 = vmatpush1.bf16.msra.mxu0 %v2305
    %2456 = vmatprep.subr.bf16.mxu0 0
    %2457 = vmatpush2.bf16.msra.mxu0 0
    %2458 = vmatprep.subr.bf16.mxu0 0
    %2459 = vmatpush2.bf16.msra.mxu0 0
    %2460 = vmatprep.subr.bf16.mxu0 0
    %2461 = vmatpush2.bf16.msra.mxu0 0
    %2462 = vmatprep.subr.bf16.mxu0 0
    %2463 = vmatpush2.bf16.msra.mxu0 0
    %2464 = vmatprep.subr.bf16.mxu0 0
    %2465 = vmatpush2.bf16.msra.mxu0 0
    %2466 = vmatprep.subr.bf16.mxu0 0
    %2467 = vmatpush2.bf16.msra.mxu0 0
    %2468 = vmatprep.subr.bf16.mxu0 0
    %2469 = vmatpush2.bf16.msra.mxu0 0
    %2470 = vmatprep.subr.bf16.mxu0 0
    %2471 = vmatpush2.bf16.msra.mxu0 0
    %2472 = vmatprep.mubr.bf16.mxu0 0
    %2473 = vmatmul.mubr.bf16.gmra.mxu0 %v2110
    %v2474 = vpop.f32.mrf.mxu0
    %v2475 = vadd.f32 0.0, %v2474
    %v2476 = vpop.f32.mrf.mxu0
    %v2477 = vpop.f32.mrf.mxu0
    %v2478 = vpop.f32.mrf.mxu0
    %v2479 = vadd.f32 0.0, %v2478
    %2480 = vdwg.mxu0
    %2481 = vmatprep.subr.bf16.mxu0 %v2350
    %2482 = vmatpush1.bf16.msra.mxu0 %v2349
    %2483 = vmatprep.subr.bf16.mxu0 %v2344
    %2484 = vmatpush1.bf16.msra.mxu0 %v2343
    %2485 = vmatprep.subr.bf16.mxu0 %v2338
    %2486 = vmatpush1.bf16.msra.mxu0 %v2337
    %2487 = vmatprep.subr.bf16.mxu0 %v2332
    %2488 = vmatpush1.bf16.msra.mxu0 %v2331
    %2489 = vmatprep.subr.bf16.mxu0 %v2326
    %2490 = vmatpush1.bf16.msra.mxu0 %v2325
    %2491 = vmatprep.subr.bf16.mxu0 %v2320
    %2492 = vmatpush1.bf16.msra.mxu0 %v2319
    %2493 = vmatprep.subr.bf16.mxu0 %v2314
    %2494 = vmatpush1.bf16.msra.mxu0 %v2313
    %2495 = vmatprep.subr.bf16.mxu0 %v2308
    %2496 = vmatpush1.bf16.msra.mxu0 %v2307
    %2497 = vmatprep.subr.bf16.mxu0 0
    %2498 = vmatpush2.bf16.msra.mxu0 0
    %2499 = vmatprep.subr.bf16.mxu0 0
    %2500 = vmatpush2.bf16.msra.mxu0 0
    %2501 = vmatprep.subr.bf16.mxu0 0
    %2502 = vmatpush2.bf16.msra.mxu0 0
    %2503 = vmatprep.subr.bf16.mxu0 0
    %2504 = vmatpush2.bf16.msra.mxu0 0
    %2505 = vmatprep.subr.bf16.mxu0 0
    %2506 = vmatpush2.bf16.msra.mxu0 0
    %2507 = vmatprep.subr.bf16.mxu0 0
    %2508 = vmatpush2.bf16.msra.mxu0 0
    %2509 = vmatprep.subr.bf16.mxu0 0
    %2510 = vmatpush2.bf16.msra.mxu0 0
    %2511 = vmatprep.subr.bf16.mxu0 0
    %2512 = vmatpush2.bf16.msra.mxu0 0
    %2513 = vmatprep.mubr.bf16.mxu0 0
    %2514 = vmatmul.mubr.bf16.gmra.mxu0 %v2110
    %v2515 = vpop.f32.mrf.mxu0
    %v2516 = vpop.f32.mrf.mxu0
    %v2517 = vpop.f32.mrf.mxu0
    %v2518 = vadd.f32 0.0, %v2517
    %v2519 = vpop.f32.mrf.mxu0
    %v2520 = vadd.f32 0.0, %v2519
    %2521 = vdwg.mxu0
    %v2522 = vld [vmem:[#allocation2 + $0x90] sm:$0xff]
    %v2523 = vld [vmem:[#allocation2 + $0x98] sm:$0xff]
    %v2524 = vld [vmem:[#allocation2 + $0xa0] sm:$0xff]
    %v2525 = vld [vmem:[#allocation2 + $0xd8] sm:$0xff]
    %v2526 = vld [vmem:[#allocation2 + $0xe0] sm:$0xff]
    %v2527 = vld [vmem:[#allocation2 + $0xe8] sm:$0xff]
    %v2528 = vadd.f32 %v2522, %v2434
    %v2529 = vxor.u32 %v2528, 2147483648
    %v2530 = vmul.f32 %v2529, 1.442695
    %v2531 = vpow.pop %v2530
    %v2532 = vadd.f32 %v2531, 1.0
    %v2533 = vrcp.pop %v2532
    %v2534 = vmul.f32 1.0, %v2533
    %v2535 = vadd.f32 %v2523, %v2436
    %v2536 = vxor.u32 %v2535, 2147483648
    %v2537 = vmul.f32 %v2536, 1.442695
    %v2538 = vpow.pop %v2537
    %v2539 = vadd.f32 %v2538, 1.0
    %v2540 = vrcp.pop %v2539
    %v2541 = vmul.f32 1.0, %v2540
    %v2542 = vadd.f32 %v2475, %v694
    %v2543 = vmul.f32 %v2534, %v2542
    %v2544 = vadd.f32 %v2524, %v2543
    %v2545 = vtanh.pop %v2544
    %v2546 = vsub.f32 1.0, %v2541
    %v2547 = vmul.f32 %v2546, %v2545
    %v2548 = vmul.f32 %v2541, %v2108
    %v2549 = vadd.f32 %v2547, %v2548
    %v2550 = vadd.f32 %v2525, %v2479
    %v2551 = vxor.u32 %v2550, 2147483648
    %v2552 = vmul.f32 %v2551, 1.442695
    %v2553 = vpow.pop %v2552
    %v2554 = vadd.f32 %v2553, 1.0
    %v2555 = vrcp.pop %v2554
    %v2556 = vmul.f32 1.0, %v2555
    %v2557 = vadd.f32 %v2526, %v2518
    %v2558 = vxor.u32 %v2557, 2147483648
    %v2559 = vmul.f32 %v2558, 1.442695
    %v2560 = vpow.pop %v2559
    %v2561 = vadd.f32 %v2560, 1.0
    %v2562 = vrcp.pop %v2561
    %v2563 = vmul.f32 1.0, %v2562
    %v2564 = vadd.f32 %v2520, %v701
    %v2565 = vmul.f32 %v2556, %v2564
    %v2566 = vadd.f32 %v2527, %v2565
    %v2567 = vtanh.pop %v2566
    %v2568 = vsub.f32 1.0, %v2563
    %v2569 = vmul.f32 %v2568, %v2567
    %v2570 = vmul.f32 %v2563, %v2109
    %v2571 = vadd.f32 %v2569, %v2570
    %vm2572 = vcmp.gt.s32.totalorder %v688, 3
    %vm2573 = vcmp.gt.s32.totalorder %v688, 4
    %v2574 = vsel %vm2572, %v2549, 0.0
    %2575 = vst [vmem:[#allocation3 + $0x30] sm:$0xff] %v2574
    %v2576 = vsel %vm2573, %v2571, 0.0
    %2577 = vst [vmem:[#allocation3 + $0x48] sm:$0xff] %v2576
    %v2578 = vsel %vm2572, %v2549, %v2108
    %v2579 = vsel %vm2573, %v2571, %v2109
    %v2580 = vpack.c.bf16 %v2579, %v2578
    %v2581 = vld [vmem:[#allocation7] sm:$0xff]
    %v2582 = vld [vmem:[#allocation7 + $0x8] sm:$0xff]
    %v2583 = vld [vmem:[#allocation7 + $0x10] sm:$0xff]
    %v2584 = vld [vmem:[#allocation7 + $0x18] sm:$0xff]
    %v2585 = vld [vmem:[#allocation7 + $0x20] sm:$0xff]
    %v2586 = vld [vmem:[#allocation7 + $0x28] sm:$0xff]
    %v2587 = vld [vmem:[#allocation7 + $0x30] sm:$0xff]
    %v2588 = vld [vmem:[#allocation7 + $0x38] sm:$0xff]
    %v2589 = vld [vmem:[#allocation7 + $0x40] sm:$0xff]
    %v2590 = vld [vmem:[#allocation7 + $0x48] sm:$0xff]
    %v2591 = vld [vmem:[#allocation7 + $0x50] sm:$0xff]
    %v2592 = vld [vmem:[#allocation7 + $0x58] sm:$0xff]
    %v2593 = vld [vmem:[#allocation7 + $0x60] sm:$0xff]
    %v2594 = vld [vmem:[#allocation7 + $0x68] sm:$0xff]
    %v2595 = vld [vmem:[#allocation7 + $0x70] sm:$0xff]
    %v2596 = vld [vmem:[#allocation7 + $0x78] sm:$0xff]
    %v2597 = vld [vmem:[#allocation7 + $0x80] sm:$0xff]
    %v2598 = vld [vmem:[#allocation7 + $0x88] sm:$0xff]
    %v2599 = vld [vmem:[#allocation7 + $0x90] sm:$0xff]
    %v2600 = vld [vmem:[#allocation7 + $0x98] sm:$0xff]
    %v2601 = vld [vmem:[#allocation7 + $0xa0] sm:$0xff]
    %v2602 = vld [vmem:[#allocation7 + $0xa8] sm:$0xff]
    %v2603 = vld [vmem:[#allocation7 + $0xb0] sm:$0xff]
    %v2604 = vld [vmem:[#allocation7 + $0xb8] sm:$0xff]
    %v2605 = vld [vmem:[#allocation7 + $0xc0] sm:$0xff]
    %v2606 = vld [vmem:[#allocation7 + $0xc8] sm:$0xff]
    %v2607 = vld [vmem:[#allocation7 + $0xd0] sm:$0xff]
    %v2608 = vld [vmem:[#allocation7 + $0xd8] sm:$0xff]
    %v2609 = vld [vmem:[#allocation7 + $0xe0] sm:$0xff]
    %v2610 = vld [vmem:[#allocation7 + $0xe8] sm:$0xff]
    %v2611 = vld [vmem:[#allocation7 + $0xf0] sm:$0xff]
    %v2612 = vld [vmem:[#allocation7 + $0xf8] sm:$0xff]
    %v2613 = vld [vmem:[#allocation7 + $0x100] sm:$0xff]
    %v2614 = vld [vmem:[#allocation7 + $0x108] sm:$0xff]
    %v2615 = vld [vmem:[#allocation7 + $0x110] sm:$0xff]
    %v2616 = vld [vmem:[#allocation7 + $0x118] sm:$0xff]
    %v2617 = vld [vmem:[#allocation7 + $0x120] sm:$0xff]
    %v2618 = vld [vmem:[#allocation7 + $0x128] sm:$0xff]
    %v2619 = vld [vmem:[#allocation7 + $0x130] sm:$0xff]
    %v2620 = vld [vmem:[#allocation7 + $0x138] sm:$0xff]
    %v2621 = vld [vmem:[#allocation7 + $0x140] sm:$0xff]
    %v2622 = vld [vmem:[#allocation7 + $0x148] sm:$0xff]
    %v2623 = vld [vmem:[#allocation7 + $0x150] sm:$0xff]
    %v2624 = vld [vmem:[#allocation7 + $0x158] sm:$0xff]
    %v2625 = vld [vmem:[#allocation7 + $0x160] sm:$0xff]
    %v2626 = vld [vmem:[#allocation7 + $0x168] sm:$0xff]
    %v2627 = vld [vmem:[#allocation7 + $0x170] sm:$0xff]
    %v2628 = vld [vmem:[#allocation7 + $0x178] sm:$0xff]
    %v2677 = vunpack.c.l.b16 %v2581
    %v2678 = vunpack.c.h.b16 %v2581
    %v2679 = vunpack.c.l.b16 %v2582
    %v2680 = vunpack.c.h.b16 %v2582
    %v2681 = vunpack.c.l.b16 %v2583
    %v2682 = vunpack.c.h.b16 %v2583
    %v2683 = vunpack.c.l.b16 %v2584
    %v2684 = vunpack.c.h.b16 %v2584
    %v2685 = vunpack.c.l.b16 %v2585
    %v2686 = vunpack.c.h.b16 %v2585
    %v2687 = vunpack.c.l.b16 %v2586
    %v2688 = vunpack.c.h.b16 %v2586
    %v2689 = vunpack.c.l.b16 %v2587
    %v2690 = vunpack.c.h.b16 %v2587
    %v2691 = vunpack.c.l.b16 %v2588
    %v2692 = vunpack.c.h.b16 %v2588
    %v2693 = vunpack.c.l.b16 %v2589
    %v2694 = vunpack.c.h.b16 %v2589
    %v2695 = vunpack.c.l.b16 %v2590
    %v2696 = vunpack.c.h.b16 %v2590
    %v2697 = vunpack.c.l.b16 %v2591
    %v2698 = vunpack.c.h.b16 %v2591
    %v2699 = vunpack.c.l.b16 %v2592
    %v2700 = vunpack.c.h.b16 %v2592
    %v2701 = vunpack.c.l.b16 %v2593
    %v2702 = vunpack.c.h.b16 %v2593
    %v2703 = vunpack.c.l.b16 %v2594
    %v2704 = vunpack.c.h.b16 %v2594
    %v2705 = vunpack.c.l.b16 %v2595
    %v2706 = vunpack.c.h.b16 %v2595
    %v2707 = vunpack.c.l.b16 %v2596
    %v2708 = vunpack.c.h.b16 %v2596
    %v2709 = vunpack.c.l.b16 %v2597
    %v2710 = vunpack.c.h.b16 %v2597
    %v2711 = vunpack.c.l.b16 %v2598
    %v2712 = vunpack.c.h.b16 %v2598
    %v2713 = vunpack.c.l.b16 %v2599
    %v2714 = vunpack.c.h.b16 %v2599
    %v2715 = vunpack.c.l.b16 %v2600
    %v2716 = vunpack.c.h.b16 %v2600
    %v2717 = vunpack.c.l.b16 %v2601
    %v2718 = vunpack.c.h.b16 %v2601
    %v2719 = vunpack.c.l.b16 %v2602
    %v2720 = vunpack.c.h.b16 %v2602
    %v2721 = vunpack.c.l.b16 %v2603
    %v2722 = vunpack.c.h.b16 %v2603
    %v2723 = vunpack.c.l.b16 %v2604
    %v2724 = vunpack.c.h.b16 %v2604
    %v2725 = vunpack.c.l.b16 %v2605
    %v2726 = vunpack.c.h.b16 %v2605
    %v2727 = vunpack.c.l.b16 %v2606
    %v2728 = vunpack.c.h.b16 %v2606
    %v2729 = vunpack.c.l.b16 %v2607
    %v2730 = vunpack.c.h.b16 %v2607
    %v2731 = vunpack.c.l.b16 %v2608
    %v2732 = vunpack.c.h.b16 %v2608
    %v2733 = vunpack.c.l.b16 %v2609
    %v2734 = vunpack.c.h.b16 %v2609
    %v2735 = vunpack.c.l.b16 %v2610
    %v2736 = vunpack.c.h.b16 %v2610
    %v2737 = vunpack.c.l.b16 %v2611
    %v2738 = vunpack.c.h.b16 %v2611
    %v2739 = vunpack.c.l.b16 %v2612
    %v2740 = vunpack.c.h.b16 %v2612
    %v2741 = vunpack.c.l.b16 %v2613
    %v2742 = vunpack.c.h.b16 %v2613
    %v2743 = vunpack.c.l.b16 %v2614
    %v2744 = vunpack.c.h.b16 %v2614
    %v2745 = vunpack.c.l.b16 %v2615
    %v2746 = vunpack.c.h.b16 %v2615
    %v2747 = vunpack.c.l.b16 %v2616
    %v2748 = vunpack.c.h.b16 %v2616
    %v2749 = vunpack.c.l.b16 %v2617
    %v2750 = vunpack.c.h.b16 %v2617
    %v2751 = vunpack.c.l.b16 %v2618
    %v2752 = vunpack.c.h.b16 %v2618
    %v2753 = vunpack.c.l.b16 %v2619
    %v2754 = vunpack.c.h.b16 %v2619
    %v2755 = vunpack.c.l.b16 %v2620
    %v2756 = vunpack.c.h.b16 %v2620
    %v2757 = vunpack.c.l.b16 %v2621
    %v2758 = vunpack.c.h.b16 %v2621
    %v2759 = vunpack.c.l.b16 %v2622
    %v2760 = vunpack.c.h.b16 %v2622
    %v2761 = vunpack.c.l.b16 %v2623
    %v2762 = vunpack.c.h.b16 %v2623
    %v2763 = vunpack.c.l.b16 %v2624
    %v2764 = vunpack.c.h.b16 %v2624
    %v2765 = vunpack.c.l.b16 %v2625
    %v2766 = vunpack.c.h.b16 %v2625
    %v2767 = vunpack.c.l.b16 %v2626
    %v2768 = vunpack.c.h.b16 %v2626
    %v2769 = vunpack.c.l.b16 %v2627
    %v2770 = vunpack.c.h.b16 %v2627
    %v2771 = vunpack.c.l.b16 %v2628
    %v2772 = vunpack.c.h.b16 %v2628
    %v2773 = vpack.c.b16 %v2683, %v2677
    %v2774 = vpack.c.b16 %v2684, %v2678
    %v2775 = vpack.c.b16 %v2685, %v2679
    %v2776 = vpack.c.b16 %v2686, %v2680
    %v2777 = vpack.c.b16 %v2687, %v2681
    %v2778 = vpack.c.b16 %v2688, %v2682
    %v2779 = vpack.c.b16 %v2695, %v2689
    %v2780 = vpack.c.b16 %v2696, %v2690
    %v2781 = vpack.c.b16 %v2697, %v2691
    %v2782 = vpack.c.b16 %v2698, %v2692
    %v2783 = vpack.c.b16 %v2699, %v2693
    %v2784 = vpack.c.b16 %v2700, %v2694
    %v2785 = vpack.c.b16 %v2707, %v2701
    %v2786 = vpack.c.b16 %v2708, %v2702
    %v2787 = vpack.c.b16 %v2709, %v2703
    %v2788 = vpack.c.b16 %v2710, %v2704
    %v2789 = vpack.c.b16 %v2711, %v2705
    %v2790 = vpack.c.b16 %v2712, %v2706
    %v2791 = vpack.c.b16 %v2719, %v2713
    %v2792 = vpack.c.b16 %v2720, %v2714
    %v2793 = vpack.c.b16 %v2721, %v2715
    %v2794 = vpack.c.b16 %v2722, %v2716
    %v2795 = vpack.c.b16 %v2723, %v2717
    %v2796 = vpack.c.b16 %v2724, %v2718
    %v2797 = vpack.c.b16 %v2731, %v2725
    %v2798 = vpack.c.b16 %v2732, %v2726
    %v2799 = vpack.c.b16 %v2733, %v2727
    %v2800 = vpack.c.b16 %v2734, %v2728
    %v2801 = vpack.c.b16 %v2735, %v2729
    %v2802 = vpack.c.b16 %v2736, %v2730
    %v2803 = vpack.c.b16 %v2743, %v2737
    %v2804 = vpack.c.b16 %v2744, %v2738
    %v2805 = vpack.c.b16 %v2745, %v2739
    %v2806 = vpack.c.b16 %v2746, %v2740
    %v2807 = vpack.c.b16 %v2747, %v2741
    %v2808 = vpack.c.b16 %v2748, %v2742
    %v2809 = vpack.c.b16 %v2755, %v2749
    %v2810 = vpack.c.b16 %v2756, %v2750
    %v2811 = vpack.c.b16 %v2757, %v2751
    %v2812 = vpack.c.b16 %v2758, %v2752
    %v2813 = vpack.c.b16 %v2759, %v2753
    %v2814 = vpack.c.b16 %v2760, %v2754
    %v2815 = vpack.c.b16 %v2767, %v2761
    %v2816 = vpack.c.b16 %v2768, %v2762
    %v2817 = vpack.c.b16 %v2769, %v2763
    %v2818 = vpack.c.b16 %v2770, %v2764
    %v2819 = vpack.c.b16 %v2771, %v2765
    %v2820 = vpack.c.b16 %v2772, %v2766
    %2869 = vmatprep.subr.bf16.mxu0 %v2816
    %2870 = vmatpush1.bf16.msra.mxu0 %v2815
    %2871 = vmatprep.subr.bf16.mxu0 %v2810
    %2872 = vmatpush1.bf16.msra.mxu0 %v2809
    %2873 = vmatprep.subr.bf16.mxu0 %v2804
    %2874 = vmatpush1.bf16.msra.mxu0 %v2803
    %2875 = vmatprep.subr.bf16.mxu0 %v2798
    %2876 = vmatpush1.bf16.msra.mxu0 %v2797
    %2877 = vmatprep.subr.bf16.mxu0 %v2792
    %2878 = vmatpush1.bf16.msra.mxu0 %v2791
    %2879 = vmatprep.subr.bf16.mxu0 %v2786
    %2880 = vmatpush1.bf16.msra.mxu0 %v2785
    %2881 = vmatprep.subr.bf16.mxu0 %v2780
    %2882 = vmatpush1.bf16.msra.mxu0 %v2779
    %2883 = vmatprep.subr.bf16.mxu0 %v2774
    %2884 = vmatpush1.bf16.msra.mxu0 %v2773
    %2885 = vmatprep.subr.bf16.mxu0 0
    %2886 = vmatpush2.bf16.msra.mxu0 0
    %2887 = vmatprep.subr.bf16.mxu0 0
    %2888 = vmatpush2.bf16.msra.mxu0 0
    %2889 = vmatprep.subr.bf16.mxu0 0
    %2890 = vmatpush2.bf16.msra.mxu0 0
    %2891 = vmatprep.subr.bf16.mxu0 0
    %2892 = vmatpush2.bf16.msra.mxu0 0
    %2893 = vmatprep.subr.bf16.mxu0 0
    %2894 = vmatpush2.bf16.msra.mxu0 0
    %2895 = vmatprep.subr.bf16.mxu0 0
    %2896 = vmatpush2.bf16.msra.mxu0 0
    %2897 = vmatprep.subr.bf16.mxu0 0
    %2898 = vmatpush2.bf16.msra.mxu0 0
    %2899 = vmatprep.subr.bf16.mxu0 0
    %2900 = vmatpush2.bf16.msra.mxu0 0
    %2901 = vmatprep.mubr.bf16.mxu0 0
    %2902 = vmatmul.mubr.bf16.gmra.mxu0 %v2580
    %v2903 = vpop.f32.mrf.mxu0
    %v2904 = vadd.f32 0.0, %v2903
    %v2905 = vpop.f32.mrf.mxu0
    %v2906 = vadd.f32 0.0, %v2905
    %v2907 = vpop.f32.mrf.mxu0
    %v2908 = vpop.f32.mrf.mxu0
    %2909 = vdwg.mxu0
    %2910 = vmatprep.subr.bf16.mxu0 %v2818
    %2911 = vmatpush1.bf16.msra.mxu0 %v2817
    %2912 = vmatprep.subr.bf16.mxu0 %v2812
    %2913 = vmatpush1.bf16.msra.mxu0 %v2811
    %2914 = vmatprep.subr.bf16.mxu0 %v2806
    %2915 = vmatpush1.bf16.msra.mxu0 %v2805
    %2916 = vmatprep.subr.bf16.mxu0 %v2800
    %2917 = vmatpush1.bf16.msra.mxu0 %v2799
    %2918 = vmatprep.subr.bf16.mxu0 %v2794
    %2919 = vmatpush1.bf16.msra.mxu0 %v2793
    %2920 = vmatprep.subr.bf16.mxu0 %v2788
    %2921 = vmatpush1.bf16.msra.mxu0 %v2787
    %2922 = vmatprep.subr.bf16.mxu0 %v2782
    %2923 = vmatpush1.bf16.msra.mxu0 %v2781
    %2924 = vmatprep.subr.bf16.mxu0 %v2776
    %2925 = vmatpush1.bf16.msra.mxu0 %v2775
    %2926 = vmatprep.subr.bf16.mxu0 0
    %2927 = vmatpush2.bf16.msra.mxu0 0
    %2928 = vmatprep.subr.bf16.mxu0 0
    %2929 = vmatpush2.bf16.msra.mxu0 0
    %2930 = vmatprep.subr.bf16.mxu0 0
    %2931 = vmatpush2.bf16.msra.mxu0 0
    %2932 = vmatprep.subr.bf16.mxu0 0
    %2933 = vmatpush2.bf16.msra.mxu0 0
    %2934 = vmatprep.subr.bf16.mxu0 0
    %2935 = vmatpush2.bf16.msra.mxu0 0
    %2936 = vmatprep.subr.bf16.mxu0 0
    %2937 = vmatpush2.bf16.msra.mxu0 0
    %2938 = vmatprep.subr.bf16.mxu0 0
    %2939 = vmatpush2.bf16.msra.mxu0 0
    %2940 = vmatprep.subr.bf16.mxu0 0
    %2941 = vmatpush2.bf16.msra.mxu0 0
    %2942 = vmatprep.mubr.bf16.mxu0 0
    %2943 = vmatmul.mubr.bf16.gmra.mxu0 %v2580
    %v2944 = vpop.f32.mrf.mxu0
    %v2945 = vadd.f32 0.0, %v2944
    %v2946 = vpop.f32.mrf.mxu0
    %v2947 = vpop.f32.mrf.mxu0
    %v2948 = vpop.f32.mrf.mxu0
    %v2949 = vadd.f32 0.0, %v2948
    %2950 = vdwg.mxu0
    %2951 = vmatprep.subr.bf16.mxu0 %v2820
    %2952 = vmatpush1.bf16.msra.mxu0 %v2819
    %2953 = vmatprep.subr.bf16.mxu0 %v2814
    %2954 = vmatpush1.bf16.msra.mxu0 %v2813
    %2955 = vmatprep.subr.bf16.mxu0 %v2808
    %2956 = vmatpush1.bf16.msra.mxu0 %v2807
    %2957 = vmatprep.subr.bf16.mxu0 %v2802
    %2958 = vmatpush1.bf16.msra.mxu0 %v2801
    %2959 = vmatprep.subr.bf16.mxu0 %v2796
    %2960 = vmatpush1.bf16.msra.mxu0 %v2795
    %2961 = vmatprep.subr.bf16.mxu0 %v2790
    %2962 = vmatpush1.bf16.msra.mxu0 %v2789
    %2963 = vmatprep.subr.bf16.mxu0 %v2784
    %2964 = vmatpush1.bf16.msra.mxu0 %v2783
    %2965 = vmatprep.subr.bf16.mxu0 %v2778
    %2966 = vmatpush1.bf16.msra.mxu0 %v2777
    %2967 = vmatprep.subr.bf16.mxu0 0
    %2968 = vmatpush2.bf16.msra.mxu0 0
    %2969 = vmatprep.subr.bf16.mxu0 0
    %2970 = vmatpush2.bf16.msra.mxu0 0
    %2971 = vmatprep.subr.bf16.mxu0 0
    %2972 = vmatpush2.bf16.msra.mxu0 0
    %2973 = vmatprep.subr.bf16.mxu0 0
    %2974 = vmatpush2.bf16.msra.mxu0 0
    %2975 = vmatprep.subr.bf16.mxu0 0
    %2976 = vmatpush2.bf16.msra.mxu0 0
    %2977 = vmatprep.subr.bf16.mxu0 0
    %2978 = vmatpush2.bf16.msra.mxu0 0
    %2979 = vmatprep.subr.bf16.mxu0 0
    %2980 = vmatpush2.bf16.msra.mxu0 0
    %2981 = vmatprep.subr.bf16.mxu0 0
    %2982 = vmatpush2.bf16.msra.mxu0 0
    %2983 = vmatprep.mubr.bf16.mxu0 0
    %2984 = vmatmul.mubr.bf16.gmra.mxu0 %v2580
    %v2985 = vpop.f32.mrf.mxu0
    %v2986 = vpop.f32.mrf.mxu0
    %v2987 = vpop.f32.mrf.mxu0
    %v2988 = vadd.f32 0.0, %v2987
    %v2989 = vpop.f32.mrf.mxu0
    %v2990 = vadd.f32 0.0, %v2989
    %2991 = vdwg.mxu0
    %v2992 = vld [vmem:[#allocation2 + $0xc0] sm:$0xff]
    %v2993 = vld [vmem:[#allocation2 + $0xc8] sm:$0xff]
    %v2994 = vld [vmem:[#allocation2 + $0xd0] sm:$0xff]
    %v2995 = vld [vmem:[#allocation2 + $0xa8] sm:$0xff]
    %v2996 = vld [vmem:[#allocation2 + $0xb0] sm:$0xff]
    %v2997 = vld [vmem:[#allocation2 + $0xb8] sm:$0xff]
    %v2998 = vadd.f32 %v2992, %v2904
    %v2999 = vxor.u32 %v2998, 2147483648
    %v3000 = vmul.f32 %v2999, 1.442695
    %v3001 = vpow.pop %v3000
    %v3002 = vadd.f32 %v3001, 1.0
    %v3003 = vrcp.pop %v3002
    %v3004 = vmul.f32 1.0, %v3003
    %v3005 = vadd.f32 %v2993, %v2906
    %v3006 = vxor.u32 %v3005, 2147483648
    %v3007 = vmul.f32 %v3006, 1.442695
    %v3008 = vpow.pop %v3007
    %v3009 = vadd.f32 %v3008, 1.0
    %v3010 = vrcp.pop %v3009
    %v3011 = vmul.f32 1.0, %v3010
    %v3012 = vadd.f32 %v2945, %v694
    %v3013 = vmul.f32 %v3004, %v3012
    %v3014 = vadd.f32 %v2994, %v3013
    %v3015 = vtanh.pop %v3014
    %v3016 = vsub.f32 1.0, %v3011
    %v3017 = vmul.f32 %v3016, %v3015
    %v3018 = vmul.f32 %v3011, %v2578
    %v3019 = vadd.f32 %v3017, %v3018
    %v3020 = vadd.f32 %v2995, %v2949
    %v3021 = vxor.u32 %v3020, 2147483648
    %v3022 = vmul.f32 %v3021, 1.442695
    %v3023 = vpow.pop %v3022
    %v3024 = vadd.f32 %v3023, 1.0
    %v3025 = vrcp.pop %v3024
    %v3026 = vmul.f32 1.0, %v3025
    %v3027 = vadd.f32 %v2996, %v2988
    %v3028 = vxor.u32 %v3027, 2147483648
    %v3029 = vmul.f32 %v3028, 1.442695
    %v3030 = vpow.pop %v3029
    %v3031 = vadd.f32 %v3030, 1.0
    %v3032 = vrcp.pop %v3031
    %v3033 = vmul.f32 1.0, %v3032
    %v3034 = vadd.f32 %v2990, %v701
    %v3035 = vmul.f32 %v3026, %v3034
    %v3036 = vadd.f32 %v2997, %v3035
    %v3037 = vtanh.pop %v3036
    %v3038 = vsub.f32 1.0, %v3033
    %v3039 = vmul.f32 %v3038, %v3037
    %v3040 = vmul.f32 %v3033, %v2579
    %v3041 = vadd.f32 %v3039, %v3040
    %v3042 = vsel %vm2573, %v3019, 0.0
    %3043 = vst [vmem:[#allocation3 + $0x40] sm:$0xff] %v3042
    %v3044 = vsel %vm2572, %v3041, 0.0
    %3045 = vst [vmem:[#allocation3 + $0x38] sm:$0xff] %v3044
    %v3046 = vsel %vm2573, %v3019, %v2578
    %v3047 = vsel %vm2572, %v3041, %v2579
    %v3048 = vpack.c.bf16 %v3047, %v3046
    %v3049 = vld [vmem:[#allocation7] sm:$0xff]
    %v3050 = vld [vmem:[#allocation7 + $0x8] sm:$0xff]
    %v3051 = vld [vmem:[#allocation7 + $0x10] sm:$0xff]
    %v3052 = vld [vmem:[#allocation7 + $0x18] sm:$0xff]
    %v3053 = vld [vmem:[#allocation7 + $0x20] sm:$0xff]
    %v3054 = vld [vmem:[#allocation7 + $0x28] sm:$0xff]
    %v3055 = vld [vmem:[#allocation7 + $0x30] sm:$0xff]
    %v3056 = vld [vmem:[#allocation7 + $0x38] sm:$0xff]
    %v3057 = vld [vmem:[#allocation7 + $0x40] sm:$0xff]
    %v3058 = vld [vmem:[#allocation7 + $0x48] sm:$0xff]
    %v3059 = vld [vmem:[#allocation7 + $0x50] sm:$0xff]
    %v3060 = vld [vmem:[#allocation7 + $0x58] sm:$0xff]
    %v3061 = vld [vmem:[#allocation7 + $0x60] sm:$0xff]
    %v3062 = vld [vmem:[#allocation7 + $0x68] sm:$0xff]
    %v3063 = vld [vmem:[#allocation7 + $0x70] sm:$0xff]
    %v3064 = vld [vmem:[#allocation7 + $0x78] sm:$0xff]
    %v3065 = vld [vmem:[#allocation7 + $0x80] sm:$0xff]
    %v3066 = vld [vmem:[#allocation7 + $0x88] sm:$0xff]
    %v3067 = vld [vmem:[#allocation7 + $0x90] sm:$0xff]
    %v3068 = vld [vmem:[#allocation7 + $0x98] sm:$0xff]
    %v3069 = vld [vmem:[#allocation7 + $0xa0] sm:$0xff]
    %v3070 = vld [vmem:[#allocation7 + $0xa8] sm:$0xff]
    %v3071 = vld [vmem:[#allocation7 + $0xb0] sm:$0xff]
    %v3072 = vld [vmem:[#allocation7 + $0xb8] sm:$0xff]
    %v3073 = vld [vmem:[#allocation7 + $0xc0] sm:$0xff]
    %v3074 = vld [vmem:[#allocation7 + $0xc8] sm:$0xff]
    %v3075 = vld [vmem:[#allocation7 + $0xd0] sm:$0xff]
    %v3076 = vld [vmem:[#allocation7 + $0xd8] sm:$0xff]
    %v3077 = vld [vmem:[#allocation7 + $0xe0] sm:$0xff]
    %v3078 = vld [vmem:[#allocation7 + $0xe8] sm:$0xff]
    %v3079 = vld [vmem:[#allocation7 + $0xf0] sm:$0xff]
    %v3080 = vld [vmem:[#allocation7 + $0xf8] sm:$0xff]
    %v3081 = vld [vmem:[#allocation7 + $0x100] sm:$0xff]
    %v3082 = vld [vmem:[#allocation7 + $0x108] sm:$0xff]
    %v3083 = vld [vmem:[#allocation7 + $0x110] sm:$0xff]
    %v3084 = vld [vmem:[#allocation7 + $0x118] sm:$0xff]
    %v3085 = vld [vmem:[#allocation7 + $0x120] sm:$0xff]
    %v3086 = vld [vmem:[#allocation7 + $0x128] sm:$0xff]
    %v3087 = vld [vmem:[#allocation7 + $0x130] sm:$0xff]
    %v3088 = vld [vmem:[#allocation7 + $0x138] sm:$0xff]
    %v3089 = vld [vmem:[#allocation7 + $0x140] sm:$0xff]
    %v3090 = vld [vmem:[#allocation7 + $0x148] sm:$0xff]
    %v3091 = vld [vmem:[#allocation7 + $0x150] sm:$0xff]
    %v3092 = vld [vmem:[#allocation7 + $0x158] sm:$0xff]
    %v3093 = vld [vmem:[#allocation7 + $0x160] sm:$0xff]
    %v3094 = vld [vmem:[#allocation7 + $0x168] sm:$0xff]
    %v3095 = vld [vmem:[#allocation7 + $0x170] sm:$0xff]
    %v3096 = vld [vmem:[#allocation7 + $0x178] sm:$0xff]
    %v3145 = vunpack.c.l.b16 %v3049
    %v3146 = vunpack.c.h.b16 %v3049
    %v3147 = vunpack.c.l.b16 %v3050
    %v3148 = vunpack.c.h.b16 %v3050
    %v3149 = vunpack.c.l.b16 %v3051
    %v3150 = vunpack.c.h.b16 %v3051
    %v3151 = vunpack.c.l.b16 %v3052
    %v3152 = vunpack.c.h.b16 %v3052
    %v3153 = vunpack.c.l.b16 %v3053
    %v3154 = vunpack.c.h.b16 %v3053
    %v3155 = vunpack.c.l.b16 %v3054
    %v3156 = vunpack.c.h.b16 %v3054
    %v3157 = vunpack.c.l.b16 %v3055
    %v3158 = vunpack.c.h.b16 %v3055
    %v3159 = vunpack.c.l.b16 %v3056
    %v3160 = vunpack.c.h.b16 %v3056
    %v3161 = vunpack.c.l.b16 %v3057
    %v3162 = vunpack.c.h.b16 %v3057
    %v3163 = vunpack.c.l.b16 %v3058
    %v3164 = vunpack.c.h.b16 %v3058
    %v3165 = vunpack.c.l.b16 %v3059
    %v3166 = vunpack.c.h.b16 %v3059
    %v3167 = vunpack.c.l.b16 %v3060
    %v3168 = vunpack.c.h.b16 %v3060
    %v3169 = vunpack.c.l.b16 %v3061
    %v3170 = vunpack.c.h.b16 %v3061
    %v3171 = vunpack.c.l.b16 %v3062
    %v3172 = vunpack.c.h.b16 %v3062
    %v3173 = vunpack.c.l.b16 %v3063
    %v3174 = vunpack.c.h.b16 %v3063
    %v3175 = vunpack.c.l.b16 %v3064
    %v3176 = vunpack.c.h.b16 %v3064
    %v3177 = vunpack.c.l.b16 %v3065
    %v3178 = vunpack.c.h.b16 %v3065
    %v3179 = vunpack.c.l.b16 %v3066
    %v3180 = vunpack.c.h.b16 %v3066
    %v3181 = vunpack.c.l.b16 %v3067
    %v3182 = vunpack.c.h.b16 %v3067
    %v3183 = vunpack.c.l.b16 %v3068
    %v3184 = vunpack.c.h.b16 %v3068
    %v3185 = vunpack.c.l.b16 %v3069
    %v3186 = vunpack.c.h.b16 %v3069
    %v3187 = vunpack.c.l.b16 %v3070
    %v3188 = vunpack.c.h.b16 %v3070
    %v3189 = vunpack.c.l.b16 %v3071
    %v3190 = vunpack.c.h.b16 %v3071
    %v3191 = vunpack.c.l.b16 %v3072
    %v3192 = vunpack.c.h.b16 %v3072
    %v3193 = vunpack.c.l.b16 %v3073
    %v3194 = vunpack.c.h.b16 %v3073
    %v3195 = vunpack.c.l.b16 %v3074
    %v3196 = vunpack.c.h.b16 %v3074
    %v3197 = vunpack.c.l.b16 %v3075
    %v3198 = vunpack.c.h.b16 %v3075
    %v3199 = vunpack.c.l.b16 %v3076
    %v3200 = vunpack.c.h.b16 %v3076
    %v3201 = vunpack.c.l.b16 %v3077
    %v3202 = vunpack.c.h.b16 %v3077
    %v3203 = vunpack.c.l.b16 %v3078
    %v3204 = vunpack.c.h.b16 %v3078
    %v3205 = vunpack.c.l.b16 %v3079
    %v3206 = vunpack.c.h.b16 %v3079
    %v3207 = vunpack.c.l.b16 %v3080
    %v3208 = vunpack.c.h.b16 %v3080
    %v3209 = vunpack.c.l.b16 %v3081
    %v3210 = vunpack.c.h.b16 %v3081
    %v3211 = vunpack.c.l.b16 %v3082
    %v3212 = vunpack.c.h.b16 %v3082
    %v3213 = vunpack.c.l.b16 %v3083
    %v3214 = vunpack.c.h.b16 %v3083
    %v3215 = vunpack.c.l.b16 %v3084
    %v3216 = vunpack.c.h.b16 %v3084
    %v3217 = vunpack.c.l.b16 %v3085
    %v3218 = vunpack.c.h.b16 %v3085
    %v3219 = vunpack.c.l.b16 %v3086
    %v3220 = vunpack.c.h.b16 %v3086
    %v3221 = vunpack.c.l.b16 %v3087
    %v3222 = vunpack.c.h.b16 %v3087
    %v3223 = vunpack.c.l.b16 %v3088
    %v3224 = vunpack.c.h.b16 %v3088
    %v3225 = vunpack.c.l.b16 %v3089
    %v3226 = vunpack.c.h.b16 %v3089
    %v3227 = vunpack.c.l.b16 %v3090
    %v3228 = vunpack.c.h.b16 %v3090
    %v3229 = vunpack.c.l.b16 %v3091
    %v3230 = vunpack.c.h.b16 %v3091
    %v3231 = vunpack.c.l.b16 %v3092
    %v3232 = vunpack.c.h.b16 %v3092
    %v3233 = vunpack.c.l.b16 %v3093
    %v3234 = vunpack.c.h.b16 %v3093
    %v3235 = vunpack.c.l.b16 %v3094
    %v3236 = vunpack.c.h.b16 %v3094
    %v3237 = vunpack.c.l.b16 %v3095
    %v3238 = vunpack.c.h.b16 %v3095
    %v3239 = vunpack.c.l.b16 %v3096
    %v3240 = vunpack.c.h.b16 %v3096
    %v3241 = vpack.c.b16 %v3151, %v3145
    %v3242 = vpack.c.b16 %v3152, %v3146
    %v3243 = vpack.c.b16 %v3153, %v3147
    %v3244 = vpack.c.b16 %v3154, %v3148
    %v3245 = vpack.c.b16 %v3155, %v3149
    %v3246 = vpack.c.b16 %v3156, %v3150
    %v3247 = vpack.c.b16 %v3163, %v3157
    %v3248 = vpack.c.b16 %v3164, %v3158
    %v3249 = vpack.c.b16 %v3165, %v3159
    %v3250 = vpack.c.b16 %v3166, %v3160
    %v3251 = vpack.c.b16 %v3167, %v3161
    %v3252 = vpack.c.b16 %v3168, %v3162
    %v3253 = vpack.c.b16 %v3175, %v3169
    %v3254 = vpack.c.b16 %v3176, %v3170
    %v3255 = vpack.c.b16 %v3177, %v3171
    %v3256 = vpack.c.b16 %v3178, %v3172
    %v3257 = vpack.c.b16 %v3179, %v3173
    %v3258 = vpack.c.b16 %v3180, %v3174
    %v3259 = vpack.c.b16 %v3187, %v3181
    %v3260 = vpack.c.b16 %v3188, %v3182
    %v3261 = vpack.c.b16 %v3189, %v3183
    %v3262 = vpack.c.b16 %v3190, %v3184
    %v3263 = vpack.c.b16 %v3191, %v3185
    %v3264 = vpack.c.b16 %v3192, %v3186
    %v3265 = vpack.c.b16 %v3199, %v3193
    %v3266 = vpack.c.b16 %v3200, %v3194
    %v3267 = vpack.c.b16 %v3201, %v3195
    %v3268 = vpack.c.b16 %v3202, %v3196
    %v3269 = vpack.c.b16 %v3203, %v3197
    %v3270 = vpack.c.b16 %v3204, %v3198
    %v3271 = vpack.c.b16 %v3211, %v3205
    %v3272 = vpack.c.b16 %v3212, %v3206
    %v3273 = vpack.c.b16 %v3213, %v3207
    %v3274 = vpack.c.b16 %v3214, %v3208
    %v3275 = vpack.c.b16 %v3215, %v3209
    %v3276 = vpack.c.b16 %v3216, %v3210
    %v3277 = vpack.c.b16 %v3223, %v3217
    %v3278 = vpack.c.b16 %v3224, %v3218
    %v3279 = vpack.c.b16 %v3225, %v3219
    %v3280 = vpack.c.b16 %v3226, %v3220
    %v3281 = vpack.c.b16 %v3227, %v3221
    %v3282 = vpack.c.b16 %v3228, %v3222
    %v3283 = vpack.c.b16 %v3235, %v3229
    %v3284 = vpack.c.b16 %v3236, %v3230
    %v3285 = vpack.c.b16 %v3237, %v3231
    %v3286 = vpack.c.b16 %v3238, %v3232
    %v3287 = vpack.c.b16 %v3239, %v3233
    %v3288 = vpack.c.b16 %v3240, %v3234
    %3337 = vmatprep.subr.bf16.mxu0 %v3284
    %3338 = vmatpush1.bf16.msra.mxu0 %v3283
    %3339 = vmatprep.subr.bf16.mxu0 %v3278
    %3340 = vmatpush1.bf16.msra.mxu0 %v3277
    %3341 = vmatprep.subr.bf16.mxu0 %v3272
    %3342 = vmatpush1.bf16.msra.mxu0 %v3271
    %3343 = vmatprep.subr.bf16.mxu0 %v3266
    %3344 = vmatpush1.bf16.msra.mxu0 %v3265
    %3345 = vmatprep.subr.bf16.mxu0 %v3260
    %3346 = vmatpush1.bf16.msra.mxu0 %v3259
    %3347 = vmatprep.subr.bf16.mxu0 %v3254
    %3348 = vmatpush1.bf16.msra.mxu0 %v3253
    %3349 = vmatprep.subr.bf16.mxu0 %v3248
    %3350 = vmatpush1.bf16.msra.mxu0 %v3247
    %3351 = vmatprep.subr.bf16.mxu0 %v3242
    %3352 = vmatpush1.bf16.msra.mxu0 %v3241
    %3353 = vmatprep.subr.bf16.mxu0 0
    %3354 = vmatpush2.bf16.msra.mxu0 0
    %3355 = vmatprep.subr.bf16.mxu0 0
    %3356 = vmatpush2.bf16.msra.mxu0 0
    %3357 = vmatprep.subr.bf16.mxu0 0
    %3358 = vmatpush2.bf16.msra.mxu0 0
    %3359 = vmatprep.subr.bf16.mxu0 0
    %3360 = vmatpush2.bf16.msra.mxu0 0
    %3361 = vmatprep.subr.bf16.mxu0 0
    %3362 = vmatpush2.bf16.msra.mxu0 0
    %3363 = vmatprep.subr.bf16.mxu0 0
    %3364 = vmatpush2.bf16.msra.mxu0 0
    %3365 = vmatprep.subr.bf16.mxu0 0
    %3366 = vmatpush2.bf16.msra.mxu0 0
    %3367 = vmatprep.subr.bf16.mxu0 0
    %3368 = vmatpush2.bf16.msra.mxu0 0
    %3369 = vmatprep.mubr.bf16.mxu0 0
    %3370 = vmatmul.mubr.bf16.gmra.mxu0 %v3048
    %v3371 = vpop.f32.mrf.mxu0
    %v3372 = vadd.f32 0.0, %v3371
    %v3373 = vpop.f32.mrf.mxu0
    %v3374 = vadd.f32 0.0, %v3373
    %v3375 = vpop.f32.mrf.mxu0
    %v3376 = vpop.f32.mrf.mxu0
    %3377 = vdwg.mxu0
    %3378 = vmatprep.subr.bf16.mxu0 %v3286
    %3379 = vmatpush1.bf16.msra.mxu0 %v3285
    %3380 = vmatprep.subr.bf16.mxu0 %v3280
    %3381 = vmatpush1.bf16.msra.mxu0 %v3279
    %3382 = vmatprep.subr.bf16.mxu0 %v3274
    %3383 = vmatpush1.bf16.msra.mxu0 %v3273
    %3384 = vmatprep.subr.bf16.mxu0 %v3268
    %3385 = vmatpush1.bf16.msra.mxu0 %v3267
    %3386 = vmatprep.subr.bf16.mxu0 %v3262
    %3387 = vmatpush1.bf16.msra.mxu0 %v3261
    %3388 = vmatprep.subr.bf16.mxu0 %v3256
    %3389 = vmatpush1.bf16.msra.mxu0 %v3255
    %3390 = vmatprep.subr.bf16.mxu0 %v3250
    %3391 = vmatpush1.bf16.msra.mxu0 %v3249
    %3392 = vmatprep.subr.bf16.mxu0 %v3244
    %3393 = vmatpush1.bf16.msra.mxu0 %v3243
    %3394 = vmatprep.subr.bf16.mxu0 0
    %3395 = vmatpush2.bf16.msra.mxu0 0
    %3396 = vmatprep.subr.bf16.mxu0 0
    %3397 = vmatpush2.bf16.msra.mxu0 0
    %3398 = vmatprep.subr.bf16.mxu0 0
    %3399 = vmatpush2.bf16.msra.mxu0 0
    %3400 = vmatprep.subr.bf16.mxu0 0
    %3401 = vmatpush2.bf16.msra.mxu0 0
    %3402 = vmatprep.subr.bf16.mxu0 0
    %3403 = vmatpush2.bf16.msra.mxu0 0
    %3404 = vmatprep.subr.bf16.mxu0 0
    %3405 = vmatpush2.bf16.msra.mxu0 0
    %3406 = vmatprep.subr.bf16.mxu0 0
    %3407 = vmatpush2.bf16.msra.mxu0 0
    %3408 = vmatprep.subr.bf16.mxu0 0
    %3409 = vmatpush2.bf16.msra.mxu0 0
    %3410 = vmatprep.mubr.bf16.mxu0 0
    %3411 = vmatmul.mubr.bf16.gmra.mxu0 %v3048
    %v3412 = vpop.f32.mrf.mxu0
    %v3413 = vadd.f32 0.0, %v3412
    %v3414 = vpop.f32.mrf.mxu0
    %v3415 = vpop.f32.mrf.mxu0
    %v3416 = vpop.f32.mrf.mxu0
    %v3417 = vadd.f32 0.0, %v3416
    %3418 = vdwg.mxu0
    %3419 = vmatprep.subr.bf16.mxu0 %v3288
    %3420 = vmatpush1.bf16.msra.mxu0 %v3287
    %3421 = vmatprep.subr.bf16.mxu0 %v3282
    %3422 = vmatpush1.bf16.msra.mxu0 %v3281
    %3423 = vmatprep.subr.bf16.mxu0 %v3276
    %3424 = vmatpush1.bf16.msra.mxu0 %v3275
    %3425 = vmatprep.subr.bf16.mxu0 %v3270
    %3426 = vmatpush1.bf16.msra.mxu0 %v3269
    %3427 = vmatprep.subr.bf16.mxu0 %v3264
    %3428 = vmatpush1.bf16.msra.mxu0 %v3263
    %3429 = vmatprep.subr.bf16.mxu0 %v3258
    %3430 = vmatpush1.bf16.msra.mxu0 %v3257
    %3431 = vmatprep.subr.bf16.mxu0 %v3252
    %3432 = vmatpush1.bf16.msra.mxu0 %v3251
    %3433 = vmatprep.subr.bf16.mxu0 %v3246
    %3434 = vmatpush1.bf16.msra.mxu0 %v3245
    %3435 = vmatprep.subr.bf16.mxu0 0
    %3436 = vmatpush2.bf16.msra.mxu0 0
    %3437 = vmatprep.subr.bf16.mxu0 0
    %3438 = vmatpush2.bf16.msra.mxu0 0
    %3439 = vmatprep.subr.bf16.mxu0 0
    %3440 = vmatpush2.bf16.msra.mxu0 0
    %3441 = vmatprep.subr.bf16.mxu0 0
    %3442 = vmatpush2.bf16.msra.mxu0 0
    %3443 = vmatprep.subr.bf16.mxu0 0
    %3444 = vmatpush2.bf16.msra.mxu0 0
    %3445 = vmatprep.subr.bf16.mxu0 0
    %3446 = vmatpush2.bf16.msra.mxu0 0
    %3447 = vmatprep.subr.bf16.mxu0 0
    %3448 = vmatpush2.bf16.msra.mxu0 0
    %3449 = vmatprep.subr.bf16.mxu0 0
    %3450 = vmatpush2.bf16.msra.mxu0 0
    %3451 = vmatprep.mubr.bf16.mxu0 0
    %3452 = vmatmul.mubr.bf16.gmra.mxu0 %v3048
    %v3453 = vpop.f32.mrf.mxu0
    %v3454 = vpop.f32.mrf.mxu0
    %v3455 = vpop.f32.mrf.mxu0
    %v3456 = vadd.f32 0.0, %v3455
    %v3457 = vpop.f32.mrf.mxu0
    %v3458 = vadd.f32 0.0, %v3457
    %3459 = vdwg.mxu0
    %v3460 = vld [vmem:[#allocation2 + $0xf0] sm:$0xff]
    %v3461 = vld [vmem:[#allocation2 + $0xf8] sm:$0xff]
    %v3462 = vld [vmem:[#allocation2 + $0x100] sm:$0xff]
    %v3463 = vld [vmem:[#allocation2 + $0x78] sm:$0xff]
    %v3464 = vld [vmem:[#allocation2 + $0x80] sm:$0xff]
    %v3465 = vld [vmem:[#allocation2 + $0x88] sm:$0xff]
    %v3466 = vadd.f32 %v3460, %v3372
    %v3467 = vxor.u32 %v3466, 2147483648
    %v3468 = vmul.f32 %v3467, 1.442695
    %v3469 = vpow.pop %v3468
    %v3470 = vadd.f32 %v3469, 1.0
    %v3471 = vrcp.pop %v3470
    %v3472 = vmul.f32 1.0, %v3471
    %v3473 = vadd.f32 %v3461, %v3374
    %v3474 = vxor.u32 %v3473, 2147483648
    %v3475 = vmul.f32 %v3474, 1.442695
    %v3476 = vpow.pop %v3475
    %v3477 = vadd.f32 %v3476, 1.0
    %v3478 = vrcp.pop %v3477
    %v3479 = vmul.f32 1.0, %v3478
    %v3480 = vadd.f32 %v3413, %v694
    %v3481 = vmul.f32 %v3472, %v3480
    %v3482 = vadd.f32 %v3462, %v3481
    %v3483 = vtanh.pop %v3482
    %v3484 = vsub.f32 1.0, %v3479
    %v3485 = vmul.f32 %v3484, %v3483
    %v3486 = vmul.f32 %v3479, %v3046
    %v3487 = vadd.f32 %v3485, %v3486
    %v3488 = vadd.f32 %v3463, %v3417
    %v3489 = vxor.u32 %v3488, 2147483648
    %v3490 = vmul.f32 %v3489, 1.442695
    %v3491 = vpow.pop %v3490
    %v3492 = vadd.f32 %v3491, 1.0
    %v3493 = vrcp.pop %v3492
    %v3494 = vmul.f32 1.0, %v3493
    %v3495 = vadd.f32 %v3464, %v3456
    %v3496 = vxor.u32 %v3495, 2147483648
    %v3497 = vmul.f32 %v3496, 1.442695
    %v3498 = vpow.pop %v3497
    %v3499 = vadd.f32 %v3498, 1.0
    %v3500 = vrcp.pop %v3499
    %v3501 = vmul.f32 1.0, %v3500
    %v3502 = vadd.f32 %v3458, %v701
    %v3503 = vmul.f32 %v3494, %v3502
    %v3504 = vadd.f32 %v3465, %v3503
    %v3505 = vtanh.pop %v3504
    %v3506 = vsub.f32 1.0, %v3501
    %v3507 = vmul.f32 %v3506, %v3505
    %v3508 = vmul.f32 %v3501, %v3047
    %v3509 = vadd.f32 %v3507, %v3508
    %v3510 = vsel %vm2103, %v3487, 0.0
    %3511 = vst [vmem:[#allocation3 + $0x50] sm:$0xff] %v3510
    %v3512 = vsel %vm2102, %v3509, 0.0
    %3513 = vst [vmem:[#allocation3 + $0x28] sm:$0xff] %v3512
    %v3514 = vsel %vm2103, %v3487, %v3046
    %v3515 = vsel %vm2102, %v3509, %v3047
    %v3516 = vpack.c.bf16 %v3515, %v3514
    %v3517 = vld [vmem:[#allocation7] sm:$0xff]
    %v3518 = vld [vmem:[#allocation7 + $0x8] sm:$0xff]
    %v3519 = vld [vmem:[#allocation7 + $0x10] sm:$0xff]
    %v3520 = vld [vmem:[#allocation7 + $0x18] sm:$0xff]
    %v3521 = vld [vmem:[#allocation7 + $0x20] sm:$0xff]
    %v3522 = vld [vmem:[#allocation7 + $0x28] sm:$0xff]
    %v3523 = vld [vmem:[#allocation7 + $0x30] sm:$0xff]
    %v3524 = vld [vmem:[#allocation7 + $0x38] sm:$0xff]
    %v3525 = vld [vmem:[#allocation7 + $0x40] sm:$0xff]
    %v3526 = vld [vmem:[#allocation7 + $0x48] sm:$0xff]
    %v3527 = vld [vmem:[#allocation7 + $0x50] sm:$0xff]
    %v3528 = vld [vmem:[#allocation7 + $0x58] sm:$0xff]
    %v3529 = vld [vmem:[#allocation7 + $0x60] sm:$0xff]
    %v3530 = vld [vmem:[#allocation7 + $0x68] sm:$0xff]
    %v3531 = vld [vmem:[#allocation7 + $0x70] sm:$0xff]
    %v3532 = vld [vmem:[#allocation7 + $0x78] sm:$0xff]
    %v3533 = vld [vmem:[#allocation7 + $0x80] sm:$0xff]
    %v3534 = vld [vmem:[#allocation7 + $0x88] sm:$0xff]
    %v3535 = vld [vmem:[#allocation7 + $0x90] sm:$0xff]
    %v3536 = vld [vmem:[#allocation7 + $0x98] sm:$0xff]
    %v3537 = vld [vmem:[#allocation7 + $0xa0] sm:$0xff]
    %v3538 = vld [vmem:[#allocation7 + $0xa8] sm:$0xff]
    %v3539 = vld [vmem:[#allocation7 + $0xb0] sm:$0xff]
    %v3540 = vld [vmem:[#allocation7 + $0xb8] sm:$0xff]
    %v3541 = vld [vmem:[#allocation7 + $0xc0] sm:$0xff]
    %v3542 = vld [vmem:[#allocation7 + $0xc8] sm:$0xff]
    %v3543 = vld [vmem:[#allocation7 + $0xd0] sm:$0xff]
    %v3544 = vld [vmem:[#allocation7 + $0xd8] sm:$0xff]
    %v3545 = vld [vmem:[#allocation7 + $0xe0] sm:$0xff]
    %v3546 = vld [vmem:[#allocation7 + $0xe8] sm:$0xff]
    %v3547 = vld [vmem:[#allocation7 + $0xf0] sm:$0xff]
    %v3548 = vld [vmem:[#allocation7 + $0xf8] sm:$0xff]
    %v3549 = vld [vmem:[#allocation7 + $0x100] sm:$0xff]
    %v3550 = vld [vmem:[#allocation7 + $0x108] sm:$0xff]
    %v3551 = vld [vmem:[#allocation7 + $0x110] sm:$0xff]
    %v3552 = vld [vmem:[#allocation7 + $0x118] sm:$0xff]
    %v3553 = vld [vmem:[#allocation7 + $0x120] sm:$0xff]
    %v3554 = vld [vmem:[#allocation7 + $0x128] sm:$0xff]
    %v3555 = vld [vmem:[#allocation7 + $0x130] sm:$0xff]
    %v3556 = vld [vmem:[#allocation7 + $0x138] sm:$0xff]
    %v3557 = vld [vmem:[#allocation7 + $0x140] sm:$0xff]
    %v3558 = vld [vmem:[#allocation7 + $0x148] sm:$0xff]
    %v3559 = vld [vmem:[#allocation7 + $0x150] sm:$0xff]
    %v3560 = vld [vmem:[#allocation7 + $0x158] sm:$0xff]
    %v3561 = vld [vmem:[#allocation7 + $0x160] sm:$0xff]
    %v3562 = vld [vmem:[#allocation7 + $0x168] sm:$0xff]
    %v3563 = vld [vmem:[#allocation7 + $0x170] sm:$0xff]
    %v3564 = vld [vmem:[#allocation7 + $0x178] sm:$0xff]
    %v3613 = vunpack.c.l.b16 %v3517
    %v3614 = vunpack.c.h.b16 %v3517
    %v3615 = vunpack.c.l.b16 %v3518
    %v3616 = vunpack.c.h.b16 %v3518
    %v3617 = vunpack.c.l.b16 %v3519
    %v3618 = vunpack.c.h.b16 %v3519
    %v3619 = vunpack.c.l.b16 %v3520
    %v3620 = vunpack.c.h.b16 %v3520
    %v3621 = vunpack.c.l.b16 %v3521
    %v3622 = vunpack.c.h.b16 %v3521
    %v3623 = vunpack.c.l.b16 %v3522
    %v3624 = vunpack.c.h.b16 %v3522
    %v3625 = vunpack.c.l.b16 %v3523
    %v3626 = vunpack.c.h.b16 %v3523
    %v3627 = vunpack.c.l.b16 %v3524
    %v3628 = vunpack.c.h.b16 %v3524
    %v3629 = vunpack.c.l.b16 %v3525
    %v3630 = vunpack.c.h.b16 %v3525
    %v3631 = vunpack.c.l.b16 %v3526
    %v3632 = vunpack.c.h.b16 %v3526
    %v3633 = vunpack.c.l.b16 %v3527
    %v3634 = vunpack.c.h.b16 %v3527
    %v3635 = vunpack.c.l.b16 %v3528
    %v3636 = vunpack.c.h.b16 %v3528
    %v3637 = vunpack.c.l.b16 %v3529
    %v3638 = vunpack.c.h.b16 %v3529
    %v3639 = vunpack.c.l.b16 %v3530
    %v3640 = vunpack.c.h.b16 %v3530
    %v3641 = vunpack.c.l.b16 %v3531
    %v3642 = vunpack.c.h.b16 %v3531
    %v3643 = vunpack.c.l.b16 %v3532
    %v3644 = vunpack.c.h.b16 %v3532
    %v3645 = vunpack.c.l.b16 %v3533
    %v3646 = vunpack.c.h.b16 %v3533
    %v3647 = vunpack.c.l.b16 %v3534
    %v3648 = vunpack.c.h.b16 %v3534
    %v3649 = vunpack.c.l.b16 %v3535
    %v3650 = vunpack.c.h.b16 %v3535
    %v3651 = vunpack.c.l.b16 %v3536
    %v3652 = vunpack.c.h.b16 %v3536
    %v3653 = vunpack.c.l.b16 %v3537
    %v3654 = vunpack.c.h.b16 %v3537
    %v3655 = vunpack.c.l.b16 %v3538
    %v3656 = vunpack.c.h.b16 %v3538
    %v3657 = vunpack.c.l.b16 %v3539
    %v3658 = vunpack.c.h.b16 %v3539
    %v3659 = vunpack.c.l.b16 %v3540
    %v3660 = vunpack.c.h.b16 %v3540
    %v3661 = vunpack.c.l.b16 %v3541
    %v3662 = vunpack.c.h.b16 %v3541
    %v3663 = vunpack.c.l.b16 %v3542
    %v3664 = vunpack.c.h.b16 %v3542
    %v3665 = vunpack.c.l.b16 %v3543
    %v3666 = vunpack.c.h.b16 %v3543
    %v3667 = vunpack.c.l.b16 %v3544
    %v3668 = vunpack.c.h.b16 %v3544
    %v3669 = vunpack.c.l.b16 %v3545
    %v3670 = vunpack.c.h.b16 %v3545
    %v3671 = vunpack.c.l.b16 %v3546
    %v3672 = vunpack.c.h.b16 %v3546
    %v3673 = vunpack.c.l.b16 %v3547
    %v3674 = vunpack.c.h.b16 %v3547
    %v3675 = vunpack.c.l.b16 %v3548
    %v3676 = vunpack.c.h.b16 %v3548
    %v3677 = vunpack.c.l.b16 %v3549
    %v3678 = vunpack.c.h.b16 %v3549
    %v3679 = vunpack.c.l.b16 %v3550
    %v3680 = vunpack.c.h.b16 %v3550
    %v3681 = vunpack.c.l.b16 %v3551
    %v3682 = vunpack.c.h.b16 %v3551
    %v3683 = vunpack.c.l.b16 %v3552
    %v3684 = vunpack.c.h.b16 %v3552
    %v3685 = vunpack.c.l.b16 %v3553
    %v3686 = vunpack.c.h.b16 %v3553
    %v3687 = vunpack.c.l.b16 %v3554
    %v3688 = vunpack.c.h.b16 %v3554
    %v3689 = vunpack.c.l.b16 %v3555
    %v3690 = vunpack.c.h.b16 %v3555
    %v3691 = vunpack.c.l.b16 %v3556
    %v3692 = vunpack.c.h.b16 %v3556
    %v3693 = vunpack.c.l.b16 %v3557
    %v3694 = vunpack.c.h.b16 %v3557
    %v3695 = vunpack.c.l.b16 %v3558
    %v3696 = vunpack.c.h.b16 %v3558
    %v3697 = vunpack.c.l.b16 %v3559
    %v3698 = vunpack.c.h.b16 %v3559
    %v3699 = vunpack.c.l.b16 %v3560
    %v3700 = vunpack.c.h.b16 %v3560
    %v3701 = vunpack.c.l.b16 %v3561
    %v3702 = vunpack.c.h.b16 %v3561
    %v3703 = vunpack.c.l.b16 %v3562
    %v3704 = vunpack.c.h.b16 %v3562
    %v3705 = vunpack.c.l.b16 %v3563
    %v3706 = vunpack.c.h.b16 %v3563
    %v3707 = vunpack.c.l.b16 %v3564
    %v3708 = vunpack.c.h.b16 %v3564
    %v3709 = vpack.c.b16 %v3619, %v3613
    %v3710 = vpack.c.b16 %v3620, %v3614
    %v3711 = vpack.c.b16 %v3621, %v3615
    %v3712 = vpack.c.b16 %v3622, %v3616
    %v3713 = vpack.c.b16 %v3623, %v3617
    %v3714 = vpack.c.b16 %v3624, %v3618
    %v3715 = vpack.c.b16 %v3631, %v3625
    %v3716 = vpack.c.b16 %v3632, %v3626
    %v3717 = vpack.c.b16 %v3633, %v3627
    %v3718 = vpack.c.b16 %v3634, %v3628
    %v3719 = vpack.c.b16 %v3635, %v3629
    %v3720 = vpack.c.b16 %v3636, %v3630
    %v3721 = vpack.c.b16 %v3643, %v3637
    %v3722 = vpack.c.b16 %v3644, %v3638
    %v3723 = vpack.c.b16 %v3645, %v3639
    %v3724 = vpack.c.b16 %v3646, %v3640
    %v3725 = vpack.c.b16 %v3647, %v3641
    %v3726 = vpack.c.b16 %v3648, %v3642
    %v3727 = vpack.c.b16 %v3655, %v3649
    %v3728 = vpack.c.b16 %v3656, %v3650
    %v3729 = vpack.c.b16 %v3657, %v3651
    %v3730 = vpack.c.b16 %v3658, %v3652
    %v3731 = vpack.c.b16 %v3659, %v3653
    %v3732 = vpack.c.b16 %v3660, %v3654
    %v3733 = vpack.c.b16 %v3667, %v3661
    %v3734 = vpack.c.b16 %v3668, %v3662
    %v3735 = vpack.c.b16 %v3669, %v3663
    %v3736 = vpack.c.b16 %v3670, %v3664
    %v3737 = vpack.c.b16 %v3671, %v3665
    %v3738 = vpack.c.b16 %v3672, %v3666
    %v3739 = vpack.c.b16 %v3679, %v3673
    %v3740 = vpack.c.b16 %v3680, %v3674
    %v3741 = vpack.c.b16 %v3681, %v3675
    %v3742 = vpack.c.b16 %v3682, %v3676
    %v3743 = vpack.c.b16 %v3683, %v3677
    %v3744 = vpack.c.b16 %v3684, %v3678
    %v3745 = vpack.c.b16 %v3691, %v3685
    %v3746 = vpack.c.b16 %v3692, %v3686
    %v3747 = vpack.c.b16 %v3693, %v3687
    %v3748 = vpack.c.b16 %v3694, %v3688
    %v3749 = vpack.c.b16 %v3695, %v3689
    %v3750 = vpack.c.b16 %v3696, %v3690
    %v3751 = vpack.c.b16 %v3703, %v3697
    %v3752 = vpack.c.b16 %v3704, %v3698
    %v3753 = vpack.c.b16 %v3705, %v3699
    %v3754 = vpack.c.b16 %v3706, %v3700
    %v3755 = vpack.c.b16 %v3707, %v3701
    %v3756 = vpack.c.b16 %v3708, %v3702
    %3805 = vmatprep.subr.bf16.mxu0 %v3752
    %3806 = vmatpush1.bf16.msra.mxu0 %v3751
    %3807 = vmatprep.subr.bf16.mxu0 %v3746
    %3808 = vmatpush1.bf16.msra.mxu0 %v3745
    %3809 = vmatprep.subr.bf16.mxu0 %v3740
    %3810 = vmatpush1.bf16.msra.mxu0 %v3739
    %3811 = vmatprep.subr.bf16.mxu0 %v3734
    %3812 = vmatpush1.bf16.msra.mxu0 %v3733
    %3813 = vmatprep.subr.bf16.mxu0 %v3728
    %3814 = vmatpush1.bf16.msra.mxu0 %v3727
    %3815 = vmatprep.subr.bf16.mxu0 %v3722
    %3816 = vmatpush1.bf16.msra.mxu0 %v3721
    %3817 = vmatprep.subr.bf16.mxu0 %v3716
    %3818 = vmatpush1.bf16.msra.mxu0 %v3715
    %3819 = vmatprep.subr.bf16.mxu0 %v3710
    %3820 = vmatpush1.bf16.msra.mxu0 %v3709
    %3821 = vmatprep.subr.bf16.mxu0 0
    %3822 = vmatpush2.bf16.msra.mxu0 0
    %3823 = vmatprep.subr.bf16.mxu0 0
    %3824 = vmatpush2.bf16.msra.mxu0 0
    %3825 = vmatprep.subr.bf16.mxu0 0
    %3826 = vmatpush2.bf16.msra.mxu0 0
    %3827 = vmatprep.subr.bf16.mxu0 0
    %3828 = vmatpush2.bf16.msra.mxu0 0
    %3829 = vmatprep.subr.bf16.mxu0 0
    %3830 = vmatpush2.bf16.msra.mxu0 0
    %3831 = vmatprep.subr.bf16.mxu0 0
    %3832 = vmatpush2.bf16.msra.mxu0 0
    %3833 = vmatprep.subr.bf16.mxu0 0
    %3834 = vmatpush2.bf16.msra.mxu0 0
    %3835 = vmatprep.subr.bf16.mxu0 0
    %3836 = vmatpush2.bf16.msra.mxu0 0
    %3837 = vmatprep.mubr.bf16.mxu0 0
    %3838 = vmatmul.mubr.bf16.gmra.mxu0 %v3516
    %v3839 = vpop.f32.mrf.mxu0
    %v3840 = vadd.f32 0.0, %v3839
    %v3841 = vpop.f32.mrf.mxu0
    %v3842 = vadd.f32 0.0, %v3841
    %v3843 = vpop.f32.mrf.mxu0
    %v3844 = vpop.f32.mrf.mxu0
    %3845 = vdwg.mxu0
    %3846 = vmatprep.subr.bf16.mxu0 %v3754
    %3847 = vmatpush1.bf16.msra.mxu0 %v3753
    %3848 = vmatprep.subr.bf16.mxu0 %v3748
    %3849 = vmatpush1.bf16.msra.mxu0 %v3747
    %3850 = vmatprep.subr.bf16.mxu0 %v3742
    %3851 = vmatpush1.bf16.msra.mxu0 %v3741
    %3852 = vmatprep.subr.bf16.mxu0 %v3736
    %3853 = vmatpush1.bf16.msra.mxu0 %v3735
    %3854 = vmatprep.subr.bf16.mxu0 %v3730
    %3855 = vmatpush1.bf16.msra.mxu0 %v3729
    %3856 = vmatprep.subr.bf16.mxu0 %v3724
    %3857 = vmatpush1.bf16.msra.mxu0 %v3723
    %3858 = vmatprep.subr.bf16.mxu0 %v3718
    %3859 = vmatpush1.bf16.msra.mxu0 %v3717
    %3860 = vmatprep.subr.bf16.mxu0 %v3712
    %3861 = vmatpush1.bf16.msra.mxu0 %v3711
    %3862 = vmatprep.subr.bf16.mxu0 0
    %3863 = vmatpush2.bf16.msra.mxu0 0
    %3864 = vmatprep.subr.bf16.mxu0 0
    %3865 = vmatpush2.bf16.msra.mxu0 0
    %3866 = vmatprep.subr.bf16.mxu0 0
    %3867 = vmatpush2.bf16.msra.mxu0 0
    %3868 = vmatprep.subr.bf16.mxu0 0
    %3869 = vmatpush2.bf16.msra.mxu0 0
    %3870 = vmatprep.subr.bf16.mxu0 0
    %3871 = vmatpush2.bf16.msra.mxu0 0
    %3872 = vmatprep.subr.bf16.mxu0 0
    %3873 = vmatpush2.bf16.msra.mxu0 0
    %3874 = vmatprep.subr.bf16.mxu0 0
    %3875 = vmatpush2.bf16.msra.mxu0 0
    %3876 = vmatprep.subr.bf16.mxu0 0
    %3877 = vmatpush2.bf16.msra.mxu0 0
    %3878 = vmatprep.mubr.bf16.mxu0 0
    %3879 = vmatmul.mubr.bf16.gmra.mxu0 %v3516
    %v3880 = vpop.f32.mrf.mxu0
    %v3881 = vadd.f32 0.0, %v3880
    %v3882 = vpop.f32.mrf.mxu0
    %v3883 = vpop.f32.mrf.mxu0
    %v3884 = vpop.f32.mrf.mxu0
    %v3885 = vadd.f32 0.0, %v3884
    %3886 = vdwg.mxu0
    %3887 = vmatprep.subr.bf16.mxu0 %v3756
    %3888 = vmatpush1.bf16.msra.mxu0 %v3755
    %3889 = vmatprep.subr.bf16.mxu0 %v3750
    %3890 = vmatpush1.bf16.msra.mxu0 %v3749
    %3891 = vmatprep.subr.bf16.mxu0 %v3744
    %3892 = vmatpush1.bf16.msra.mxu0 %v3743
    %3893 = vmatprep.subr.bf16.mxu0 %v3738
    %3894 = vmatpush1.bf16.msra.mxu0 %v3737
    %3895 = vmatprep.subr.bf16.mxu0 %v3732
    %3896 = vmatpush1.bf16.msra.mxu0 %v3731
    %3897 = vmatprep.subr.bf16.mxu0 %v3726
    %3898 = vmatpush1.bf16.msra.mxu0 %v3725
    %3899 = vmatprep.subr.bf16.mxu0 %v3720
    %3900 = vmatpush1.bf16.msra.mxu0 %v3719
    %3901 = vmatprep.subr.bf16.mxu0 %v3714
    %3902 = vmatpush1.bf16.msra.mxu0 %v3713
    %3903 = vmatprep.subr.bf16.mxu0 0
    %3904 = vmatpush2.bf16.msra.mxu0 0
    %3905 = vmatprep.subr.bf16.mxu0 0
    %3906 = vmatpush2.bf16.msra.mxu0 0
    %3907 = vmatprep.subr.bf16.mxu0 0
    %3908 = vmatpush2.bf16.msra.mxu0 0
    %3909 = vmatprep.subr.bf16.mxu0 0
    %3910 = vmatpush2.bf16.msra.mxu0 0
    %3911 = vmatprep.subr.bf16.mxu0 0
    %3912 = vmatpush2.bf16.msra.mxu0 0
    %3913 = vmatprep.subr.bf16.mxu0 0
    %3914 = vmatpush2.bf16.msra.mxu0 0
    %3915 = vmatprep.subr.bf16.mxu0 0
    %3916 = vmatpush2.bf16.msra.mxu0 0
    %3917 = vmatprep.subr.bf16.mxu0 0
    %3918 = vmatpush2.bf16.msra.mxu0 0
    %3919 = vmatprep.mubr.bf16.mxu0 0
    %3920 = vmatmul.mubr.bf16.gmra.mxu0 %v3516
    %v3921 = vpop.f32.mrf.mxu0
    %v3922 = vpop.f32.mrf.mxu0
    %v3923 = vpop.f32.mrf.mxu0
    %v3924 = vadd.f32 0.0, %v3923
    %v3925 = vpop.f32.mrf.mxu0
    %v3926 = vadd.f32 0.0, %v3925
    %3927 = vdwg.mxu0
    %v3928 = vld [vmem:[#allocation2 + $0x120] sm:$0xff]
    %v3929 = vld [vmem:[#allocation2 + $0x128] sm:$0xff]
    %v3930 = vld [vmem:[#allocation2 + $0x130] sm:$0xff]
    %v3931 = vld [vmem:[#allocation2 + $0x48] sm:$0xff]
    %v3932 = vld [vmem:[#allocation2 + $0x50] sm:$0xff]
    %v3933 = vld [vmem:[#allocation2 + $0x58] sm:$0xff]
    %v3934 = vadd.f32 %v3928, %v3840
    %v3935 = vxor.u32 %v3934, 2147483648
    %v3936 = vmul.f32 %v3935, 1.442695
    %v3937 = vpow.pop %v3936
    %v3938 = vadd.f32 %v3937, 1.0
    %v3939 = vrcp.pop %v3938
    %v3940 = vmul.f32 1.0, %v3939
    %v3941 = vadd.f32 %v3929, %v3842
    %v3942 = vxor.u32 %v3941, 2147483648
    %v3943 = vmul.f32 %v3942, 1.442695
    %v3944 = vpow.pop %v3943
    %v3945 = vadd.f32 %v3944, 1.0
    %v3946 = vrcp.pop %v3945
    %v3947 = vmul.f32 1.0, %v3946
    %v3948 = vadd.f32 %v3881, %v694
    %v3949 = vmul.f32 %v3940, %v3948
    %v3950 = vadd.f32 %v3930, %v3949
    %v3951 = vtanh.pop %v3950
    %v3952 = vsub.f32 1.0, %v3947
    %v3953 = vmul.f32 %v3952, %v3951
    %v3954 = vmul.f32 %v3947, %v3514
    %v3955 = vadd.f32 %v3953, %v3954
    %v3956 = vadd.f32 %v3931, %v3885
    %v3957 = vxor.u32 %v3956, 2147483648
    %v3958 = vmul.f32 %v3957, 1.442695
    %v3959 = vpow.pop %v3958
    %v3960 = vadd.f32 %v3959, 1.0
    %v3961 = vrcp.pop %v3960
    %v3962 = vmul.f32 1.0, %v3961
    %v3963 = vadd.f32 %v3932, %v3924
    %v3964 = vxor.u32 %v3963, 2147483648
    %v3965 = vmul.f32 %v3964, 1.442695
    %v3966 = vpow.pop %v3965
    %v3967 = vadd.f32 %v3966, 1.0
    %v3968 = vrcp.pop %v3967
    %v3969 = vmul.f32 1.0, %v3968
    %v3970 = vadd.f32 %v3926, %v701
    %v3971 = vmul.f32 %v3962, %v3970
    %v3972 = vadd.f32 %v3933, %v3971
    %v3973 = vtanh.pop %v3972
    %v3974 = vsub.f32 1.0, %v3969
    %v3975 = vmul.f32 %v3974, %v3973
    %v3976 = vmul.f32 %v3969, %v3515
    %v3977 = vadd.f32 %v3975, %v3976
    %v3978 = vsel %vm1633, %v3955, 0.0
    %3979 = vst [vmem:[#allocation3 + $0x60] sm:$0xff] %v3978
    %v3980 = vsel %vm1632, %v3977, 0.0
    %3981 = vst [vmem:[#allocation3 + $0x18] sm:$0xff] %v3980
    %v3982 = vsel %vm1633, %v3955, %v3514
    %v3983 = vsel %vm1632, %v3977, %v3515
    %v3984 = vpack.c.bf16 %v3983, %v3982
    %v3985 = vld [vmem:[#allocation7] sm:$0xff]
    %v3986 = vld [vmem:[#allocation7 + $0x8] sm:$0xff]
    %v3987 = vld [vmem:[#allocation7 + $0x10] sm:$0xff]
    %v3988 = vld [vmem:[#allocation7 + $0x18] sm:$0xff]
    %v3989 = vld [vmem:[#allocation7 + $0x20] sm:$0xff]
    %v3990 = vld [vmem:[#allocation7 + $0x28] sm:$0xff]
    %v3991 = vld [vmem:[#allocation7 + $0x30] sm:$0xff]
    %v3992 = vld [vmem:[#allocation7 + $0x38] sm:$0xff]
    %v3993 = vld [vmem:[#allocation7 + $0x40] sm:$0xff]
    %v3994 = vld [vmem:[#allocation7 + $0x48] sm:$0xff]
    %v3995 = vld [vmem:[#allocation7 + $0x50] sm:$0xff]
    %v3996 = vld [vmem:[#allocation7 + $0x58] sm:$0xff]
    %v3997 = vld [vmem:[#allocation7 + $0x60] sm:$0xff]
    %v3998 = vld [vmem:[#allocation7 + $0x68] sm:$0xff]
    %v3999 = vld [vmem:[#allocation7 + $0x70] sm:$0xff]
    %v4000 = vld [vmem:[#allocation7 + $0x78] sm:$0xff]
    %v4001 = vld [vmem:[#allocation7 + $0x80] sm:$0xff]
    %v4002 = vld [vmem:[#allocation7 + $0x88] sm:$0xff]
    %v4003 = vld [vmem:[#allocation7 + $0x90] sm:$0xff]
    %v4004 = vld [vmem:[#allocation7 + $0x98] sm:$0xff]
    %v4005 = vld [vmem:[#allocation7 + $0xa0] sm:$0xff]
    %v4006 = vld [vmem:[#allocation7 + $0xa8] sm:$0xff]
    %v4007 = vld [vmem:[#allocation7 + $0xb0] sm:$0xff]
    %v4008 = vld [vmem:[#allocation7 + $0xb8] sm:$0xff]
    %v4009 = vld [vmem:[#allocation7 + $0xc0] sm:$0xff]
    %v4010 = vld [vmem:[#allocation7 + $0xc8] sm:$0xff]
    %v4011 = vld [vmem:[#allocation7 + $0xd0] sm:$0xff]
    %v4012 = vld [vmem:[#allocation7 + $0xd8] sm:$0xff]
    %v4013 = vld [vmem:[#allocation7 + $0xe0] sm:$0xff]
    %v4014 = vld [vmem:[#allocation7 + $0xe8] sm:$0xff]
    %v4015 = vld [vmem:[#allocation7 + $0xf0] sm:$0xff]
    %v4016 = vld [vmem:[#allocation7 + $0xf8] sm:$0xff]
    %v4017 = vld [vmem:[#allocation7 + $0x100] sm:$0xff]
    %v4018 = vld [vmem:[#allocation7 + $0x108] sm:$0xff]
    %v4019 = vld [vmem:[#allocation7 + $0x110] sm:$0xff]
    %v4020 = vld [vmem:[#allocation7 + $0x118] sm:$0xff]
    %v4021 = vld [vmem:[#allocation7 + $0x120] sm:$0xff]
    %v4022 = vld [vmem:[#allocation7 + $0x128] sm:$0xff]
    %v4023 = vld [vmem:[#allocation7 + $0x130] sm:$0xff]
    %v4024 = vld [vmem:[#allocation7 + $0x138] sm:$0xff]
    %v4025 = vld [vmem:[#allocation7 + $0x140] sm:$0xff]
    %v4026 = vld [vmem:[#allocation7 + $0x148] sm:$0xff]
    %v4027 = vld [vmem:[#allocation7 + $0x150] sm:$0xff]
    %v4028 = vld [vmem:[#allocation7 + $0x158] sm:$0xff]
    %v4029 = vld [vmem:[#allocation7 + $0x160] sm:$0xff]
    %v4030 = vld [vmem:[#allocation7 + $0x168] sm:$0xff]
    %v4031 = vld [vmem:[#allocation7 + $0x170] sm:$0xff]
    %v4032 = vld [vmem:[#allocation7 + $0x178] sm:$0xff]
    %v4081 = vunpack.c.l.b16 %v3985
    %v4082 = vunpack.c.h.b16 %v3985
    %v4083 = vunpack.c.l.b16 %v3986
    %v4084 = vunpack.c.h.b16 %v3986
    %v4085 = vunpack.c.l.b16 %v3987
    %v4086 = vunpack.c.h.b16 %v3987
    %v4087 = vunpack.c.l.b16 %v3988
    %v4088 = vunpack.c.h.b16 %v3988
    %v4089 = vunpack.c.l.b16 %v3989
    %v4090 = vunpack.c.h.b16 %v3989
    %v4091 = vunpack.c.l.b16 %v3990
    %v4092 = vunpack.c.h.b16 %v3990
    %v4093 = vunpack.c.l.b16 %v3991
    %v4094 = vunpack.c.h.b16 %v3991
    %v4095 = vunpack.c.l.b16 %v3992
    %v4096 = vunpack.c.h.b16 %v3992
    %v4097 = vunpack.c.l.b16 %v3993
    %v4098 = vunpack.c.h.b16 %v3993
    %v4099 = vunpack.c.l.b16 %v3994
    %v4100 = vunpack.c.h.b16 %v3994
    %v4101 = vunpack.c.l.b16 %v3995
    %v4102 = vunpack.c.h.b16 %v3995
    %v4103 = vunpack.c.l.b16 %v3996
    %v4104 = vunpack.c.h.b16 %v3996
    %v4105 = vunpack.c.l.b16 %v3997
    %v4106 = vunpack.c.h.b16 %v3997
    %v4107 = vunpack.c.l.b16 %v3998
    %v4108 = vunpack.c.h.b16 %v3998
    %v4109 = vunpack.c.l.b16 %v3999
    %v4110 = vunpack.c.h.b16 %v3999
    %v4111 = vunpack.c.l.b16 %v4000
    %v4112 = vunpack.c.h.b16 %v4000
    %v4113 = vunpack.c.l.b16 %v4001
    %v4114 = vunpack.c.h.b16 %v4001
    %v4115 = vunpack.c.l.b16 %v4002
    %v4116 = vunpack.c.h.b16 %v4002
    %v4117 = vunpack.c.l.b16 %v4003
    %v4118 = vunpack.c.h.b16 %v4003
    %v4119 = vunpack.c.l.b16 %v4004
    %v4120 = vunpack.c.h.b16 %v4004
    %v4121 = vunpack.c.l.b16 %v4005
    %v4122 = vunpack.c.h.b16 %v4005
    %v4123 = vunpack.c.l.b16 %v4006
    %v4124 = vunpack.c.h.b16 %v4006
    %v4125 = vunpack.c.l.b16 %v4007
    %v4126 = vunpack.c.h.b16 %v4007
    %v4127 = vunpack.c.l.b16 %v4008
    %v4128 = vunpack.c.h.b16 %v4008
    %v4129 = vunpack.c.l.b16 %v4009
    %v4130 = vunpack.c.h.b16 %v4009
    %v4131 = vunpack.c.l.b16 %v4010
    %v4132 = vunpack.c.h.b16 %v4010
    %v4133 = vunpack.c.l.b16 %v4011
    %v4134 = vunpack.c.h.b16 %v4011
    %v4135 = vunpack.c.l.b16 %v4012
    %v4136 = vunpack.c.h.b16 %v4012
    %v4137 = vunpack.c.l.b16 %v4013
    %v4138 = vunpack.c.h.b16 %v4013
    %v4139 = vunpack.c.l.b16 %v4014
    %v4140 = vunpack.c.h.b16 %v4014
    %v4141 = vunpack.c.l.b16 %v4015
    %v4142 = vunpack.c.h.b16 %v4015
    %v4143 = vunpack.c.l.b16 %v4016
    %v4144 = vunpack.c.h.b16 %v4016
    %v4145 = vunpack.c.l.b16 %v4017
    %v4146 = vunpack.c.h.b16 %v4017
    %v4147 = vunpack.c.l.b16 %v4018
    %v4148 = vunpack.c.h.b16 %v4018
    %v4149 = vunpack.c.l.b16 %v4019
    %v4150 = vunpack.c.h.b16 %v4019
    %v4151 = vunpack.c.l.b16 %v4020
    %v4152 = vunpack.c.h.b16 %v4020
    %v4153 = vunpack.c.l.b16 %v4021
    %v4154 = vunpack.c.h.b16 %v4021
    %v4155 = vunpack.c.l.b16 %v4022
    %v4156 = vunpack.c.h.b16 %v4022
    %v4157 = vunpack.c.l.b16 %v4023
    %v4158 = vunpack.c.h.b16 %v4023
    %v4159 = vunpack.c.l.b16 %v4024
    %v4160 = vunpack.c.h.b16 %v4024
    %v4161 = vunpack.c.l.b16 %v4025
    %v4162 = vunpack.c.h.b16 %v4025
    %v4163 = vunpack.c.l.b16 %v4026
    %v4164 = vunpack.c.h.b16 %v4026
    %v4165 = vunpack.c.l.b16 %v4027
    %v4166 = vunpack.c.h.b16 %v4027
    %v4167 = vunpack.c.l.b16 %v4028
    %v4168 = vunpack.c.h.b16 %v4028
    %v4169 = vunpack.c.l.b16 %v4029
    %v4170 = vunpack.c.h.b16 %v4029
    %v4171 = vunpack.c.l.b16 %v4030
    %v4172 = vunpack.c.h.b16 %v4030
    %v4173 = vunpack.c.l.b16 %v4031
    %v4174 = vunpack.c.h.b16 %v4031
    %v4175 = vunpack.c.l.b16 %v4032
    %v4176 = vunpack.c.h.b16 %v4032
    %v4177 = vpack.c.b16 %v4087, %v4081
    %v4178 = vpack.c.b16 %v4088, %v4082
    %v4179 = vpack.c.b16 %v4089, %v4083
    %v4180 = vpack.c.b16 %v4090, %v4084
    %v4181 = vpack.c.b16 %v4091, %v4085
    %v4182 = vpack.c.b16 %v4092, %v4086
    %v4183 = vpack.c.b16 %v4099, %v4093
    %v4184 = vpack.c.b16 %v4100, %v4094
    %v4185 = vpack.c.b16 %v4101, %v4095
    %v4186 = vpack.c.b16 %v4102, %v4096
    %v4187 = vpack.c.b16 %v4103, %v4097
    %v4188 = vpack.c.b16 %v4104, %v4098
    %v4189 = vpack.c.b16 %v4111, %v4105
    %v4190 = vpack.c.b16 %v4112, %v4106
    %v4191 = vpack.c.b16 %v4113, %v4107
    %v4192 = vpack.c.b16 %v4114, %v4108
    %v4193 = vpack.c.b16 %v4115, %v4109
    %v4194 = vpack.c.b16 %v4116, %v4110
    %v4195 = vpack.c.b16 %v4123, %v4117
    %v4196 = vpack.c.b16 %v4124, %v4118
    %v4197 = vpack.c.b16 %v4125, %v4119
    %v4198 = vpack.c.b16 %v4126, %v4120
    %v4199 = vpack.c.b16 %v4127, %v4121
    %v4200 = vpack.c.b16 %v4128, %v4122
    %v4201 = vpack.c.b16 %v4135, %v4129
    %v4202 = vpack.c.b16 %v4136, %v4130
    %v4203 = vpack.c.b16 %v4137, %v4131
    %v4204 = vpack.c.b16 %v4138, %v4132
    %v4205 = vpack.c.b16 %v4139, %v4133
    %v4206 = vpack.c.b16 %v4140, %v4134
    %v4207 = vpack.c.b16 %v4147, %v4141
    %v4208 = vpack.c.b16 %v4148, %v4142
    %v4209 = vpack.c.b16 %v4149, %v4143
    %v4210 = vpack.c.b16 %v4150, %v4144
    %v4211 = vpack.c.b16 %v4151, %v4145
    %v4212 = vpack.c.b16 %v4152, %v4146
    %v4213 = vpack.c.b16 %v4159, %v4153
    %v4214 = vpack.c.b16 %v4160, %v4154
    %v4215 = vpack.c.b16 %v4161, %v4155
    %v4216 = vpack.c.b16 %v4162, %v4156
    %v4217 = vpack.c.b16 %v4163, %v4157
    %v4218 = vpack.c.b16 %v4164, %v4158
    %v4219 = vpack.c.b16 %v4171, %v4165
    %v4220 = vpack.c.b16 %v4172, %v4166
    %v4221 = vpack.c.b16 %v4173, %v4167
    %v4222 = vpack.c.b16 %v4174, %v4168
    %v4223 = vpack.c.b16 %v4175, %v4169
    %v4224 = vpack.c.b16 %v4176, %v4170
    %4273 = vmatprep.subr.bf16.mxu0 %v4220
    %4274 = vmatpush1.bf16.msra.mxu0 %v4219
    %4275 = vmatprep.subr.bf16.mxu0 %v4214
    %4276 = vmatpush1.bf16.msra.mxu0 %v4213
    %4277 = vmatprep.subr.bf16.mxu0 %v4208
    %4278 = vmatpush1.bf16.msra.mxu0 %v4207
    %4279 = vmatprep.subr.bf16.mxu0 %v4202
    %4280 = vmatpush1.bf16.msra.mxu0 %v4201
    %4281 = vmatprep.subr.bf16.mxu0 %v4196
    %4282 = vmatpush1.bf16.msra.mxu0 %v4195
    %4283 = vmatprep.subr.bf16.mxu0 %v4190
    %4284 = vmatpush1.bf16.msra.mxu0 %v4189
    %4285 = vmatprep.subr.bf16.mxu0 %v4184
    %4286 = vmatpush1.bf16.msra.mxu0 %v4183
    %4287 = vmatprep.subr.bf16.mxu0 %v4178
    %4288 = vmatpush1.bf16.msra.mxu0 %v4177
    %4289 = vmatprep.subr.bf16.mxu0 0
    %4290 = vmatpush2.bf16.msra.mxu0 0
    %4291 = vmatprep.subr.bf16.mxu0 0
    %4292 = vmatpush2.bf16.msra.mxu0 0
    %4293 = vmatprep.subr.bf16.mxu0 0
    %4294 = vmatpush2.bf16.msra.mxu0 0
    %4295 = vmatprep.subr.bf16.mxu0 0
    %4296 = vmatpush2.bf16.msra.mxu0 0
    %4297 = vmatprep.subr.bf16.mxu0 0
    %4298 = vmatpush2.bf16.msra.mxu0 0
    %4299 = vmatprep.subr.bf16.mxu0 0
    %4300 = vmatpush2.bf16.msra.mxu0 0
    %4301 = vmatprep.subr.bf16.mxu0 0
    %4302 = vmatpush2.bf16.msra.mxu0 0
    %4303 = vmatprep.subr.bf16.mxu0 0
    %4304 = vmatpush2.bf16.msra.mxu0 0
    %4305 = vmatprep.mubr.bf16.mxu0 0
    %4306 = vmatmul.mubr.bf16.gmra.mxu0 %v3984
    %v4307 = vpop.f32.mrf.mxu0
    %v4308 = vadd.f32 0.0, %v4307
    %v4309 = vpop.f32.mrf.mxu0
    %v4310 = vadd.f32 0.0, %v4309
    %v4311 = vpop.f32.mrf.mxu0
    %v4312 = vpop.f32.mrf.mxu0
    %4313 = vdwg.mxu0
    %4314 = vmatprep.subr.bf16.mxu0 %v4222
    %4315 = vmatpush1.bf16.msra.mxu0 %v4221
    %4316 = vmatprep.subr.bf16.mxu0 %v4216
    %4317 = vmatpush1.bf16.msra.mxu0 %v4215
    %4318 = vmatprep.subr.bf16.mxu0 %v4210
    %4319 = vmatpush1.bf16.msra.mxu0 %v4209
    %4320 = vmatprep.subr.bf16.mxu0 %v4204
    %4321 = vmatpush1.bf16.msra.mxu0 %v4203
    %4322 = vmatprep.subr.bf16.mxu0 %v4198
    %4323 = vmatpush1.bf16.msra.mxu0 %v4197
    %4324 = vmatprep.subr.bf16.mxu0 %v4192
    %4325 = vmatpush1.bf16.msra.mxu0 %v4191
    %4326 = vmatprep.subr.bf16.mxu0 %v4186
    %4327 = vmatpush1.bf16.msra.mxu0 %v4185
    %4328 = vmatprep.subr.bf16.mxu0 %v4180
    %4329 = vmatpush1.bf16.msra.mxu0 %v4179
    %4330 = vmatprep.subr.bf16.mxu0 0
    %4331 = vmatpush2.bf16.msra.mxu0 0
    %4332 = vmatprep.subr.bf16.mxu0 0
    %4333 = vmatpush2.bf16.msra.mxu0 0
    %4334 = vmatprep.subr.bf16.mxu0 0
    %4335 = vmatpush2.bf16.msra.mxu0 0
    %4336 = vmatprep.subr.bf16.mxu0 0
    %4337 = vmatpush2.bf16.msra.mxu0 0
    %4338 = vmatprep.subr.bf16.mxu0 0
    %4339 = vmatpush2.bf16.msra.mxu0 0
    %4340 = vmatprep.subr.bf16.mxu0 0
    %4341 = vmatpush2.bf16.msra.mxu0 0
    %4342 = vmatprep.subr.bf16.mxu0 0
    %4343 = vmatpush2.bf16.msra.mxu0 0
    %4344 = vmatprep.subr.bf16.mxu0 0
    %4345 = vmatpush2.bf16.msra.mxu0 0
    %4346 = vmatprep.mubr.bf16.mxu0 0
    %4347 = vmatmul.mubr.bf16.gmra.mxu0 %v3984
    %v4348 = vpop.f32.mrf.mxu0
    %v4349 = vadd.f32 0.0, %v4348
    %v4350 = vpop.f32.mrf.mxu0
    %v4351 = vpop.f32.mrf.mxu0
    %v4352 = vpop.f32.mrf.mxu0
    %v4353 = vadd.f32 0.0, %v4352
    %4354 = vdwg.mxu0
    %4355 = vmatprep.subr.bf16.mxu0 %v4224
    %4356 = vmatpush1.bf16.msra.mxu0 %v4223
    %4357 = vmatprep.subr.bf16.mxu0 %v4218
    %4358 = vmatpush1.bf16.msra.mxu0 %v4217
    %4359 = vmatprep.subr.bf16.mxu0 %v4212
    %4360 = vmatpush1.bf16.msra.mxu0 %v4211
    %4361 = vmatprep.subr.bf16.mxu0 %v4206
    %4362 = vmatpush1.bf16.msra.mxu0 %v4205
    %4363 = vmatprep.subr.bf16.mxu0 %v4200
    %4364 = vmatpush1.bf16.msra.mxu0 %v4199
    %4365 = vmatprep.subr.bf16.mxu0 %v4194
    %4366 = vmatpush1.bf16.msra.mxu0 %v4193
    %4367 = vmatprep.subr.bf16.mxu0 %v4188
    %4368 = vmatpush1.bf16.msra.mxu0 %v4187
    %4369 = vmatprep.subr.bf16.mxu0 %v4182
    %4370 = vmatpush1.bf16.msra.mxu0 %v4181
    %4371 = vmatprep.subr.bf16.mxu0 0
    %4372 = vmatpush2.bf16.msra.mxu0 0
    %4373 = vmatprep.subr.bf16.mxu0 0
    %4374 = vmatpush2.bf16.msra.mxu0 0
    %4375 = vmatprep.subr.bf16.mxu0 0
    %4376 = vmatpush2.bf16.msra.mxu0 0
    %4377 = vmatprep.subr.bf16.mxu0 0
    %4378 = vmatpush2.bf16.msra.mxu0 0
    %4379 = vmatprep.subr.bf16.mxu0 0
    %4380 = vmatpush2.bf16.msra.mxu0 0
    %4381 = vmatprep.subr.bf16.mxu0 0
    %4382 = vmatpush2.bf16.msra.mxu0 0
    %4383 = vmatprep.subr.bf16.mxu0 0
    %4384 = vmatpush2.bf16.msra.mxu0 0
    %4385 = vmatprep.subr.bf16.mxu0 0
    %4386 = vmatpush2.bf16.msra.mxu0 0
    %4387 = vmatprep.mubr.bf16.mxu0 0
    %4388 = vmatmul.mubr.bf16.gmra.mxu0 %v3984
    %v4389 = vpop.f32.mrf.mxu0
    %v4390 = vpop.f32.mrf.mxu0
    %v4391 = vpop.f32.mrf.mxu0
    %v4392 = vadd.f32 0.0, %v4391
    %v4393 = vpop.f32.mrf.mxu0
    %v4394 = vadd.f32 0.0, %v4393
    %4395 = vdwg.mxu0
    %v4396 = vld [vmem:[#allocation2 + $0x150] sm:$0xff]
    %v4397 = vld [vmem:[#allocation2 + $0x158] sm:$0xff]
    %v4398 = vld [vmem:[#allocation2 + $0x160] sm:$0xff]
    %v4399 = vld [vmem:[#allocation2 + $0x18] sm:$0xff]
    %v4400 = vld [vmem:[#allocation2 + $0x20] sm:$0xff]
    %v4401 = vld [vmem:[#allocation2 + $0x28] sm:$0xff]
    %v4402 = vadd.f32 %v4396, %v4308
    %v4403 = vxor.u32 %v4402, 2147483648
    %v4404 = vmul.f32 %v4403, 1.442695
    %v4405 = vpow.pop %v4404
    %v4406 = vadd.f32 %v4405, 1.0
    %v4407 = vrcp.pop %v4406
    %v4408 = vmul.f32 1.0, %v4407
    %v4409 = vadd.f32 %v4397, %v4310
    %v4410 = vxor.u32 %v4409, 2147483648
    %v4411 = vmul.f32 %v4410, 1.442695
    %v4412 = vpow.pop %v4411
    %v4413 = vadd.f32 %v4412, 1.0
    %v4414 = vrcp.pop %v4413
    %v4415 = vmul.f32 1.0, %v4414
    %v4416 = vadd.f32 %v4349, %v694
    %v4417 = vmul.f32 %v4408, %v4416
    %v4418 = vadd.f32 %v4398, %v4417
    %v4419 = vtanh.pop %v4418
    %v4420 = vsub.f32 1.0, %v4415
    %v4421 = vmul.f32 %v4420, %v4419
    %v4422 = vmul.f32 %v4415, %v3982
    %v4423 = vadd.f32 %v4421, %v4422
    %v4424 = vadd.f32 %v4399, %v4353
    %v4425 = vxor.u32 %v4424, 2147483648
    %v4426 = vmul.f32 %v4425, 1.442695
    %v4427 = vpow.pop %v4426
    %v4428 = vadd.f32 %v4427, 1.0
    %v4429 = vrcp.pop %v4428
    %v4430 = vmul.f32 1.0, %v4429
    %v4431 = vadd.f32 %v4400, %v4392
    %v4432 = vxor.u32 %v4431, 2147483648
    %v4433 = vmul.f32 %v4432, 1.442695
    %v4434 = vpow.pop %v4433
    %v4435 = vadd.f32 %v4434, 1.0
    %v4436 = vrcp.pop %v4435
    %v4437 = vmul.f32 1.0, %v4436
    %v4438 = vadd.f32 %v4394, %v701
    %v4439 = vmul.f32 %v4430, %v4438
    %v4440 = vadd.f32 %v4401, %v4439
    %v4441 = vtanh.pop %v4440
    %v4442 = vsub.f32 1.0, %v4437
    %v4443 = vmul.f32 %v4442, %v4441
    %v4444 = vmul.f32 %v4437, %v3983
    %v4445 = vadd.f32 %v4443, %v4444
    %v4446 = vsel %vm1165, %v4423, 0.0
    %4447 = vst [vmem:[#allocation3 + $0x70] sm:$0xff] %v4446
    %v4448 = vsel %vm1164, %v4445, 0.0
    %4449 = vst [vmem:[#allocation3 + $0x8] sm:$0xff] %v4448
    %v4450 = vld [vmem:[#allocation3] sm:$0xff]
    %v4451 = vld [vmem:[#allocation3 + $0x8] sm:$0xff]
    %v4452 = vld [vmem:[#allocation3 + $0x10] sm:$0xff]
    %v4453 = vld [vmem:[#allocation3 + $0x18] sm:$0xff]
    %v4454 = vld [vmem:[#allocation3 + $0x20] sm:$0xff]
    %v4455 = vld [vmem:[#allocation3 + $0x28] sm:$0xff]
    %v4456 = vld [vmem:[#allocation3 + $0x30] sm:$0xff]
    %v4457 = vld [vmem:[#allocation3 + $0x38] sm:$0xff]
    %v4458 = vld [vmem:[#allocation3 + $0x40] sm:$0xff]
    %v4459 = vld [vmem:[#allocation3 + $0x48] sm:$0xff]
    %v4460 = vld [vmem:[#allocation3 + $0x50] sm:$0xff]
    %v4461 = vld [vmem:[#allocation3 + $0x58] sm:$0xff]
    %v4462 = vld [vmem:[#allocation3 + $0x60] sm:$0xff]
    %v4463 = vld [vmem:[#allocation3 + $0x68] sm:$0xff]
    %v4464 = vld [vmem:[#allocation3 + $0x70] sm:$0xff]
    %v4465 = vld [vmem:[#allocation3 + $0x78] sm:$0xff]
    %v4466 = vpack.c.bf16 %v4452, %v4450
    %v4467 = vpack.c.bf16 %v4453, %v4451
    %v4468 = vpack.c.bf16 %v4456, %v4454
    %v4469 = vpack.c.bf16 %v4457, %v4455
    %v4470 = vpack.c.bf16 %v4460, %v4458
    %v4471 = vpack.c.bf16 %v4461, %v4459
    %v4472 = vpack.c.bf16 %v4464, %v4462
    %v4473 = vpack.c.bf16 %v4465, %v4463
    %v4474 = vld [vmem:[%s6] sm:$0xf]
    %v4475 = vld [vmem:[%s6 + $0x4] sm:$0xf]
    %v4476 = vld [vmem:[%s6 + $0x8] sm:$0xf]
    %v4477 = vld [vmem:[%s6 + $0xc] sm:$0xf]
    %v4478 = vld [vmem:[%s6 + $0x10] sm:$0xf]
    %v4479 = vld [vmem:[%s6 + $0x14] sm:$0xf]
    %v4480 = vld [vmem:[%s6 + $0x18] sm:$0xf]
    %v4481 = vld [vmem:[%s6 + $0x1c] sm:$0xf]
    %v4482 = vld [vmem:[%s6 + $0x20] sm:$0xf]
    %v4483 = vld [vmem:[%s6 + $0x24] sm:$0xf]
    %v4484 = vld [vmem:[%s6 + $0x28] sm:$0xf]
    %v4485 = vld [vmem:[%s6 + $0x2c] sm:$0xf]
    %v4486 = vld [vmem:[%s6 + $0x30] sm:$0xf]
    %v4487 = vld [vmem:[%s6 + $0x34] sm:$0xf]
    %v4488 = vld [vmem:[%s6 + $0x38] sm:$0xf]
    %v4489 = vld [vmem:[%s6 + $0x3c] sm:$0xf]
    %v4490 = vld [vmem:[%s6 + $0x40] sm:$0xf]
    %v4491 = vld [vmem:[%s6 + $0x44] sm:$0xf]
    %v4492 = vld [vmem:[%s6 + $0x48] sm:$0xf]
    %v4493 = vld [vmem:[%s6 + $0x4c] sm:$0xf]
    %v4494 = vld [vmem:[%s6 + $0x50] sm:$0xf]
    %v4495 = vld [vmem:[%s6 + $0x54] sm:$0xf]
    %v4496 = vld [vmem:[%s6 + $0x58] sm:$0xf]
    %v4497 = vld [vmem:[%s6 + $0x5c] sm:$0xf]
    %v4498 = vld [vmem:[%s6 + $0x60] sm:$0xf]
    %v4499 = vld [vmem:[%s6 + $0x64] sm:$0xf]
    %v4500 = vld [vmem:[%s6 + $0x68] sm:$0xf]
    %v4501 = vld [vmem:[%s6 + $0x6c] sm:$0xf]
    %v4502 = vld [vmem:[%s6 + $0x70] sm:$0xf]
    %v4503 = vld [vmem:[%s6 + $0x74] sm:$0xf]
    %v4504 = vld [vmem:[%s6 + $0x78] sm:$0xf]
    %v4505 = vld [vmem:[%s6 + $0x7c] sm:$0xf]
    %v4506 = vld [vmem:[%s7] sm:$0x1]
    %v4508 = vlaneseq
    %v4509 = vshrl.u32 %v4508, 7
    %v4510 = vsub.s32 0, %v4509
    %v4511 = vrot.slane %v4506, %v4510
    %v4545 = vunpack.c.l.b16 %v4474
    %v4546 = vunpack.c.l.b16 %v4475
    %v4547 = vunpack.c.l.b16 %v4476
    %v4548 = vunpack.c.l.b16 %v4477
    %v4549 = vunpack.c.l.b16 %v4478
    %v4550 = vunpack.c.l.b16 %v4479
    %v4551 = vunpack.c.l.b16 %v4480
    %v4552 = vunpack.c.l.b16 %v4481
    %v4553 = vunpack.c.l.b16 %v4482
    %v4554 = vunpack.c.l.b16 %v4483
    %v4555 = vunpack.c.l.b16 %v4484
    %v4556 = vunpack.c.l.b16 %v4485
    %v4557 = vunpack.c.l.b16 %v4486
    %v4558 = vunpack.c.l.b16 %v4487
    %v4559 = vunpack.c.l.b16 %v4488
    %v4560 = vunpack.c.l.b16 %v4489
    %v4561 = vunpack.c.l.b16 %v4490
    %v4562 = vunpack.c.l.b16 %v4491
    %v4563 = vunpack.c.l.b16 %v4492
    %v4564 = vunpack.c.l.b16 %v4493
    %v4565 = vunpack.c.l.b16 %v4494
    %v4566 = vunpack.c.l.b16 %v4495
    %v4567 = vunpack.c.l.b16 %v4496
    %v4568 = vunpack.c.l.b16 %v4497
    %v4569 = vunpack.c.l.b16 %v4498
    %v4570 = vunpack.c.l.b16 %v4499
    %v4571 = vunpack.c.l.b16 %v4500
    %v4572 = vunpack.c.l.b16 %v4501
    %v4573 = vunpack.c.l.b16 %v4502
    %v4574 = vunpack.c.l.b16 %v4503
    %v4575 = vunpack.c.l.b16 %v4504
    %v4576 = vunpack.c.l.b16 %v4505
    %v4577 = vpack.c.b16 %v4546, %v4545
    %v4578 = vpack.c.b16 %v4548, %v4547
    %v4579 = vpack.c.b16 %v4550, %v4549
    %v4580 = vpack.c.b16 %v4552, %v4551
    %v4581 = vpack.c.b16 %v4554, %v4553
    %v4582 = vpack.c.b16 %v4556, %v4555
    %v4583 = vpack.c.b16 %v4558, %v4557
    %v4584 = vpack.c.b16 %v4560, %v4559
    %v4585 = vpack.c.b16 %v4562, %v4561
    %v4586 = vpack.c.b16 %v4564, %v4563
    %v4587 = vpack.c.b16 %v4566, %v4565
    %v4588 = vpack.c.b16 %v4568, %v4567
    %v4589 = vpack.c.b16 %v4570, %v4569
    %v4590 = vpack.c.b16 %v4572, %v4571
    %v4591 = vpack.c.b16 %v4574, %v4573
    %v4592 = vpack.c.b16 %v4576, %v4575
    %4609 = vmatprep.subr.bf16.mxu0 0
    %4610 = vmatpush1.bf16.msra.mxu0 %v4584
    %4611 = vmatprep.subr.bf16.mxu0 0
    %4612 = vmatpush1.bf16.msra.mxu0 %v4583
    %4613 = vmatprep.subr.bf16.mxu0 0
    %4614 = vmatpush1.bf16.msra.mxu0 %v4582
    %4615 = vmatprep.subr.bf16.mxu0 0
    %4616 = vmatpush1.bf16.msra.mxu0 %v4581
    %4617 = vmatprep.subr.bf16.mxu0 0
    %4618 = vmatpush1.bf16.msra.mxu0 %v4580
    %4619 = vmatprep.subr.bf16.mxu0 0
    %4620 = vmatpush1.bf16.msra.mxu0 %v4579
    %4621 = vmatprep.subr.bf16.mxu0 0
    %4622 = vmatpush1.bf16.msra.mxu0 %v4578
    %4623 = vmatprep.subr.bf16.mxu0 0
    %4624 = vmatpush1.bf16.msra.mxu0 %v4577
    %4625 = vmatprep.subr.bf16.mxu0 0
    %4626 = vmatpush2.bf16.msra.mxu0 %v4592
    %4627 = vmatprep.subr.bf16.mxu0 0
    %4628 = vmatpush2.bf16.msra.mxu0 %v4591
    %4629 = vmatprep.subr.bf16.mxu0 0
    %4630 = vmatpush2.bf16.msra.mxu0 %v4590
    %4631 = vmatprep.subr.bf16.mxu0 0
    %4632 = vmatpush2.bf16.msra.mxu0 %v4589
    %4633 = vmatprep.subr.bf16.mxu0 0
    %4634 = vmatpush2.bf16.msra.mxu0 %v4588
    %4635 = vmatprep.subr.bf16.mxu0 0
    %4636 = vmatpush2.bf16.msra.mxu0 %v4587
    %4637 = vmatprep.subr.bf16.mxu0 0
    %4638 = vmatpush2.bf16.msra.mxu0 %v4586
    %4639 = vmatprep.subr.bf16.mxu0 0
    %4640 = vmatpush2.bf16.msra.mxu0 %v4585
    %4641 = vmatprep.mubr.bf16.mxu0 %v4467
    %4642 = vmatmul.mubr.bf16.gmra.mxu0 %v4466
    %v4643 = vpop.f32.mrf.mxu0
    %v4644 = vadd.f32 %v4511, %v4643
    %v4645 = vpop.f32.mrf.mxu0
    %v4646 = vpop.f32.mrf.mxu0
    %v4647 = vadd.f32 %v4511, %v4646
    %v4648 = vpop.f32.mrf.mxu0
    %4649 = vmatprep.mubr.bf16.mxu0 %v4469
    %4650 = vmatmul.mubr.bf16.gmra.mxu0 %v4468
    %v4651 = vpop.f32.mrf.mxu0
    %v4652 = vadd.f32 %v4511, %v4651
    %v4653 = vpop.f32.mrf.mxu0
    %v4654 = vpop.f32.mrf.mxu0
    %v4655 = vadd.f32 %v4511, %v4654
    %v4656 = vpop.f32.mrf.mxu0
    %4657 = vmatprep.mubr.bf16.mxu0 %v4471
    %4658 = vmatmul.mubr.bf16.gmra.mxu0 %v4470
    %v4659 = vpop.f32.mrf.mxu0
    %v4660 = vadd.f32 %v4511, %v4659
    %v4661 = vpop.f32.mrf.mxu0
    %v4662 = vpop.f32.mrf.mxu0
    %v4663 = vadd.f32 %v4511, %v4662
    %v4664 = vpop.f32.mrf.mxu0
    %4665 = vmatprep.mubr.bf16.mxu0 %v4473
    %4666 = vmatmul.mubr.bf16.gmra.mxu0 %v4472
    %v4667 = vpop.f32.mrf.mxu0
    %v4668 = vadd.f32 %v4511, %v4667
    %v4669 = vpop.f32.mrf.mxu0
    %v4670 = vpop.f32.mrf.mxu0
    %v4671 = vadd.f32 %v4511, %v4670
    %v4672 = vpop.f32.mrf.mxu0
    %4673 = vdwg.mxu0
    %v4674 = vmax.f32 %v4644, 0.0
    %v4675 = vmax.f32 %v4647, 0.0
    %v4676 = vmax.f32 %v4652, 0.0
    %v4677 = vmax.f32 %v4655, 0.0
    %v4678 = vmax.f32 %v4660, 0.0
    %v4679 = vmax.f32 %v4663, 0.0
    %v4680 = vmax.f32 %v4668, 0.0
    %v4681 = vmax.f32 %v4671, 0.0
    %v4682 = vld [vmem:[%s8] sm:$0x1]
    %v4684 = vlaneseq
    %v4685 = vshrl.u32 %v4684, 7
    %v4686 = vsub.s32 0, %v4685
    %v4687 = vrot.slane %v4682, %v4686
    %v4689 = vmul.f32 %v4674, %v4687
    %v4690 = vmul.f32 %v4675, %v4687
    %v4691 = vmul.f32 %v4676, %v4687
    %v4692 = vmul.f32 %v4677, %v4687
    %v4693 = vmul.f32 %v4678, %v4687
    %v4694 = vmul.f32 %v4679, %v4687
    %v4695 = vmul.f32 %v4680, %v4687
    %v4696 = vmul.f32 %v4681, %v4687
    %4697 = vadd.xlane.f32.xlu0 %v4689
    %v4698 = vpop.xlane.xlu0 %4697
    %4699 = vadd.xlane.f32.xlu0 %v4690
    %v4700 = vpop.xlane.xlu0 %4699
    %4701 = vadd.xlane.f32.xlu0 %v4691
    %v4702 = vpop.xlane.xlu0 %4701
    %4703 = vadd.xlane.f32.xlu0 %v4692
    %v4704 = vpop.xlane.xlu0 %4703
    %4705 = vadd.xlane.f32.xlu0 %v4693
    %v4706 = vpop.xlane.xlu0 %4705
    %4707 = vadd.xlane.f32.xlu0 %v4694
    %v4708 = vpop.xlane.xlu0 %4707
    %4709 = vadd.xlane.f32.xlu0 %v4695
    %v4710 = vpop.xlane.xlu0 %4709
    %4711 = vadd.xlane.f32.xlu0 %v4696
    %v4712 = vpop.xlane.xlu0 %4711
    %v4713 = vld [vmem:[#allocation4] sm:$0x1]
    %v4715 = vlaneseq
    %v4716 = vshrl.u32 %v4715, 7
    %v4717 = vsub.s32 0, %v4716
    %v4718 = vrot.slane %v4713, %v4717
    %v4720 = vadd.f32 %v4698, %v4718
    %v4721 = vadd.f32 %v4700, %v4718
    %v4722 = vadd.f32 %v4702, %v4718
    %v4723 = vadd.f32 %v4704, %v4718
    %v4724 = vadd.f32 %v4706, %v4718
    %v4725 = vadd.f32 %v4708, %v4718
    %v4726 = vadd.f32 %v4710, %v4718
    %v4727 = vadd.f32 %v4712, %v4718
    %vm4728 = vcmask 7168
    %4729 = vst.msk [vmem:[%s10] sm:$0xff] %vm4728, %v4720
    %4730 = vst.msk [vmem:[%s10 + $0x8] sm:$0xff] %vm4728, %v4721
    %4731 = vst.msk [vmem:[%s10 + $0x10] sm:$0xff] %vm4728, %v4722
    %4732 = vst.msk [vmem:[%s10 + $0x18] sm:$0xff] %vm4728, %v4723
    %4733 = vst.msk [vmem:[%s10 + $0x20] sm:$0xff] %vm4728, %v4724
    %4734 = vst.msk [vmem:[%s10 + $0x28] sm:$0xff] %vm4728, %v4725
    %4735 = vst.msk [vmem:[%s10 + $0x30] sm:$0xff] %vm4728, %v4726
    %4736 = vst.msk [vmem:[%s10 + $0x38] sm:$0xff] %vm4728, %v4727
    // Predicated region
    $region50: #{rnn_sentence_extractor_forward.1} parent=1 // pred_check
      _
    $region51: #{rnn_sentence_extractor_forward.1} parent=1 // pred_check_branch
      %4738 = sbr.rel (0) target = $region53
    $region52: #{rnn_sentence_extractor_forward.1} parent=1 // pred_region
      _
    $region53: #{rnn_sentence_extractor_forward.1} parent=1 // pred_fallthru
      _
    // Predicated region
    $region54: #{rnn_sentence_extractor_forward.1} parent=1 // pred_check
      _
    $region55: #{rnn_sentence_extractor_forward.1} parent=1 // pred_check_branch
      %4740 = sbr.rel (0) target = $region57
    $region56: #{rnn_sentence_extractor_forward.1} parent=1 // pred_region
      _
    $region57: #{rnn_sentence_extractor_forward.1} parent=1 // pred_fallthru
      _
    %4741 = vsyncpa [#allocation6], 1
    %4742 = vsyncpa [#allocation8], 1

</llo_original>
